<compile_context>
chip_gen: v7x
topology: tpu7x:2x2x1
jax: 0.10.0
libtpu: 0.0.40
codegen_flags: <defaults>
</compile_context>

<pallas_src>
import jax
import jax.numpy as jnp
from jax.experimental import pallas as pl
from jax.experimental.pallas import tpu as pltpu

_LRELU_SLOPE = 0.2
_BN_EPS = 1e-5
_TILE_M_CAP = 512                    # rows per grid step (multiple of 8); VMEM-safe on v5e/v6e/v7x
_VMEM_LIMIT = 32 * 1024 * 1024       # cap scoped VMEM (v7x has only 64 MiB physical)


# ----------------------------------------------------------------------------
# Small helpers (tiling / padding)
# ----------------------------------------------------------------------------
def _round_up(x, m):
    return ((x + m - 1) // m) * m


def _tiling(m):
    """Pick an M tile (multiple of 8, capped) and the padded M."""
    tile = _round_up(m, 8) if m <= _TILE_M_CAP else _TILE_M_CAP
    return tile, _round_up(m, tile)


def _pad_rows(x, m_pad):
    m = x.shape[0]
    return x if m == m_pad else jnp.pad(x, ((0, m_pad - m), (0, 0)))


# ----------------------------------------------------------------------------
# Pallas kernels
# ----------------------------------------------------------------------------
def _conv_bias_lrelu_kernel(p_ref, w_ref, b_ref, o_ref):
    # One M-tile of (patches @ weights) + bias, LeakyReLU(0.2).
    # bf16 operands, f32 accumulation / epilogue, lane-dense bf16 store.
    y = jnp.dot(p_ref[...], w_ref[...], preferred_element_type=jnp.float32)
    y = y + b_ref[...]
    y = jnp.where(y > 0.0, y, _LRELU_SLOPE * y)
    o_ref[...] = y.astype(o_ref.dtype)


def _conv_stats_kernel(p_ref, w_ref, y_ref, psum_ref, psq_ref):
    # One M-tile of the pre-BatchNorm conv matmul.  The conv bias is skipped on
    # purpose: BN's mean subtraction cancels it exactly.  Per-tile partial
    # sum / sum-of-squares are emitted so the batch statistics can be reduced
    # from tiny arrays outside, keeping the M grid axis "parallel" and avoiding
    # a second HBM pass over y.  (Zero-padded rows contribute 0 to both.)
    y = jnp.dot(p_ref[...], w_ref[...], preferred_element_type=jnp.float32)
    y_ref[...] = y
    n = y.shape[-1]
    s = jnp.sum(y, axis=0)
    sq = jnp.sum(y * y, axis=0)
    psum_ref[...] = jnp.broadcast_to(s[None, None, :], (1, 8, n))
    psq_ref[...] = jnp.broadcast_to(sq[None, None, :], (1, 8, n))


def _bn_lrelu_kernel(y_ref, scale_ref, shift_ref, o_ref):
    # Phase-2 BN: y * scale + shift (scale = rsqrt(var+eps), shift = -mean*scale),
    # then LeakyReLU(0.2).  f32 math, bf16 store (consumed by the next bf16 matmul).
    y = y_ref[...] * scale_ref[...] + shift_ref[...]
    o_ref[...] = jnp.where(y > 0.0, y, _LRELU_SLOPE * y).astype(o_ref.dtype)


# ----------------------------------------------------------------------------
# Pallas wrappers (grid / BlockSpecs)
# ----------------------------------------------------------------------------
def conv_bias_lrelu(patches, w_mat, bias):
    """patches (M,K) bf16, w_mat (K,N) bf16 with N a multiple of 128, bias (N,) f32."""
    m, k = patches.shape
    n = w_mat.shape[1]
    tile, m_pad = _tiling(m)
    grid = m_pad // tile
    patches = _pad_rows(patches, m_pad)
    bias2d = bias.reshape(1, n).astype(jnp.float32)
    return pl.pallas_call(
        _conv_bias_lrelu_kernel,
        out_shape=jax.ShapeDtypeStruct((m_pad, n), jnp.bfloat16),
        grid=(grid,),
        in_specs=[
            pl.BlockSpec((tile, k), lambda i: (i, 0)),
            pl.BlockSpec((k, n), lambda i: (0, 0)),    # weights resident across M steps
            pl.BlockSpec((1, n), lambda i: (0, 0)),
        ],
        out_specs=pl.BlockSpec((tile, n), lambda i: (i, 0)),
        compiler_params=pltpu.CompilerParams(
            dimension_semantics=("parallel",),         # megacore-shard M on v7x
            vmem_limit_bytes=_VMEM_LIMIT,
        ),
        cost_estimate=pl.CostEstimate(
            flops=2 * m_pad * k * n,
            transcendentals=0,
            bytes_accessed=m_pad * k * 2 + k * n * 2 + m_pad * n * 2,
        ),
    )(patches, w_mat, bias2d)


def conv_batch_stats(patches, w_mat):
    """Pre-BN conv matmul: returns y (M_pad,N) f32 plus per-tile partial sum / sumsq."""
    m, k = patches.shape
    n = w_mat.shape[1]
    tile, m_pad = _tiling(m)
    grid = m_pad // tile
    patches = _pad_rows(patches, m_pad)
    return pl.pallas_call(
        _conv_stats_kernel,
        out_shape=(
            jax.ShapeDtypeStruct((m_pad, n), jnp.float32),
            jax.ShapeDtypeStruct((grid, 8, n), jnp.float32),
            jax.ShapeDtypeStruct((grid, 8, n), jnp.float32),
        ),
        grid=(grid,),
        in_specs=[
            pl.BlockSpec((tile, k), lambda i: (i, 0)),
            pl.BlockSpec((k, n), lambda i: (0, 0)),    # weights resident across M steps
        ],
        out_specs=(
            pl.BlockSpec((tile, n), lambda i: (i, 0)),
            pl.BlockSpec((1, 8, n), lambda i: (i, 0, 0)),
            pl.BlockSpec((1, 8, n), lambda i: (i, 0, 0)),
        ),
        compiler_params=pltpu.CompilerParams(
            dimension_semantics=("parallel",),
            vmem_limit_bytes=_VMEM_LIMIT,
        ),
        cost_estimate=pl.CostEstimate(
            flops=2 * m_pad * k * n,
            transcendentals=0,
            bytes_accessed=m_pad * k * 2 + k * n * 2 + m_pad * n * 4,
        ),
    )(patches, w_mat)


def bn_lrelu(y, scale, shift):
    """Elementwise normalize + LeakyReLU over (M_pad, N) f32 -> bf16."""
    m_pad, n = y.shape
    tile, _ = _tiling(m_pad)
    grid = m_pad // tile
    return pl.pallas_call(
        _bn_lrelu_kernel,
        out_shape=jax.ShapeDtypeStruct((m_pad, n), jnp.bfloat16),
        grid=(grid,),
        in_specs=[
            pl.BlockSpec((tile, n), lambda i: (i, 0)),
            pl.BlockSpec((1, n), lambda i: (0, 0)),
            pl.BlockSpec((1, n), lambda i: (0, 0)),
        ],
        out_specs=pl.BlockSpec((tile, n), lambda i: (i, 0)),
        compiler_params=pltpu.CompilerParams(
            dimension_semantics=("parallel",),
            vmem_limit_bytes=_VMEM_LIMIT,
        ),
        cost_estimate=pl.CostEstimate(
            flops=3 * m_pad * n,
            transcendentals=0,
            bytes_accessed=m_pad * n * 4 + m_pad * n * 2 + 2 * n * 4,
        ),
    )(y, scale, shift)


# ----------------------------------------------------------------------------
# Plain-JAX glue: im2col extraction and weight reshaping
# ----------------------------------------------------------------------------
def im2col(x_nhwc, k, stride, pad):
    """x_nhwc: (B, H, W, C) -> patches (B*Ho*Wo, k*k*C), Ho, Wo (column order: kh, kw, c)."""
    # TODO(synk): fuse im2col into the conv kernel (halo'd slab + in-kernel shifted
    # reads) to avoid the ~4x activation duplication in HBM; kept as XLA glue here
    # because in-kernel strided spatial reads on these small lane-sparse planes do
    # not lower robustly.
    x = jnp.pad(x_nhwc, ((0, 0), (pad, pad), (pad, pad), (0, 0)))
    B, H, W, C = x.shape
    ho = (H - k) // stride + 1
    wo = (W - k) // stride + 1
    pieces = []
    for i in range(k):
        for j in range(k):
            pieces.append(x[:, i : i + stride * ho : stride, j : j + stride * wo : stride, :])
    p = jnp.stack(pieces, axis=3)            # (B, Ho, Wo, k*k, C)
    return p.reshape(B * ho * wo, k * k * C), ho, wo


def conv_weight_to_matmul(w_oikk):
    """PyTorch (C_out, C_in, k, k) -> (k*k*C_in, C_out), matching im2col column order."""
    c_out, c_in, k, _ = w_oikk.shape
    return jnp.transpose(w_oikk, (2, 3, 1, 0)).reshape(k * k * c_in, c_out)


# ----------------------------------------------------------------------------
# Parameter construction (deterministic, in-script)
# ----------------------------------------------------------------------------
def init_params(key, img_channels, num_classes):
    ks = jax.random.split(key, 9)
    scale = 0.05
    params = {
        "emb": jax.random.normal(ks[0], (num_classes, 32 * 32), jnp.float32),
        "w1": scale * jax.random.normal(ks[1], (64, img_channels + 1, 4, 4), jnp.float32),
        "b1": scale * jax.random.normal(ks[2], (64,), jnp.float32),
        "w2": scale * jax.random.normal(ks[3], (128, 64, 4, 4), jnp.float32),
        # b2 / b3 exist in the PyTorch module but are cancelled exactly by the
        # following BatchNorm's mean subtraction, so they are never applied.
        "b2": scale * jax.random.normal(ks[4], (128,), jnp.float32),
        "w3": scale * jax.random.normal(ks[5], (256, 128, 4, 4), jnp.float32),
        "b3": scale * jax.random.normal(ks[6], (256,), jnp.float32),
        "w4": scale * jax.random.normal(ks[7], (1, 256, 4, 4), jnp.float32),
        "b4": scale * jax.random.normal(ks[8], (1,), jnp.float32),
    }
    # BatchNorm2d affine params left at PyTorch defaults (gamma=1, beta=0).
    return params


# ----------------------------------------------------------------------------
# Conv + BatchNorm + LeakyReLU block (two-phase BN, tiling-safe)
# ----------------------------------------------------------------------------
def _conv_bn_lrelu_block(h, w_oikk, n_out, B):
    p, ho, wo = im2col(h, 4, 2, 1)
    m = p.shape[0]
    w = conv_weight_to_matmul(w_oikk).astype(jnp.bfloat16)
    y, psum, psq = conv_batch_stats(p, w)
    # Reduce tiny per-tile partials -> training-mode batch statistics.
    count = jnp.float32(m)
    mean = jnp.sum(psum[:, 0, :], axis=0) / count
    mean_sq = jnp.sum(psq[:, 0, :], axis=0) / count
    var = jnp.maximum(mean_sq - mean * mean, 0.0)
    scale = jax.lax.rsqrt(var + _BN_EPS)
    shift = -mean * scale
    out = bn_lrelu(y, scale.reshape(1, n_out), shift.reshape(1, n_out))
    return out[:m].reshape(B, ho, wo, n_out)


# ----------------------------------------------------------------------------
# Full forward pass
# ----------------------------------------------------------------------------
@jax.jit
def discriminator_forward(x_nchw, labels, params):
    B = x_nchw.shape[0]

    # Label embedding -> (B, 1, 32, 32), concat on channel dim (NCHW semantics).
    emb = params["emb"][labels].reshape(B, 1, 32, 32)
    inp = jnp.concatenate([x_nchw, emb], axis=1)                 # (B, C+1, 32, 32)
    h = jnp.transpose(inp, (0, 2, 3, 1)).astype(jnp.bfloat16)    # NHWC, bf16 matmul inputs

    # Layer 1: Conv(C+1 -> 64, k4 s2 p1) + LeakyReLU.  C_out zero-padded 64 -> 128
    # so the Pallas output store is lane-dense; pad columns sliced off below.
    p, ho, wo = im2col(h, 4, 2, 1)
    m1 = p.shape[0]
    w1 = jnp.pad(conv_weight_to_matmul(params["w1"]), ((0, 0), (0, 64))).astype(jnp.bfloat16)
    b1 = jnp.pad(params["b1"], (0, 64))
    y1 = conv_bias_lrelu(p, w1, b1)
    h = y1[:m1, :64].reshape(B, ho, wo, 64)

    # Layer 2: Conv(64->128, k4 s2 p1) + BatchNorm2d(128) + LeakyReLU.
    h = _conv_bn_lrelu_block(h, params["w2"], 128, B)

    # Layer 3: Conv(128->256, k4 s2 p1) + BatchNorm2d(256) + LeakyReLU.
    h = _conv_bn_lrelu_block(h, params["w3"], 256, B)

    # Layer 4: Conv(256->1, k4 s1 p0) over the remaining 4x4 plane == (B,4096)x(4096,1)
    # dot.  N=1 is lane-sparse and M=B is sub-sublane, so it stays a plain XLA dot.
    w4 = conv_weight_to_matmul(params["w4"]).astype(jnp.bfloat16)   # (4096, 1)
    flat = h.reshape(B, -1)                                         # (B, 4096) bf16
    out = jnp.dot(flat, w4, preferred_element_type=jnp.float32) + params["b4"]
    return out.reshape(-1, 1)


if __name__ == "__main__":
    # Spatial size must be 32x32 (label embedding is 32*32 and the final
    # 4x4 valid conv reduces 4 -> 1). Keep batch/channels small.
    B, img_channels, num_classes = 2, 3, 10

    key = jax.random.PRNGKey(0)
    k_params, k_x, k_lbl = jax.random.split(key, 3)

    params = init_params(k_params, img_channels, num_classes)
    x = jax.random.normal(k_x, (B, img_channels, 32, 32), jnp.float32)
    labels = jax.random.randint(k_lbl, (B,), 0, num_classes, jnp.int32)

    out = discriminator_forward(x, labels, params)
    out = jax.block_until_ready(out)
    assert out.shape == (B, 1), out.shape
    print("KERNEL_OK")
</pallas_src>

<mosaic_0001>
module attributes {stable_mosaic.version = 11 : i64} {
  func.func @_conv_bias_lrelu_kernel(%arg0: i32, %arg1: memref<512x64xbf16, #tpu.memory_space<vmem>>, %arg2: memref<64x128xbf16, #tpu.memory_space<vmem>>, %arg3: memref<1x128xf32, #tpu.memory_space<vmem>>, %arg4: memref<512x128xbf16, #tpu.memory_space<vmem>>) attributes {dimension_semantics = [#tpu.dimension_semantics<parallel>], iteration_bounds = array<i64: 1>, scalar_prefetch = 0 : i64, scratch_operands = 0 : i64, tpu.core_type = #tpu.core_type<tc>, window_params = [{transform_indices = @transform_0, window_bounds = array<i64: 512, 64>}, {pipeline_mode = #tpu.pipeline_mode<synchronous>, transform_indices = @transform_1, window_bounds = array<i64: 64, 128>}, {pipeline_mode = #tpu.pipeline_mode<synchronous>, transform_indices = @transform_2, window_bounds = array<i64: 1, 128>}, {transform_indices = @transform_3, window_bounds = array<i64: 512, 128>}]} {
    %c0 = arith.constant 0 : index
    %c0_0 = arith.constant 0 : index
    %0 = vector.load %arg1[%c0, %c0_0] : memref<512x64xbf16, #tpu.memory_space<vmem>>, vector<512x64xbf16>
    %c0_1 = arith.constant 0 : index
    %c0_2 = arith.constant 0 : index
    %1 = vector.load %arg2[%c0_1, %c0_2] : memref<64x128xbf16, #tpu.memory_space<vmem>>, vector<64x128xbf16>
    %cst = arith.constant dense<0.000000e+00> : vector<512x128xf32>
    %2 = tpu.matmul %0, %1, %cst {dimension_numbers = #tpu.dot_dimension_numbers<[1], [0], [0], [1], [0, 0, 1, 1], [], []>} : vector<512x64xbf16>, vector<64x128xbf16>, vector<512x128xf32> -> vector<512x128xf32>
    %c0_3 = arith.constant 0 : index
    %c0_4 = arith.constant 0 : index
    %3 = vector.load %arg3[%c0_3, %c0_4] : memref<1x128xf32, #tpu.memory_space<vmem>>, vector<1x128xf32>
    %4 = vector.broadcast %3 : vector<1x128xf32> to vector<512x128xf32>
    %5 = arith.addf %2, %4 : vector<512x128xf32>
    %cst_5 = arith.constant 0.000000e+00 : f32
    %6 = vector.broadcast %cst_5 : f32 to vector<512x128xf32>
    %7 = arith.cmpf ogt, %5, %6 : vector<512x128xf32>
    %cst_6 = arith.constant 2.000000e-01 : f32
    %8 = vector.broadcast %cst_6 : f32 to vector<512x128xf32>
    %9 = arith.mulf %8, %5 : vector<512x128xf32>
    %10 = arith.select %7, %5, %9 : vector<512x128xi1>, vector<512x128xf32>
    %11 = arith.truncf %10 : vector<512x128xf32> to vector<512x128xbf16>
    %c0_7 = arith.constant 0 : index
    %c0_8 = arith.constant 0 : index
    %12 = vector.load %arg4[%c0_7, %c0_8] : memref<512x128xbf16, #tpu.memory_space<vmem>>, vector<512x128xbf16>
    tpu.vector_store %arg4[%c0_7, %c0_8], %11 {strides = array<i32>} : memref<512x128xbf16, #tpu.memory_space<vmem>>, vector<512x128xbf16>,
    return
  }
  func.func @transform_0(%arg0: i32) -> (i32, i32) {
    %c0_i32 = arith.constant 0 : i32
    %c0_i32_0 = arith.constant 0 : i32
    return %arg0, %c0_i32 : i32, i32
  }
  func.func @transform_1(%arg0: i32) -> (i32, i32) {
    %c0_i32 = arith.constant 0 : i32
    %c0_i32_0 = arith.constant 0 : i32
    %c0_i32_1 = arith.constant 0 : i32
    return %c0_i32, %c0_i32_0 : i32, i32
  }
  func.func @transform_2(%arg0: i32) -> (i32, i32) {
    %c0_i32 = arith.constant 0 : i32
    %c0_i32_0 = arith.constant 0 : i32
    %c0_i32_1 = arith.constant 0 : i32
    return %c0_i32, %c0_i32_0 : i32, i32
  }
  func.func @transform_3(%arg0: i32) -> (i32, i32) {
    %c0_i32 = arith.constant 0 : i32
    %c0_i32_0 = arith.constant 0 : i32
    return %arg0, %c0_i32 : i32, i32
  }
}

module attributes {stable_mosaic.version = 11 : i64} {
  func.func @_conv_stats_kernel(%arg0: i32, %arg1: memref<128x1024xbf16, #tpu.memory_space<vmem>>, %arg2: memref<1024x128xbf16, #tpu.memory_space<vmem>>, %arg3: memref<128x128xf32, #tpu.memory_space<vmem>>, %arg4: memref<1x8x128xf32, #tpu.memory_space<vmem>>, %arg5: memref<1x8x128xf32, #tpu.memory_space<vmem>>) attributes {dimension_semantics = [#tpu.dimension_semantics<parallel>], iteration_bounds = array<i64: 1>, scalar_prefetch = 0 : i64, scratch_operands = 0 : i64, tpu.core_type = #tpu.core_type<tc>, window_params = [{transform_indices = @transform_0, window_bounds = array<i64: 128, 1024>}, {pipeline_mode = #tpu.pipeline_mode<synchronous>, transform_indices = @transform_1, window_bounds = array<i64: 1024, 128>}, {transform_indices = @transform_2, window_bounds = array<i64: 128, 128>}, {transform_indices = @transform_3, window_bounds = array<i64: 1, 8, 128>}, {transform_indices = @transform_4, window_bounds = array<i64: 1, 8, 128>}]} {
    %c0 = arith.constant 0 : index
    %c0_0 = arith.constant 0 : index
    %0 = vector.load %arg1[%c0, %c0_0] : memref<128x1024xbf16, #tpu.memory_space<vmem>>, vector<128x1024xbf16>
    %c0_1 = arith.constant 0 : index
    %c0_2 = arith.constant 0 : index
    %1 = vector.load %arg2[%c0_1, %c0_2] : memref<1024x128xbf16, #tpu.memory_space<vmem>>, vector<1024x128xbf16>
    %cst = arith.constant dense<0.000000e+00> : vector<128x128xf32>
    %2 = tpu.matmul %0, %1, %cst {dimension_numbers = #tpu.dot_dimension_numbers<[1], [0], [0], [1], [0, 0, 1, 1], [], []>} : vector<128x1024xbf16>, vector<1024x128xbf16>, vector<128x128xf32> -> vector<128x128xf32>
    %c0_3 = arith.constant 0 : index
    %c0_4 = arith.constant 0 : index
    %3 = vector.load %arg3[%c0_3, %c0_4] : memref<128x128xf32, #tpu.memory_space<vmem>>, vector<128x128xf32>
    tpu.vector_store %arg3[%c0_3, %c0_4], %2 {strides = array<i32>} : memref<128x128xf32, #tpu.memory_space<vmem>>, vector<128x128xf32>,
    %cst_5 = arith.constant dense<0.000000e+00> : vector<128xf32>
    %4 = vector.multi_reduction <add>, %2, %cst_5 [0] : vector<128x128xf32> to vector<128xf32>
    %5 = arith.mulf %2, %2 : vector<128x128xf32>
    %cst_6 = arith.constant dense<0.000000e+00> : vector<128xf32>
    %6 = vector.multi_reduction <add>, %5, %cst_6 [0] : vector<128x128xf32> to vector<128xf32>
    %7 = vector.shape_cast %4 : vector<128xf32> to vector<1x1x128xf32>
    %8 = vector.shape_cast %7 : vector<1x1x128xf32> to vector<1x1x128xf32>
    %9 = vector.broadcast %8 : vector<1x1x128xf32> to vector<1x8x128xf32>
    %c0_7 = arith.constant 0 : index
    %c0_8 = arith.constant 0 : index
    %c0_9 = arith.constant 0 : index
    %10 = vector.load %arg4[%c0_7, %c0_8, %c0_9] : memref<1x8x128xf32, #tpu.memory_space<vmem>>, vector<1x8x128xf32>
    tpu.vector_store %arg4[%c0_7, %c0_8, %c0_9], %9 {strides = array<i32>} : memref<1x8x128xf32, #tpu.memory_space<vmem>>, vector<1x8x128xf32>,
    %11 = vector.shape_cast %6 : vector<128xf32> to vector<1x1x128xf32>
    %12 = vector.shape_cast %11 : vector<1x1x128xf32> to vector<1x1x128xf32>
    %13 = vector.broadcast %12 : vector<1x1x128xf32> to vector<1x8x128xf32>
    %c0_10 = arith.constant 0 : index
    %c0_11 = arith.constant 0 : index
    %c0_12 = arith.constant 0 : index
    %14 = vector.load %arg5[%c0_10, %c0_11, %c0_12] : memref<1x8x128xf32, #tpu.memory_space<vmem>>, vector<1x8x128xf32>
    tpu.vector_store %arg5[%c0_10, %c0_11, %c0_12], %13 {strides = array<i32>} : memref<1x8x128xf32, #tpu.memory_space<vmem>>, vector<1x8x128xf32>,
    return
  }
  func.func @transform_0(%arg0: i32) -> (i32, i32) {
    %c0_i32 = arith.constant 0 : i32
    %c0_i32_0 = arith.constant 0 : i32
    return %arg0, %c0_i32 : i32, i32
  }
  func.func @transform_1(%arg0: i32) -> (i32, i32) {
    %c0_i32 = arith.constant 0 : i32
    %c0_i32_0 = arith.constant 0 : i32
    %c0_i32_1 = arith.constant 0 : i32
    return %c0_i32, %c0_i32_0 : i32, i32
  }
  func.func @transform_2(%arg0: i32) -> (i32, i32) {
    %c0_i32 = arith.constant 0 : i32
    %c0_i32_0 = arith.constant 0 : i32
    return %arg0, %c0_i32 : i32, i32
  }
  func.func @transform_3(%arg0: i32) -> (i32, i32, i32) {
    %c0_i32 = arith.constant 0 : i32
    %c0_i32_0 = arith.constant 0 : i32
    %c0_i32_1 = arith.constant 0 : i32
    return %arg0, %c0_i32, %c0_i32_0 : i32, i32, i32
  }
  func.func @transform_4(%arg0: i32) -> (i32, i32, i32) {
    %c0_i32 = arith.constant 0 : i32
    %c0_i32_0 = arith.constant 0 : i32
    %c0_i32_1 = arith.constant 0 : i32
    return %arg0, %c0_i32, %c0_i32_0 : i32, i32, i32
  }
}

module attributes {stable_mosaic.version = 11 : i64} {
  func.func @_bn_lrelu_kernel(%arg0: i32, %arg1: memref<128x128xf32, #tpu.memory_space<vmem>>, %arg2: memref<1x128xf32, #tpu.memory_space<vmem>>, %arg3: memref<1x128xf32, #tpu.memory_space<vmem>>, %arg4: memref<128x128xbf16, #tpu.memory_space<vmem>>) attributes {dimension_semantics = [#tpu.dimension_semantics<parallel>], iteration_bounds = array<i64: 1>, scalar_prefetch = 0 : i64, scratch_operands = 0 : i64, tpu.core_type = #tpu.core_type<tc>, window_params = [{transform_indices = @transform_0, window_bounds = array<i64: 128, 128>}, {pipeline_mode = #tpu.pipeline_mode<synchronous>, transform_indices = @transform_1, window_bounds = array<i64: 1, 128>}, {pipeline_mode = #tpu.pipeline_mode<synchronous>, transform_indices = @transform_2, window_bounds = array<i64: 1, 128>}, {transform_indices = @transform_3, window_bounds = array<i64: 128, 128>}]} {
    %c0 = arith.constant 0 : index
    %c0_0 = arith.constant 0 : index
    %0 = vector.load %arg1[%c0, %c0_0] : memref<128x128xf32, #tpu.memory_space<vmem>>, vector<128x128xf32>
    %c0_1 = arith.constant 0 : index
    %c0_2 = arith.constant 0 : index
    %1 = vector.load %arg2[%c0_1, %c0_2] : memref<1x128xf32, #tpu.memory_space<vmem>>, vector<1x128xf32>
    %2 = vector.broadcast %1 : vector<1x128xf32> to vector<128x128xf32>
    %3 = arith.mulf %0, %2 : vector<128x128xf32>
    %c0_3 = arith.constant 0 : index
    %c0_4 = arith.constant 0 : index
    %4 = vector.load %arg3[%c0_3, %c0_4] : memref<1x128xf32, #tpu.memory_space<vmem>>, vector<1x128xf32>
    %5 = vector.broadcast %4 : vector<1x128xf32> to vector<128x128xf32>
    %6 = arith.addf %3, %5 : vector<128x128xf32>
    %cst = arith.constant 0.000000e+00 : f32
    %7 = vector.broadcast %cst : f32 to vector<128x128xf32>
    %8 = arith.cmpf ogt, %6, %7 : vector<128x128xf32>
    %cst_5 = arith.constant 2.000000e-01 : f32
    %9 = vector.broadcast %cst_5 : f32 to vector<128x128xf32>
    %10 = arith.mulf %9, %6 : vector<128x128xf32>
    %11 = arith.select %8, %6, %10 : vector<128x128xi1>, vector<128x128xf32>
    %12 = arith.truncf %11 : vector<128x128xf32> to vector<128x128xbf16>
    %c0_6 = arith.constant 0 : index
    %c0_7 = arith.constant 0 : index
    %13 = vector.load %arg4[%c0_6, %c0_7] : memref<128x128xbf16, #tpu.memory_space<vmem>>, vector<128x128xbf16>
    tpu.vector_store %arg4[%c0_6, %c0_7], %12 {strides = array<i32>} : memref<128x128xbf16, #tpu.memory_space<vmem>>, vector<128x128xbf16>,
    return
  }
  func.func @transform_0(%arg0: i32) -> (i32, i32) {
    %c0_i32 = arith.constant 0 : i32
    %c0_i32_0 = arith.constant 0 : i32
    return %arg0, %c0_i32 : i32, i32
  }
  func.func @transform_1(%arg0: i32) -> (i32, i32) {
    %c0_i32 = arith.constant 0 : i32
    %c0_i32_0 = arith.constant 0 : i32
    %c0_i32_1 = arith.constant 0 : i32
    return %c0_i32, %c0_i32_0 : i32, i32
  }
  func.func @transform_2(%arg0: i32) -> (i32, i32) {
    %c0_i32 = arith.constant 0 : i32
    %c0_i32_0 = arith.constant 0 : i32
    %c0_i32_1 = arith.constant 0 : i32
    return %c0_i32, %c0_i32_0 : i32, i32
  }
  func.func @transform_3(%arg0: i32) -> (i32, i32) {
    %c0_i32 = arith.constant 0 : i32
    %c0_i32_0 = arith.constant 0 : i32
    return %arg0, %c0_i32 : i32, i32
  }
}

module attributes {stable_mosaic.version = 11 : i64} {
  func.func @_conv_stats_kernel(%arg0: i32, %arg1: memref<32x2048xbf16, #tpu.memory_space<vmem>>, %arg2: memref<2048x256xbf16, #tpu.memory_space<vmem>>, %arg3: memref<32x256xf32, #tpu.memory_space<vmem>>, %arg4: memref<1x8x256xf32, #tpu.memory_space<vmem>>, %arg5: memref<1x8x256xf32, #tpu.memory_space<vmem>>) attributes {dimension_semantics = [#tpu.dimension_semantics<parallel>], iteration_bounds = array<i64: 1>, scalar_prefetch = 0 : i64, scratch_operands = 0 : i64, tpu.core_type = #tpu.core_type<tc>, window_params = [{transform_indices = @transform_0, window_bounds = array<i64: 32, 2048>}, {pipeline_mode = #tpu.pipeline_mode<synchronous>, transform_indices = @transform_1, window_bounds = array<i64: 2048, 256>}, {transform_indices = @transform_2, window_bounds = array<i64: 32, 256>}, {transform_indices = @transform_3, window_bounds = array<i64: 1, 8, 256>}, {transform_indices = @transform_4, window_bounds = array<i64: 1, 8, 256>}]} {
    %c0 = arith.constant 0 : index
    %c0_0 = arith.constant 0 : index
    %0 = vector.load %arg1[%c0, %c0_0] : memref<32x2048xbf16, #tpu.memory_space<vmem>>, vector<32x2048xbf16>
    %c0_1 = arith.constant 0 : index
    %c0_2 = arith.constant 0 : index
    %1 = vector.load %arg2[%c0_1, %c0_2] : memref<2048x256xbf16, #tpu.memory_space<vmem>>, vector<2048x256xbf16>
    %cst = arith.constant dense<0.000000e+00> : vector<32x256xf32>
    %2 = tpu.matmul %0, %1, %cst {dimension_numbers = #tpu.dot_dimension_numbers<[1], [0], [0], [1], [0, 0, 1, 1], [], []>} : vector<32x2048xbf16>, vector<2048x256xbf16>, vector<32x256xf32> -> vector<32x256xf32>
    %c0_3 = arith.constant 0 : index
    %c0_4 = arith.constant 0 : index
    %3 = vector.load %arg3[%c0_3, %c0_4] : memref<32x256xf32, #tpu.memory_space<vmem>>, vector<32x256xf32>
    tpu.vector_store %arg3[%c0_3, %c0_4], %2 {strides = array<i32>} : memref<32x256xf32, #tpu.memory_space<vmem>>, vector<32x256xf32>,
    %cst_5 = arith.constant dense<0.000000e+00> : vector<256xf32>
    %4 = vector.multi_reduction <add>, %2, %cst_5 [0] : vector<32x256xf32> to vector<256xf32>
    %5 = arith.mulf %2, %2 : vector<32x256xf32>
    %cst_6 = arith.constant dense<0.000000e+00> : vector<256xf32>
    %6 = vector.multi_reduction <add>, %5, %cst_6 [0] : vector<32x256xf32> to vector<256xf32>
    %7 = vector.shape_cast %4 : vector<256xf32> to vector<1x1x256xf32>
    %8 = vector.shape_cast %7 : vector<1x1x256xf32> to vector<1x1x256xf32>
    %9 = vector.broadcast %8 : vector<1x1x256xf32> to vector<1x8x256xf32>
    %c0_7 = arith.constant 0 : index
    %c0_8 = arith.constant 0 : index
    %c0_9 = arith.constant 0 : index
    %10 = vector.load %arg4[%c0_7, %c0_8, %c0_9] : memref<1x8x256xf32, #tpu.memory_space<vmem>>, vector<1x8x256xf32>
    tpu.vector_store %arg4[%c0_7, %c0_8, %c0_9], %9 {strides = array<i32>} : memref<1x8x256xf32, #tpu.memory_space<vmem>>, vector<1x8x256xf32>,
    %11 = vector.shape_cast %6 : vector<256xf32> to vector<1x1x256xf32>
    %12 = vector.shape_cast %11 : vector<1x1x256xf32> to vector<1x1x256xf32>
    %13 = vector.broadcast %12 : vector<1x1x256xf32> to vector<1x8x256xf32>
    %c0_10 = arith.constant 0 : index
    %c0_11 = arith.constant 0 : index
    %c0_12 = arith.constant 0 : index
    %14 = vector.load %arg5[%c0_10, %c0_11, %c0_12] : memref<1x8x256xf32, #tpu.memory_space<vmem>>, vector<1x8x256xf32>
    tpu.vector_store %arg5[%c0_10, %c0_11, %c0_12], %13 {strides = array<i32>} : memref<1x8x256xf32, #tpu.memory_space<vmem>>, vector<1x8x256xf32>,
    return
  }
  func.func @transform_0(%arg0: i32) -> (i32, i32) {
    %c0_i32 = arith.constant 0 : i32
    %c0_i32_0 = arith.constant 0 : i32
    return %arg0, %c0_i32 : i32, i32
  }
  func.func @transform_1(%arg0: i32) -> (i32, i32) {
    %c0_i32 = arith.constant 0 : i32
    %c0_i32_0 = arith.constant 0 : i32
    %c0_i32_1 = arith.constant 0 : i32
    return %c0_i32, %c0_i32_0 : i32, i32
  }
  func.func @transform_2(%arg0: i32) -> (i32, i32) {
    %c0_i32 = arith.constant 0 : i32
    %c0_i32_0 = arith.constant 0 : i32
    return %arg0, %c0_i32 : i32, i32
  }
  func.func @transform_3(%arg0: i32) -> (i32, i32, i32) {
    %c0_i32 = arith.constant 0 : i32
    %c0_i32_0 = arith.constant 0 : i32
    %c0_i32_1 = arith.constant 0 : i32
    return %arg0, %c0_i32, %c0_i32_0 : i32, i32, i32
  }
  func.func @transform_4(%arg0: i32) -> (i32, i32, i32) {
    %c0_i32 = arith.constant 0 : i32
    %c0_i32_0 = arith.constant 0 : i32
    %c0_i32_1 = arith.constant 0 : i32
    return %arg0, %c0_i32, %c0_i32_0 : i32, i32, i32
  }
}

module attributes {stable_mosaic.version = 11 : i64} {
  func.func @_bn_lrelu_kernel(%arg0: i32, %arg1: memref<32x256xf32, #tpu.memory_space<vmem>>, %arg2: memref<1x256xf32, #tpu.memory_space<vmem>>, %arg3: memref<1x256xf32, #tpu.memory_space<vmem>>, %arg4: memref<32x256xbf16, #tpu.memory_space<vmem>>) attributes {dimension_semantics = [#tpu.dimension_semantics<parallel>], iteration_bounds = array<i64: 1>, scalar_prefetch = 0 : i64, scratch_operands = 0 : i64, tpu.core_type = #tpu.core_type<tc>, window_params = [{transform_indices = @transform_0, window_bounds = array<i64: 32, 256>}, {pipeline_mode = #tpu.pipeline_mode<synchronous>, transform_indices = @transform_1, window_bounds = array<i64: 1, 256>}, {pipeline_mode = #tpu.pipeline_mode<synchronous>, transform_indices = @transform_2, window_bounds = array<i64: 1, 256>}, {transform_indices = @transform_3, window_bounds = array<i64: 32, 256>}]} {
    %c0 = arith.constant 0 : index
    %c0_0 = arith.constant 0 : index
    %0 = vector.load %arg1[%c0, %c0_0] : memref<32x256xf32, #tpu.memory_space<vmem>>, vector<32x256xf32>
    %c0_1 = arith.constant 0 : index
    %c0_2 = arith.constant 0 : index
    %1 = vector.load %arg2[%c0_1, %c0_2] : memref<1x256xf32, #tpu.memory_space<vmem>>, vector<1x256xf32>
    %2 = vector.broadcast %1 : vector<1x256xf32> to vector<32x256xf32>
    %3 = arith.mulf %0, %2 : vector<32x256xf32>
    %c0_3 = arith.constant 0 : index
    %c0_4 = arith.constant 0 : index
    %4 = vector.load %arg3[%c0_3, %c0_4] : memref<1x256xf32, #tpu.memory_space<vmem>>, vector<1x256xf32>
    %5 = vector.broadcast %4 : vector<1x256xf32> to vector<32x256xf32>
    %6 = arith.addf %3, %5 : vector<32x256xf32>
    %cst = arith.constant 0.000000e+00 : f32
    %7 = vector.broadcast %cst : f32 to vector<32x256xf32>
    %8 = arith.cmpf ogt, %6, %7 : vector<32x256xf32>
    %cst_5 = arith.constant 2.000000e-01 : f32
    %9 = vector.broadcast %cst_5 : f32 to vector<32x256xf32>
    %10 = arith.mulf %9, %6 : vector<32x256xf32>
    %11 = arith.select %8, %6, %10 : vector<32x256xi1>, vector<32x256xf32>
    %12 = arith.truncf %11 : vector<32x256xf32> to vector<32x256xbf16>
    %c0_6 = arith.constant 0 : index
    %c0_7 = arith.constant 0 : index
    %13 = vector.load %arg4[%c0_6, %c0_7] : memref<32x256xbf16, #tpu.memory_space<vmem>>, vector<32x256xbf16>
    tpu.vector_store %arg4[%c0_6, %c0_7], %12 {strides = array<i32>} : memref<32x256xbf16, #tpu.memory_space<vmem>>, vector<32x256xbf16>,
    return
  }
  func.func @transform_0(%arg0: i32) -> (i32, i32) {
    %c0_i32 = arith.constant 0 : i32
    %c0_i32_0 = arith.constant 0 : i32
    return %arg0, %c0_i32 : i32, i32
  }
  func.func @transform_1(%arg0: i32) -> (i32, i32) {
    %c0_i32 = arith.constant 0 : i32
    %c0_i32_0 = arith.constant 0 : i32
    %c0_i32_1 = arith.constant 0 : i32
    return %c0_i32, %c0_i32_0 : i32, i32
  }
  func.func @transform_2(%arg0: i32) -> (i32, i32) {
    %c0_i32 = arith.constant 0 : i32
    %c0_i32_0 = arith.constant 0 : i32
    %c0_i32_1 = arith.constant 0 : i32
    return %c0_i32, %c0_i32_0 : i32, i32
  }
  func.func @transform_3(%arg0: i32) -> (i32, i32) {
    %c0_i32 = arith.constant 0 : i32
    %c0_i32_0 = arith.constant 0 : i32
    return %arg0, %c0_i32 : i32, i32
  }
}

</mosaic_0001>

<llo_original>
// kernel: discriminator_forward.5
$region0: #{discriminator_forward.5}
  #allocation0 [shape = 'u32[]', space=smem, size = 0x4, offset = 0x4, fixed_abs, tag = 'smem constant byte address 0x4 - core index']
  #allocation1 [shape = 'u32[144,128]{1,0:T(1,128)}', space=vmem, size = 0x12000, scoped, tag = 'internal scratch']
  %s0 = inlined_call_operand.vmem [shape: bf16[512,64], index: 0, kind: input, shape index: {}]
  %s1 = inlined_call_operand.vmem [shape: bf16[64,128], index: 1, kind: input, shape index: {}]
  %s2 = inlined_call_operand.vmem [shape: f32[1,128], index: 2, kind: input, shape index: {}]
  %s3 = inlined_call_operand.vmem [shape: bf16[512,128], index: 3, kind: output, shape index: {}]
  %s4 = sld [smem:[#allocation0]]
  $region22: #{discriminator_forward.5} parent=0
    _
  %s6 = ssub.s32 1, %s4
  %s7 = scalar_select 0, %s6, %s4
  // Predicated region
  $region2: #{discriminator_forward.5} parent=0 // pred_check
    _
  $region3: #{discriminator_forward.5} parent=0 // pred_check_branch
    %9 = sbr.rel (0) target = $region5
  $region4: #{discriminator_forward.5} parent=0 // pred_region
    _
  $region5: #{discriminator_forward.5} parent=0 // pred_fallthru
    _
  // Predicated region
  $region6: #{discriminator_forward.5} parent=0 // pred_check
    _
  $region7: #{discriminator_forward.5} parent=0 // pred_check_branch
    %11 = sbr.rel (0) target = $region9
  $region8: #{discriminator_forward.5} parent=0 // pred_region
    _
  $region9: #{discriminator_forward.5} parent=0 // pred_fallthru
    _
  // Predicated region
  $region10: #{discriminator_forward.5} parent=0 // pred_check
    _
  $region11: #{discriminator_forward.5} parent=0 // pred_check_branch
    %13 = sbr.rel (0) target = $region13
  $region12: #{discriminator_forward.5} parent=0 // pred_region
    _
  $region13: #{discriminator_forward.5} parent=0 // pred_fallthru
    _
  %v15 = vld [vmem:[%s0] sm:$0xf]
  %v16 = vld [vmem:[%s0 + $0x4] sm:$0xf]
  %v17 = vld [vmem:[%s0 + $0x8] sm:$0xf]
  %v18 = vld [vmem:[%s0 + $0xc] sm:$0xf]
  %v19 = vld [vmem:[%s0 + $0x10] sm:$0xf]
  %v20 = vld [vmem:[%s0 + $0x14] sm:$0xf]
  %v21 = vld [vmem:[%s0 + $0x18] sm:$0xf]
  %v22 = vld [vmem:[%s0 + $0x1c] sm:$0xf]
  %v23 = vld [vmem:[%s0 + $0x20] sm:$0xf]
  %v24 = vld [vmem:[%s0 + $0x24] sm:$0xf]
  %v25 = vld [vmem:[%s0 + $0x28] sm:$0xf]
  %v26 = vld [vmem:[%s0 + $0x2c] sm:$0xf]
  %v27 = vld [vmem:[%s0 + $0x30] sm:$0xf]
  %v28 = vld [vmem:[%s0 + $0x34] sm:$0xf]
  %v29 = vld [vmem:[%s0 + $0x38] sm:$0xf]
  %v30 = vld [vmem:[%s0 + $0x3c] sm:$0xf]
  %v31 = vld [vmem:[%s0 + $0x40] sm:$0xf]
  %v32 = vld [vmem:[%s0 + $0x44] sm:$0xf]
  %v33 = vld [vmem:[%s0 + $0x48] sm:$0xf]
  %v34 = vld [vmem:[%s0 + $0x4c] sm:$0xf]
  %v35 = vld [vmem:[%s0 + $0x50] sm:$0xf]
  %v36 = vld [vmem:[%s0 + $0x54] sm:$0xf]
  %v37 = vld [vmem:[%s0 + $0x58] sm:$0xf]
  %v38 = vld [vmem:[%s0 + $0x5c] sm:$0xf]
  %v39 = vld [vmem:[%s0 + $0x60] sm:$0xf]
  %v40 = vld [vmem:[%s0 + $0x64] sm:$0xf]
  %v41 = vld [vmem:[%s0 + $0x68] sm:$0xf]
  %v42 = vld [vmem:[%s0 + $0x6c] sm:$0xf]
  %v43 = vld [vmem:[%s0 + $0x70] sm:$0xf]
  %v44 = vld [vmem:[%s0 + $0x74] sm:$0xf]
  %v45 = vld [vmem:[%s0 + $0x78] sm:$0xf]
  %v46 = vld [vmem:[%s0 + $0x7c] sm:$0xf]
  %v47 = vld [vmem:[%s0 + $0x80] sm:$0xf]
  %v48 = vld [vmem:[%s0 + $0x84] sm:$0xf]
  %v49 = vld [vmem:[%s0 + $0x88] sm:$0xf]
  %v50 = vld [vmem:[%s0 + $0x8c] sm:$0xf]
  %v51 = vld [vmem:[%s0 + $0x90] sm:$0xf]
  %v52 = vld [vmem:[%s0 + $0x94] sm:$0xf]
  %v53 = vld [vmem:[%s0 + $0x98] sm:$0xf]
  %v54 = vld [vmem:[%s0 + $0x9c] sm:$0xf]
  %v55 = vld [vmem:[%s0 + $0xa0] sm:$0xf]
  %v56 = vld [vmem:[%s0 + $0xa4] sm:$0xf]
  %v57 = vld [vmem:[%s0 + $0xa8] sm:$0xf]
  %v58 = vld [vmem:[%s0 + $0xac] sm:$0xf]
  %v59 = vld [vmem:[%s0 + $0xb0] sm:$0xf]
  %v60 = vld [vmem:[%s0 + $0xb4] sm:$0xf]
  %v61 = vld [vmem:[%s0 + $0xb8] sm:$0xf]
  %v62 = vld [vmem:[%s0 + $0xbc] sm:$0xf]
  %v63 = vld [vmem:[%s0 + $0xc0] sm:$0xf]
  %v64 = vld [vmem:[%s0 + $0xc4] sm:$0xf]
  %v65 = vld [vmem:[%s0 + $0xc8] sm:$0xf]
  %v66 = vld [vmem:[%s0 + $0xcc] sm:$0xf]
  %v67 = vld [vmem:[%s0 + $0xd0] sm:$0xf]
  %v68 = vld [vmem:[%s0 + $0xd4] sm:$0xf]
  %v69 = vld [vmem:[%s0 + $0xd8] sm:$0xf]
  %v70 = vld [vmem:[%s0 + $0xdc] sm:$0xf]
  %v71 = vld [vmem:[%s0 + $0xe0] sm:$0xf]
  %v72 = vld [vmem:[%s0 + $0xe4] sm:$0xf]
  %v73 = vld [vmem:[%s0 + $0xe8] sm:$0xf]
  %v74 = vld [vmem:[%s0 + $0xec] sm:$0xf]
  %v75 = vld [vmem:[%s0 + $0xf0] sm:$0xf]
  %v76 = vld [vmem:[%s0 + $0xf4] sm:$0xf]
  %v77 = vld [vmem:[%s0 + $0xf8] sm:$0xf]
  %v78 = vld [vmem:[%s0 + $0xfc] sm:$0xf]
  %v79 = vld [vmem:[%s1] sm:$0xf]
  %v80 = vld [vmem:[%s1 + $0x4] sm:$0xf]
  %v81 = vld [vmem:[%s1 + $0x8] sm:$0xf]
  %v82 = vld [vmem:[%s1 + $0xc] sm:$0xf]
  %v83 = vld [vmem:[%s1 + $0x10] sm:$0xf]
  %v84 = vld [vmem:[%s1 + $0x14] sm:$0xf]
  %v85 = vld [vmem:[%s1 + $0x18] sm:$0xf]
  %v86 = vld [vmem:[%s1 + $0x1c] sm:$0xf]
  %v87 = vld [vmem:[%s2] sm:$0x1]
  %v89 = vlaneseq
  %v90 = vshrl.u32 %v89, 7
  %v91 = vsub.s32 0, %v90
  %v92 = vrot.slane %v87, %v91
  %v158 = vunpack.c.l.b16 %v15
  %v159 = vunpack.c.l.b16 %v16
  %v160 = vunpack.c.l.b16 %v17
  %v161 = vunpack.c.l.b16 %v18
  %v162 = vunpack.c.l.b16 %v19
  %v163 = vunpack.c.l.b16 %v20
  %v164 = vunpack.c.l.b16 %v21
  %v165 = vunpack.c.l.b16 %v22
  %v166 = vunpack.c.l.b16 %v23
  %v167 = vunpack.c.l.b16 %v24
  %v168 = vunpack.c.l.b16 %v25
  %v169 = vunpack.c.l.b16 %v26
  %v170 = vunpack.c.l.b16 %v27
  %v171 = vunpack.c.l.b16 %v28
  %v172 = vunpack.c.l.b16 %v29
  %v173 = vunpack.c.l.b16 %v30
  %v174 = vunpack.c.l.b16 %v31
  %v175 = vunpack.c.l.b16 %v32
  %v176 = vunpack.c.l.b16 %v33
  %v177 = vunpack.c.l.b16 %v34
  %v178 = vunpack.c.l.b16 %v35
  %v179 = vunpack.c.l.b16 %v36
  %v180 = vunpack.c.l.b16 %v37
  %v181 = vunpack.c.l.b16 %v38
  %v182 = vunpack.c.l.b16 %v39
  %v183 = vunpack.c.l.b16 %v40
  %v184 = vunpack.c.l.b16 %v41
  %v185 = vunpack.c.l.b16 %v42
  %v186 = vunpack.c.l.b16 %v43
  %v187 = vunpack.c.l.b16 %v44
  %v188 = vunpack.c.l.b16 %v45
  %v189 = vunpack.c.l.b16 %v46
  %v190 = vunpack.c.l.b16 %v47
  %v191 = vunpack.c.l.b16 %v48
  %v192 = vunpack.c.l.b16 %v49
  %v193 = vunpack.c.l.b16 %v50
  %v194 = vunpack.c.l.b16 %v51
  %v195 = vunpack.c.l.b16 %v52
  %v196 = vunpack.c.l.b16 %v53
  %v197 = vunpack.c.l.b16 %v54
  %v198 = vunpack.c.l.b16 %v55
  %v199 = vunpack.c.l.b16 %v56
  %v200 = vunpack.c.l.b16 %v57
  %v201 = vunpack.c.l.b16 %v58
  %v202 = vunpack.c.l.b16 %v59
  %v203 = vunpack.c.l.b16 %v60
  %v204 = vunpack.c.l.b16 %v61
  %v205 = vunpack.c.l.b16 %v62
  %v206 = vunpack.c.l.b16 %v63
  %v207 = vunpack.c.l.b16 %v64
  %v208 = vunpack.c.l.b16 %v65
  %v209 = vunpack.c.l.b16 %v66
  %v210 = vunpack.c.l.b16 %v67
  %v211 = vunpack.c.l.b16 %v68
  %v212 = vunpack.c.l.b16 %v69
  %v213 = vunpack.c.l.b16 %v70
  %v214 = vunpack.c.l.b16 %v71
  %v215 = vunpack.c.l.b16 %v72
  %v216 = vunpack.c.l.b16 %v73
  %v217 = vunpack.c.l.b16 %v74
  %v218 = vunpack.c.l.b16 %v75
  %v219 = vunpack.c.l.b16 %v76
  %v220 = vunpack.c.l.b16 %v77
  %v221 = vunpack.c.l.b16 %v78
  %v222 = vpack.c.b16 %v159, %v158
  %v223 = vpack.c.b16 %v161, %v160
  %v224 = vpack.c.b16 %v163, %v162
  %v225 = vpack.c.b16 %v165, %v164
  %v226 = vpack.c.b16 %v167, %v166
  %v227 = vpack.c.b16 %v169, %v168
  %v228 = vpack.c.b16 %v171, %v170
  %v229 = vpack.c.b16 %v173, %v172
  %v230 = vpack.c.b16 %v175, %v174
  %v231 = vpack.c.b16 %v177, %v176
  %v232 = vpack.c.b16 %v179, %v178
  %v233 = vpack.c.b16 %v181, %v180
  %v234 = vpack.c.b16 %v183, %v182
  %v235 = vpack.c.b16 %v185, %v184
  %v236 = vpack.c.b16 %v187, %v186
  %v237 = vpack.c.b16 %v189, %v188
  %v238 = vpack.c.b16 %v191, %v190
  %v239 = vpack.c.b16 %v193, %v192
  %v240 = vpack.c.b16 %v195, %v194
  %v241 = vpack.c.b16 %v197, %v196
  %v242 = vpack.c.b16 %v199, %v198
  %v243 = vpack.c.b16 %v201, %v200
  %v244 = vpack.c.b16 %v203, %v202
  %v245 = vpack.c.b16 %v205, %v204
  %v246 = vpack.c.b16 %v207, %v206
  %v247 = vpack.c.b16 %v209, %v208
  %v248 = vpack.c.b16 %v211, %v210
  %v249 = vpack.c.b16 %v213, %v212
  %v250 = vpack.c.b16 %v215, %v214
  %v251 = vpack.c.b16 %v217, %v216
  %v252 = vpack.c.b16 %v219, %v218
  %v253 = vpack.c.b16 %v221, %v220
  %v262 = vunpack.c.l.b16 %v79
  %v263 = vunpack.c.l.b16 %v80
  %v264 = vunpack.c.l.b16 %v81
  %v265 = vunpack.c.l.b16 %v82
  %v266 = vunpack.c.l.b16 %v83
  %v267 = vunpack.c.l.b16 %v84
  %v268 = vunpack.c.l.b16 %v85
  %v269 = vunpack.c.l.b16 %v86
  %v270 = vpack.c.b16 %v263, %v262
  %v271 = vpack.c.b16 %v265, %v264
  %v272 = vpack.c.b16 %v267, %v266
  %v273 = vpack.c.b16 %v269, %v268
  %vm278 = vcmask 523264
  %v280 = vsel %vm278, %v222, 0
  %v283 = vsel %vm278, %v223, 0
  %v286 = vsel %vm278, %v224, 0
  %v289 = vsel %vm278, %v225, 0
  %v292 = vsel %vm278, %v226, 0
  %v295 = vsel %vm278, %v227, 0
  %v298 = vsel %vm278, %v228, 0
  %v301 = vsel %vm278, %v229, 0
  %v304 = vsel %vm278, %v230, 0
  %v307 = vsel %vm278, %v231, 0
  %v310 = vsel %vm278, %v232, 0
  %v313 = vsel %vm278, %v233, 0
  %v316 = vsel %vm278, %v234, 0
  %v319 = vsel %vm278, %v235, 0
  %v322 = vsel %vm278, %v236, 0
  %v325 = vsel %vm278, %v237, 0
  %v328 = vsel %vm278, %v238, 0
  %v331 = vsel %vm278, %v239, 0
  %v334 = vsel %vm278, %v240, 0
  %v337 = vsel %vm278, %v241, 0
  %v340 = vsel %vm278, %v242, 0
  %v343 = vsel %vm278, %v243, 0
  %v346 = vsel %vm278, %v244, 0
  %v349 = vsel %vm278, %v245, 0
  %v352 = vsel %vm278, %v246, 0
  %v355 = vsel %vm278, %v247, 0
  %v358 = vsel %vm278, %v248, 0
  %v361 = vsel %vm278, %v249, 0
  %v364 = vsel %vm278, %v250, 0
  %v367 = vsel %vm278, %v251, 0
  %v370 = vsel %vm278, %v252, 0
  %v373 = vsel %vm278, %v253, 0
  %375 = vmatprep.subr.bf16.mxu0 0
  %376 = vmatpush1.bf16.msra.mxu0 %v270
  %377 = vmatprep.subr.bf16.mxu0 0
  %378 = vmatpush1.bf16.msra.mxu0 %v271
  %379 = vmatprep.subr.bf16.mxu0 0
  %380 = vmatpush1.bf16.msra.mxu0 %v272
  %381 = vmatprep.subr.bf16.mxu0 0
  %382 = vmatpush1.bf16.msra.mxu0 %v273
  %383 = vmatprep.subr.bf16.mxu0 0
  %384 = vmatpush1.bf16.msra.mxu0 0
  %385 = vmatprep.subr.bf16.mxu0 0
  %386 = vmatpush1.bf16.msra.mxu0 0
  %387 = vmatprep.subr.bf16.mxu0 0
  %388 = vmatpush1.bf16.msra.mxu0 0
  %389 = vmatprep.subr.bf16.mxu0 0
  %390 = vmatpush1.bf16.msra.mxu0 0
  %391 = vmatprep.subr.bf16.mxu0 0
  %392 = vmatpush1.bf16.msra.mxu0 0
  %393 = vmatprep.subr.bf16.mxu0 0
  %394 = vmatpush1.bf16.msra.mxu0 0
  %395 = vmatprep.subr.bf16.mxu0 0
  %396 = vmatpush1.bf16.msra.mxu0 0
  %397 = vmatprep.subr.bf16.mxu0 0
  %398 = vmatpush1.bf16.msra.mxu0 0
  %399 = vmatprep.subr.bf16.mxu0 0
  %400 = vmatpush1.bf16.msra.mxu0 0
  %401 = vmatprep.subr.bf16.mxu0 0
  %402 = vmatpush1.bf16.msra.mxu0 0
  %403 = vmatprep.subr.bf16.mxu0 0
  %404 = vmatpush1.bf16.msra.mxu0 0
  %405 = vmatprep.subr.bf16.mxu0 0
  %406 = vmatpush1.bf16.msra.mxu0 0
  %407 = vmatprep.mubr.bf16.mxu0 0
  %408 = vmatmul.mubr.bf16.gmra.mrb[0].mxu0 %v280
  %v409 = vpop.f32.mrb[0].mxu0
  %v410 = vadd.f32 %v92, %v409
  %v411 = vpop.f32.mrb[0].mxu0
  %v412 = vpop.f32.mrb[0].mxu0
  %v413 = vadd.f32 %v92, %v412
  %v414 = vpop.f32.mrb[0].mxu0
  %415 = vmatprep.mubr.bf16.mxu0 0
  %416 = vmatmul.mubr.bf16.gmra.mrb[0].mxu0 %v283
  %v417 = vpop.f32.mrb[0].mxu0
  %v418 = vadd.f32 %v92, %v417
  %v419 = vpop.f32.mrb[0].mxu0
  %v420 = vpop.f32.mrb[0].mxu0
  %v421 = vadd.f32 %v92, %v420
  %v422 = vpop.f32.mrb[0].mxu0
  %423 = vmatprep.mubr.bf16.mxu0 0
  %424 = vmatmul.mubr.bf16.gmra.mrb[0].mxu0 %v286
  %v425 = vpop.f32.mrb[0].mxu0
  %v426 = vadd.f32 %v92, %v425
  %v427 = vpop.f32.mrb[0].mxu0
  %v428 = vpop.f32.mrb[0].mxu0
  %v429 = vadd.f32 %v92, %v428
  %v430 = vpop.f32.mrb[0].mxu0
  %431 = vmatprep.mubr.bf16.mxu0 0
  %432 = vmatmul.mubr.bf16.gmra.mrb[0].mxu0 %v289
  %v433 = vpop.f32.mrb[0].mxu0
  %v434 = vadd.f32 %v92, %v433
  %v435 = vpop.f32.mrb[0].mxu0
  %v436 = vpop.f32.mrb[0].mxu0
  %v437 = vadd.f32 %v92, %v436
  %v438 = vpop.f32.mrb[0].mxu0
  %439 = vmatprep.mubr.bf16.mxu0 0
  %440 = vmatmul.mubr.bf16.gmra.mrb[0].mxu0 %v292
  %v441 = vpop.f32.mrb[0].mxu0
  %v442 = vadd.f32 %v92, %v441
  %v443 = vpop.f32.mrb[0].mxu0
  %v444 = vpop.f32.mrb[0].mxu0
  %v445 = vadd.f32 %v92, %v444
  %v446 = vpop.f32.mrb[0].mxu0
  %447 = vmatprep.mubr.bf16.mxu0 0
  %448 = vmatmul.mubr.bf16.gmra.mrb[0].mxu0 %v295
  %v449 = vpop.f32.mrb[0].mxu0
  %v450 = vadd.f32 %v92, %v449
  %v451 = vpop.f32.mrb[0].mxu0
  %v452 = vpop.f32.mrb[0].mxu0
  %v453 = vadd.f32 %v92, %v452
  %v454 = vpop.f32.mrb[0].mxu0
  %455 = vmatprep.mubr.bf16.mxu0 0
  %456 = vmatmul.mubr.bf16.gmra.mrb[0].mxu0 %v298
  %v457 = vpop.f32.mrb[0].mxu0
  %v458 = vadd.f32 %v92, %v457
  %v459 = vpop.f32.mrb[0].mxu0
  %v460 = vpop.f32.mrb[0].mxu0
  %v461 = vadd.f32 %v92, %v460
  %v462 = vpop.f32.mrb[0].mxu0
  %463 = vmatprep.mubr.bf16.mxu0 0
  %464 = vmatmul.mubr.bf16.gmra.mrb[0].mxu0 %v301
  %v465 = vpop.f32.mrb[0].mxu0
  %v466 = vadd.f32 %v92, %v465
  %v467 = vpop.f32.mrb[0].mxu0
  %v468 = vpop.f32.mrb[0].mxu0
  %v469 = vadd.f32 %v92, %v468
  %v470 = vpop.f32.mrb[0].mxu0
  %471 = vmatprep.mubr.bf16.mxu0 0
  %472 = vmatmul.mubr.bf16.gmra.mrb[0].mxu0 %v304
  %v473 = vpop.f32.mrb[0].mxu0
  %v474 = vadd.f32 %v92, %v473
  %v475 = vpop.f32.mrb[0].mxu0
  %v476 = vpop.f32.mrb[0].mxu0
  %v477 = vadd.f32 %v92, %v476
  %v478 = vpop.f32.mrb[0].mxu0
  %479 = vmatprep.mubr.bf16.mxu0 0
  %480 = vmatmul.mubr.bf16.gmra.mrb[0].mxu0 %v307
  %v481 = vpop.f32.mrb[0].mxu0
  %v482 = vadd.f32 %v92, %v481
  %v483 = vpop.f32.mrb[0].mxu0
  %v484 = vpop.f32.mrb[0].mxu0
  %v485 = vadd.f32 %v92, %v484
  %v486 = vpop.f32.mrb[0].mxu0
  %487 = vmatprep.mubr.bf16.mxu0 0
  %488 = vmatmul.mubr.bf16.gmra.mrb[0].mxu0 %v310
  %v489 = vpop.f32.mrb[0].mxu0
  %v490 = vadd.f32 %v92, %v489
  %v491 = vpop.f32.mrb[0].mxu0
  %v492 = vpop.f32.mrb[0].mxu0
  %v493 = vadd.f32 %v92, %v492
  %v494 = vpop.f32.mrb[0].mxu0
  %495 = vmatprep.mubr.bf16.mxu0 0
  %496 = vmatmul.mubr.bf16.gmra.mrb[0].mxu0 %v313
  %v497 = vpop.f32.mrb[0].mxu0
  %v498 = vadd.f32 %v92, %v497
  %v499 = vpop.f32.mrb[0].mxu0
  %v500 = vpop.f32.mrb[0].mxu0
  %v501 = vadd.f32 %v92, %v500
  %v502 = vpop.f32.mrb[0].mxu0
  %503 = vmatprep.mubr.bf16.mxu0 0
  %504 = vmatmul.mubr.bf16.gmra.mrb[0].mxu0 %v316
  %v505 = vpop.f32.mrb[0].mxu0
  %v506 = vadd.f32 %v92, %v505
  %v507 = vpop.f32.mrb[0].mxu0
  %v508 = vpop.f32.mrb[0].mxu0
  %v509 = vadd.f32 %v92, %v508
  %v510 = vpop.f32.mrb[0].mxu0
  %511 = vmatprep.mubr.bf16.mxu0 0
  %512 = vmatmul.mubr.bf16.gmra.mrb[0].mxu0 %v319
  %v513 = vpop.f32.mrb[0].mxu0
  %v514 = vadd.f32 %v92, %v513
  %v515 = vpop.f32.mrb[0].mxu0
  %v516 = vpop.f32.mrb[0].mxu0
  %v517 = vadd.f32 %v92, %v516
  %v518 = vpop.f32.mrb[0].mxu0
  %519 = vmatprep.mubr.bf16.mxu0 0
  %520 = vmatmul.mubr.bf16.gmra.mrb[0].mxu0 %v322
  %v521 = vpop.f32.mrb[0].mxu0
  %v522 = vadd.f32 %v92, %v521
  %v523 = vpop.f32.mrb[0].mxu0
  %v524 = vpop.f32.mrb[0].mxu0
  %v525 = vadd.f32 %v92, %v524
  %v526 = vpop.f32.mrb[0].mxu0
  %527 = vmatprep.mubr.bf16.mxu0 0
  %528 = vmatmul.mubr.bf16.gmra.mrb[0].mxu0 %v325
  %v529 = vpop.f32.mrb[0].mxu0
  %v530 = vadd.f32 %v92, %v529
  %v531 = vpop.f32.mrb[0].mxu0
  %v532 = vpop.f32.mrb[0].mxu0
  %v533 = vadd.f32 %v92, %v532
  %v534 = vpop.f32.mrb[0].mxu0
  %535 = vmatprep.mubr.bf16.mxu0 0
  %536 = vmatmul.mubr.bf16.gmra.mrb[0].mxu0 %v328
  %v537 = vpop.f32.mrb[0].mxu0
  %v538 = vadd.f32 %v92, %v537
  %v539 = vpop.f32.mrb[0].mxu0
  %v540 = vpop.f32.mrb[0].mxu0
  %v541 = vadd.f32 %v92, %v540
  %v542 = vpop.f32.mrb[0].mxu0
  %543 = vmatprep.mubr.bf16.mxu0 0
  %544 = vmatmul.mubr.bf16.gmra.mrb[0].mxu0 %v331
  %v545 = vpop.f32.mrb[0].mxu0
  %v546 = vadd.f32 %v92, %v545
  %v547 = vpop.f32.mrb[0].mxu0
  %v548 = vpop.f32.mrb[0].mxu0
  %v549 = vadd.f32 %v92, %v548
  %v550 = vpop.f32.mrb[0].mxu0
  %551 = vmatprep.mubr.bf16.mxu0 0
  %552 = vmatmul.mubr.bf16.gmra.mrb[0].mxu0 %v334
  %v553 = vpop.f32.mrb[0].mxu0
  %v554 = vadd.f32 %v92, %v553
  %v555 = vpop.f32.mrb[0].mxu0
  %v556 = vpop.f32.mrb[0].mxu0
  %v557 = vadd.f32 %v92, %v556
  %v558 = vpop.f32.mrb[0].mxu0
  %559 = vmatprep.mubr.bf16.mxu0 0
  %560 = vmatmul.mubr.bf16.gmra.mrb[0].mxu0 %v337
  %v561 = vpop.f32.mrb[0].mxu0
  %v562 = vadd.f32 %v92, %v561
  %v563 = vpop.f32.mrb[0].mxu0
  %v564 = vpop.f32.mrb[0].mxu0
  %v565 = vadd.f32 %v92, %v564
  %v566 = vpop.f32.mrb[0].mxu0
  %567 = vmatprep.mubr.bf16.mxu0 0
  %568 = vmatmul.mubr.bf16.gmra.mrb[0].mxu0 %v340
  %v569 = vpop.f32.mrb[0].mxu0
  %v570 = vadd.f32 %v92, %v569
  %v571 = vpop.f32.mrb[0].mxu0
  %v572 = vpop.f32.mrb[0].mxu0
  %v573 = vadd.f32 %v92, %v572
  %v574 = vpop.f32.mrb[0].mxu0
  %575 = vmatprep.mubr.bf16.mxu0 0
  %576 = vmatmul.mubr.bf16.gmra.mrb[0].mxu0 %v343
  %v577 = vpop.f32.mrb[0].mxu0
  %v578 = vadd.f32 %v92, %v577
  %v579 = vpop.f32.mrb[0].mxu0
  %v580 = vpop.f32.mrb[0].mxu0
  %v581 = vadd.f32 %v92, %v580
  %v582 = vpop.f32.mrb[0].mxu0
  %583 = vmatprep.mubr.bf16.mxu0 0
  %584 = vmatmul.mubr.bf16.gmra.mrb[0].mxu0 %v346
  %v585 = vpop.f32.mrb[0].mxu0
  %v586 = vadd.f32 %v92, %v585
  %v587 = vpop.f32.mrb[0].mxu0
  %v588 = vpop.f32.mrb[0].mxu0
  %v589 = vadd.f32 %v92, %v588
  %v590 = vpop.f32.mrb[0].mxu0
  %591 = vmatprep.mubr.bf16.mxu0 0
  %592 = vmatmul.mubr.bf16.gmra.mrb[0].mxu0 %v349
  %v593 = vpop.f32.mrb[0].mxu0
  %v594 = vadd.f32 %v92, %v593
  %v595 = vpop.f32.mrb[0].mxu0
  %v596 = vpop.f32.mrb[0].mxu0
  %v597 = vadd.f32 %v92, %v596
  %v598 = vpop.f32.mrb[0].mxu0
  %599 = vmatprep.mubr.bf16.mxu0 0
  %600 = vmatmul.mubr.bf16.gmra.mrb[0].mxu0 %v352
  %v601 = vpop.f32.mrb[0].mxu0
  %v602 = vadd.f32 %v92, %v601
  %v603 = vpop.f32.mrb[0].mxu0
  %v604 = vpop.f32.mrb[0].mxu0
  %v605 = vadd.f32 %v92, %v604
  %v606 = vpop.f32.mrb[0].mxu0
  %607 = vmatprep.mubr.bf16.mxu0 0
  %608 = vmatmul.mubr.bf16.gmra.mrb[0].mxu0 %v355
  %v609 = vpop.f32.mrb[0].mxu0
  %v610 = vadd.f32 %v92, %v609
  %v611 = vpop.f32.mrb[0].mxu0
  %v612 = vpop.f32.mrb[0].mxu0
  %v613 = vadd.f32 %v92, %v612
  %v614 = vpop.f32.mrb[0].mxu0
  %615 = vmatprep.mubr.bf16.mxu0 0
  %616 = vmatmul.mubr.bf16.gmra.mrb[0].mxu0 %v358
  %v617 = vpop.f32.mrb[0].mxu0
  %v618 = vadd.f32 %v92, %v617
  %v619 = vpop.f32.mrb[0].mxu0
  %v620 = vpop.f32.mrb[0].mxu0
  %v621 = vadd.f32 %v92, %v620
  %v622 = vpop.f32.mrb[0].mxu0
  %623 = vmatprep.mubr.bf16.mxu0 0
  %624 = vmatmul.mubr.bf16.gmra.mrb[0].mxu0 %v361
  %v625 = vpop.f32.mrb[0].mxu0
  %v626 = vadd.f32 %v92, %v625
  %v627 = vpop.f32.mrb[0].mxu0
  %v628 = vpop.f32.mrb[0].mxu0
  %v629 = vadd.f32 %v92, %v628
  %v630 = vpop.f32.mrb[0].mxu0
  %631 = vmatprep.mubr.bf16.mxu0 0
  %632 = vmatmul.mubr.bf16.gmra.mrb[0].mxu0 %v364
  %v633 = vpop.f32.mrb[0].mxu0
  %v634 = vadd.f32 %v92, %v633
  %v635 = vpop.f32.mrb[0].mxu0
  %v636 = vpop.f32.mrb[0].mxu0
  %v637 = vadd.f32 %v92, %v636
  %v638 = vpop.f32.mrb[0].mxu0
  %639 = vmatprep.mubr.bf16.mxu0 0
  %640 = vmatmul.mubr.bf16.gmra.mrb[0].mxu0 %v367
  %v641 = vpop.f32.mrb[0].mxu0
  %v642 = vadd.f32 %v92, %v641
  %v643 = vpop.f32.mrb[0].mxu0
  %v644 = vpop.f32.mrb[0].mxu0
  %v645 = vadd.f32 %v92, %v644
  %v646 = vpop.f32.mrb[0].mxu0
  %647 = vmatprep.mubr.bf16.mxu0 0
  %648 = vmatmul.mubr.bf16.gmra.mrb[0].mxu0 %v370
  %v649 = vpop.f32.mrb[0].mxu0
  %v650 = vadd.f32 %v92, %v649
  %v651 = vpop.f32.mrb[0].mxu0
  %v652 = vpop.f32.mrb[0].mxu0
  %v653 = vadd.f32 %v92, %v652
  %v654 = vpop.f32.mrb[0].mxu0
  %655 = vmatprep.mubr.bf16.mxu0 0
  %656 = vmatmul.mubr.bf16.gmra.mrb[0].mxu0 %v373
  %v657 = vpop.f32.mrb[0].mxu0
  %v658 = vadd.f32 %v92, %v657
  %v659 = vpop.f32.mrb[0].mxu0
  %v660 = vpop.f32.mrb[0].mxu0
  %v661 = vadd.f32 %v92, %v660
  %v662 = vpop.f32.mrb[0].mxu0
  %663 = vdwg.mxu0
  %vm664 = vcmp.gt.f32.partialorder %v410, 0.0
  %vm665 = vcmp.gt.f32.partialorder %v413, 0.0
  %vm666 = vcmp.gt.f32.partialorder %v418, 0.0
  %vm667 = vcmp.gt.f32.partialorder %v421, 0.0
  %vm668 = vcmp.gt.f32.partialorder %v426, 0.0
  %vm669 = vcmp.gt.f32.partialorder %v429, 0.0
  %vm670 = vcmp.gt.f32.partialorder %v434, 0.0
  %vm671 = vcmp.gt.f32.partialorder %v437, 0.0
  %vm672 = vcmp.gt.f32.partialorder %v442, 0.0
  %vm673 = vcmp.gt.f32.partialorder %v445, 0.0
  %vm674 = vcmp.gt.f32.partialorder %v450, 0.0
  %vm675 = vcmp.gt.f32.partialorder %v453, 0.0
  %vm676 = vcmp.gt.f32.partialorder %v458, 0.0
  %vm677 = vcmp.gt.f32.partialorder %v461, 0.0
  %vm678 = vcmp.gt.f32.partialorder %v466, 0.0
  %vm679 = vcmp.gt.f32.partialorder %v469, 0.0
  %vm680 = vcmp.gt.f32.partialorder %v474, 0.0
  %vm681 = vcmp.gt.f32.partialorder %v477, 0.0
  %vm682 = vcmp.gt.f32.partialorder %v482, 0.0
  %vm683 = vcmp.gt.f32.partialorder %v485, 0.0
  %vm684 = vcmp.gt.f32.partialorder %v490, 0.0
  %vm685 = vcmp.gt.f32.partialorder %v493, 0.0
  %vm686 = vcmp.gt.f32.partialorder %v498, 0.0
  %vm687 = vcmp.gt.f32.partialorder %v501, 0.0
  %vm688 = vcmp.gt.f32.partialorder %v506, 0.0
  %vm689 = vcmp.gt.f32.partialorder %v509, 0.0
  %vm690 = vcmp.gt.f32.partialorder %v514, 0.0
  %vm691 = vcmp.gt.f32.partialorder %v517, 0.0
  %vm692 = vcmp.gt.f32.partialorder %v522, 0.0
  %vm693 = vcmp.gt.f32.partialorder %v525, 0.0
  %vm694 = vcmp.gt.f32.partialorder %v530, 0.0
  %vm695 = vcmp.gt.f32.partialorder %v533, 0.0
  %vm696 = vcmp.gt.f32.partialorder %v538, 0.0
  %vm697 = vcmp.gt.f32.partialorder %v541, 0.0
  %vm698 = vcmp.gt.f32.partialorder %v546, 0.0
  %vm699 = vcmp.gt.f32.partialorder %v549, 0.0
  %vm700 = vcmp.gt.f32.partialorder %v554, 0.0
  %vm701 = vcmp.gt.f32.partialorder %v557, 0.0
  %vm702 = vcmp.gt.f32.partialorder %v562, 0.0
  %vm703 = vcmp.gt.f32.partialorder %v565, 0.0
  %vm704 = vcmp.gt.f32.partialorder %v570, 0.0
  %vm705 = vcmp.gt.f32.partialorder %v573, 0.0
  %vm706 = vcmp.gt.f32.partialorder %v578, 0.0
  %vm707 = vcmp.gt.f32.partialorder %v581, 0.0
  %vm708 = vcmp.gt.f32.partialorder %v586, 0.0
  %vm709 = vcmp.gt.f32.partialorder %v589, 0.0
  %vm710 = vcmp.gt.f32.partialorder %v594, 0.0
  %vm711 = vcmp.gt.f32.partialorder %v597, 0.0
  %vm712 = vcmp.gt.f32.partialorder %v602, 0.0
  %vm713 = vcmp.gt.f32.partialorder %v605, 0.0
  %vm714 = vcmp.gt.f32.partialorder %v610, 0.0
  %vm715 = vcmp.gt.f32.partialorder %v613, 0.0
  %vm716 = vcmp.gt.f32.partialorder %v618, 0.0
  %vm717 = vcmp.gt.f32.partialorder %v621, 0.0
  %vm718 = vcmp.gt.f32.partialorder %v626, 0.0
  %vm719 = vcmp.gt.f32.partialorder %v629, 0.0
  %vm720 = vcmp.gt.f32.partialorder %v634, 0.0
  %vm721 = vcmp.gt.f32.partialorder %v637, 0.0
  %vm722 = vcmp.gt.f32.partialorder %v642, 0.0
  %vm723 = vcmp.gt.f32.partialorder %v645, 0.0
  %vm724 = vcmp.gt.f32.partialorder %v650, 0.0
  %vm725 = vcmp.gt.f32.partialorder %v653, 0.0
  %vm726 = vcmp.gt.f32.partialorder %v658, 0.0
  %vm727 = vcmp.gt.f32.partialorder %v661, 0.0
  %v728 = vmul.f32 %v410, 0.2
  %v729 = vmul.f32 %v413, 0.2
  %v730 = vmul.f32 %v418, 0.2
  %v731 = vmul.f32 %v421, 0.2
  %v732 = vmul.f32 %v426, 0.2
  %v733 = vmul.f32 %v429, 0.2
  %v734 = vmul.f32 %v434, 0.2
  %v735 = vmul.f32 %v437, 0.2
  %v736 = vmul.f32 %v442, 0.2
  %v737 = vmul.f32 %v445, 0.2
  %v738 = vmul.f32 %v450, 0.2
  %v739 = vmul.f32 %v453, 0.2
  %v740 = vmul.f32 %v458, 0.2
  %v741 = vmul.f32 %v461, 0.2
  %v742 = vmul.f32 %v466, 0.2
  %v743 = vmul.f32 %v469, 0.2
  %v744 = vmul.f32 %v474, 0.2
  %v745 = vmul.f32 %v477, 0.2
  %v746 = vmul.f32 %v482, 0.2
  %v747 = vmul.f32 %v485, 0.2
  %v748 = vmul.f32 %v490, 0.2
  %v749 = vmul.f32 %v493, 0.2
  %v750 = vmul.f32 %v498, 0.2
  %v751 = vmul.f32 %v501, 0.2
  %v752 = vmul.f32 %v506, 0.2
  %v753 = vmul.f32 %v509, 0.2
  %v754 = vmul.f32 %v514, 0.2
  %v755 = vmul.f32 %v517, 0.2
  %v756 = vmul.f32 %v522, 0.2
  %v757 = vmul.f32 %v525, 0.2
  %v758 = vmul.f32 %v530, 0.2
  %v759 = vmul.f32 %v533, 0.2
  %v760 = vmul.f32 %v538, 0.2
  %v761 = vmul.f32 %v541, 0.2
  %v762 = vmul.f32 %v546, 0.2
  %v763 = vmul.f32 %v549, 0.2
  %v764 = vmul.f32 %v554, 0.2
  %v765 = vmul.f32 %v557, 0.2
  %v766 = vmul.f32 %v562, 0.2
  %v767 = vmul.f32 %v565, 0.2
  %v768 = vmul.f32 %v570, 0.2
  %v769 = vmul.f32 %v573, 0.2
  %v770 = vmul.f32 %v578, 0.2
  %v771 = vmul.f32 %v581, 0.2
  %v772 = vmul.f32 %v586, 0.2
  %v773 = vmul.f32 %v589, 0.2
  %v774 = vmul.f32 %v594, 0.2
  %v775 = vmul.f32 %v597, 0.2
  %v776 = vmul.f32 %v602, 0.2
  %v777 = vmul.f32 %v605, 0.2
  %v778 = vmul.f32 %v610, 0.2
  %v779 = vmul.f32 %v613, 0.2
  %v780 = vmul.f32 %v618, 0.2
  %v781 = vmul.f32 %v621, 0.2
  %v782 = vmul.f32 %v626, 0.2
  %v783 = vmul.f32 %v629, 0.2
  %v784 = vmul.f32 %v634, 0.2
  %v785 = vmul.f32 %v637, 0.2
  %v786 = vmul.f32 %v642, 0.2
  %v787 = vmul.f32 %v645, 0.2
  %v788 = vmul.f32 %v650, 0.2
  %v789 = vmul.f32 %v653, 0.2
  %v790 = vmul.f32 %v658, 0.2
  %v791 = vmul.f32 %v661, 0.2
  %v792 = vsel %vm664, %v410, %v728
  %v793 = vsel %vm665, %v413, %v729
  %v794 = vsel %vm666, %v418, %v730
  %v795 = vsel %vm667, %v421, %v731
  %v796 = vsel %vm668, %v426, %v732
  %v797 = vsel %vm669, %v429, %v733
  %v798 = vsel %vm670, %v434, %v734
  %v799 = vsel %vm671, %v437, %v735
  %v800 = vsel %vm672, %v442, %v736
  %v801 = vsel %vm673, %v445, %v737
  %v802 = vsel %vm674, %v450, %v738
  %v803 = vsel %vm675, %v453, %v739
  %v804 = vsel %vm676, %v458, %v740
  %v805 = vsel %vm677, %v461, %v741
  %v806 = vsel %vm678, %v466, %v742
  %v807 = vsel %vm679, %v469, %v743
  %v808 = vsel %vm680, %v474, %v744
  %v809 = vsel %vm681, %v477, %v745
  %v810 = vsel %vm682, %v482, %v746
  %v811 = vsel %vm683, %v485, %v747
  %v812 = vsel %vm684, %v490, %v748
  %v813 = vsel %vm685, %v493, %v749
  %v814 = vsel %vm686, %v498, %v750
  %v815 = vsel %vm687, %v501, %v751
  %v816 = vsel %vm688, %v506, %v752
  %v817 = vsel %vm689, %v509, %v753
  %v818 = vsel %vm690, %v514, %v754
  %v819 = vsel %vm691, %v517, %v755
  %v820 = vsel %vm692, %v522, %v756
  %v821 = vsel %vm693, %v525, %v757
  %v822 = vsel %vm694, %v530, %v758
  %v823 = vsel %vm695, %v533, %v759
  %v824 = vsel %vm696, %v538, %v760
  %v825 = vsel %vm697, %v541, %v761
  %v826 = vsel %vm698, %v546, %v762
  %v827 = vsel %vm699, %v549, %v763
  %v828 = vsel %vm700, %v554, %v764
  %v829 = vsel %vm701, %v557, %v765
  %v830 = vsel %vm702, %v562, %v766
  %v831 = vsel %vm703, %v565, %v767
  %v832 = vsel %vm704, %v570, %v768
  %v833 = vsel %vm705, %v573, %v769
  %v834 = vsel %vm706, %v578, %v770
  %v835 = vsel %vm707, %v581, %v771
  %v836 = vsel %vm708, %v586, %v772
  %v837 = vsel %vm709, %v589, %v773
  %v838 = vsel %vm710, %v594, %v774
  %v839 = vsel %vm711, %v597, %v775
  %v840 = vsel %vm712, %v602, %v776
  %v841 = vsel %vm713, %v605, %v777
  %v842 = vsel %vm714, %v610, %v778
  %v843 = vsel %vm715, %v613, %v779
  %v844 = vsel %vm716, %v618, %v780
  %v845 = vsel %vm717, %v621, %v781
  %v846 = vsel %vm718, %v626, %v782
  %v847 = vsel %vm719, %v629, %v783
  %v848 = vsel %vm720, %v634, %v784
  %v849 = vsel %vm721, %v637, %v785
  %v850 = vsel %vm722, %v642, %v786
  %v851 = vsel %vm723, %v645, %v787
  %v852 = vsel %vm724, %v650, %v788
  %v853 = vsel %vm725, %v653, %v789
  %v854 = vsel %vm726, %v658, %v790
  %v855 = vsel %vm727, %v661, %v791
  %v856 = vpack.c.bf16 %v793, %v792
  %v857 = vpack.c.bf16 %v795, %v794
  %v858 = vpack.c.bf16 %v797, %v796
  %v859 = vpack.c.bf16 %v799, %v798
  %v860 = vpack.c.bf16 %v801, %v800
  %v861 = vpack.c.bf16 %v803, %v802
  %v862 = vpack.c.bf16 %v805, %v804
  %v863 = vpack.c.bf16 %v807, %v806
  %v864 = vpack.c.bf16 %v809, %v808
  %v865 = vpack.c.bf16 %v811, %v810
  %v866 = vpack.c.bf16 %v813, %v812
  %v867 = vpack.c.bf16 %v815, %v814
  %v868 = vpack.c.bf16 %v817, %v816
  %v869 = vpack.c.bf16 %v819, %v818
  %v870 = vpack.c.bf16 %v821, %v820
  %v871 = vpack.c.bf16 %v823, %v822
  %v872 = vpack.c.bf16 %v825, %v824
  %v873 = vpack.c.bf16 %v827, %v826
  %v874 = vpack.c.bf16 %v829, %v828
  %v875 = vpack.c.bf16 %v831, %v830
  %v876 = vpack.c.bf16 %v833, %v832
  %v877 = vpack.c.bf16 %v835, %v834
  %v878 = vpack.c.bf16 %v837, %v836
  %v879 = vpack.c.bf16 %v839, %v838
  %v880 = vpack.c.bf16 %v841, %v840
  %v881 = vpack.c.bf16 %v843, %v842
  %v882 = vpack.c.bf16 %v845, %v844
  %v883 = vpack.c.bf16 %v847, %v846
  %v884 = vpack.c.bf16 %v849, %v848
  %v885 = vpack.c.bf16 %v851, %v850
  %v886 = vpack.c.bf16 %v853, %v852
  %v887 = vpack.c.bf16 %v855, %v854
  %v920 = vunpack.c.l.b16 %v856
  %v921 = vunpack.c.h.b16 %v856
  %v922 = vunpack.c.l.b16 %v857
  %v923 = vunpack.c.h.b16 %v857
  %v924 = vunpack.c.l.b16 %v858
  %v925 = vunpack.c.h.b16 %v858
  %v926 = vunpack.c.l.b16 %v859
  %v927 = vunpack.c.h.b16 %v859
  %v928 = vunpack.c.l.b16 %v860
  %v929 = vunpack.c.h.b16 %v860
  %v930 = vunpack.c.l.b16 %v861
  %v931 = vunpack.c.h.b16 %v861
  %v932 = vunpack.c.l.b16 %v862
  %v933 = vunpack.c.h.b16 %v862
  %v934 = vunpack.c.l.b16 %v863
  %v935 = vunpack.c.h.b16 %v863
  %v936 = vunpack.c.l.b16 %v864
  %v937 = vunpack.c.h.b16 %v864
  %v938 = vunpack.c.l.b16 %v865
  %v939 = vunpack.c.h.b16 %v865
  %v940 = vunpack.c.l.b16 %v866
  %v941 = vunpack.c.h.b16 %v866
  %v942 = vunpack.c.l.b16 %v867
  %v943 = vunpack.c.h.b16 %v867
  %v944 = vunpack.c.l.b16 %v868
  %v945 = vunpack.c.h.b16 %v868
  %v946 = vunpack.c.l.b16 %v869
  %v947 = vunpack.c.h.b16 %v869
  %v948 = vunpack.c.l.b16 %v870
  %v949 = vunpack.c.h.b16 %v870
  %v950 = vunpack.c.l.b16 %v871
  %v951 = vunpack.c.h.b16 %v871
  %v952 = vunpack.c.l.b16 %v872
  %v953 = vunpack.c.h.b16 %v872
  %v954 = vunpack.c.l.b16 %v873
  %v955 = vunpack.c.h.b16 %v873
  %v956 = vunpack.c.l.b16 %v874
  %v957 = vunpack.c.h.b16 %v874
  %v958 = vunpack.c.l.b16 %v875
  %v959 = vunpack.c.h.b16 %v875
  %v960 = vunpack.c.l.b16 %v876
  %v961 = vunpack.c.h.b16 %v876
  %v962 = vunpack.c.l.b16 %v877
  %v963 = vunpack.c.h.b16 %v877
  %v964 = vunpack.c.l.b16 %v878
  %v965 = vunpack.c.h.b16 %v878
  %v966 = vunpack.c.l.b16 %v879
  %v967 = vunpack.c.h.b16 %v879
  %v968 = vunpack.c.l.b16 %v880
  %v969 = vunpack.c.h.b16 %v880
  %v970 = vunpack.c.l.b16 %v881
  %v971 = vunpack.c.h.b16 %v881
  %v972 = vunpack.c.l.b16 %v882
  %v973 = vunpack.c.h.b16 %v882
  %v974 = vunpack.c.l.b16 %v883
  %v975 = vunpack.c.h.b16 %v883
  %v976 = vunpack.c.l.b16 %v884
  %v977 = vunpack.c.h.b16 %v884
  %v978 = vunpack.c.l.b16 %v885
  %v979 = vunpack.c.h.b16 %v885
  %v980 = vunpack.c.l.b16 %v886
  %v981 = vunpack.c.h.b16 %v886
  %v982 = vunpack.c.l.b16 %v887
  %v983 = vunpack.c.h.b16 %v887
  %v984 = vpack.c.b16 %v920, %v920
  %v985 = vpack.c.b16 %v921, %v921
  %v986 = vpack.c.b16 %v922, %v922
  %v987 = vpack.c.b16 %v923, %v923
  %v988 = vpack.c.b16 %v924, %v924
  %v989 = vpack.c.b16 %v925, %v925
  %v990 = vpack.c.b16 %v926, %v926
  %v991 = vpack.c.b16 %v927, %v927
  %v992 = vpack.c.b16 %v928, %v928
  %v993 = vpack.c.b16 %v929, %v929
  %v994 = vpack.c.b16 %v930, %v930
  %v995 = vpack.c.b16 %v931, %v931
  %v996 = vpack.c.b16 %v932, %v932
  %v997 = vpack.c.b16 %v933, %v933
  %v998 = vpack.c.b16 %v934, %v934
  %v999 = vpack.c.b16 %v935, %v935
  %v1000 = vpack.c.b16 %v936, %v936
  %v1001 = vpack.c.b16 %v937, %v937
  %v1002 = vpack.c.b16 %v938, %v938
  %v1003 = vpack.c.b16 %v939, %v939
  %v1004 = vpack.c.b16 %v940, %v940
  %v1005 = vpack.c.b16 %v941, %v941
  %v1006 = vpack.c.b16 %v942, %v942
  %v1007 = vpack.c.b16 %v943, %v943
  %v1008 = vpack.c.b16 %v944, %v944
  %v1009 = vpack.c.b16 %v945, %v945
  %v1010 = vpack.c.b16 %v946, %v946
  %v1011 = vpack.c.b16 %v947, %v947
  %v1012 = vpack.c.b16 %v948, %v948
  %v1013 = vpack.c.b16 %v949, %v949
  %v1014 = vpack.c.b16 %v950, %v950
  %v1015 = vpack.c.b16 %v951, %v951
  %v1016 = vpack.c.b16 %v952, %v952
  %v1017 = vpack.c.b16 %v953, %v953
  %v1018 = vpack.c.b16 %v954, %v954
  %v1019 = vpack.c.b16 %v955, %v955
  %v1020 = vpack.c.b16 %v956, %v956
  %v1021 = vpack.c.b16 %v957, %v957
  %v1022 = vpack.c.b16 %v958, %v958
  %v1023 = vpack.c.b16 %v959, %v959
  %v1024 = vpack.c.b16 %v960, %v960
  %v1025 = vpack.c.b16 %v961, %v961
  %v1026 = vpack.c.b16 %v962, %v962
  %v1027 = vpack.c.b16 %v963, %v963
  %v1028 = vpack.c.b16 %v964, %v964
  %v1029 = vpack.c.b16 %v965, %v965
  %v1030 = vpack.c.b16 %v966, %v966
  %v1031 = vpack.c.b16 %v967, %v967
  %v1032 = vpack.c.b16 %v968, %v968
  %v1033 = vpack.c.b16 %v969, %v969
  %v1034 = vpack.c.b16 %v970, %v970
  %v1035 = vpack.c.b16 %v971, %v971
  %v1036 = vpack.c.b16 %v972, %v972
  %v1037 = vpack.c.b16 %v973, %v973
  %v1038 = vpack.c.b16 %v974, %v974
  %v1039 = vpack.c.b16 %v975, %v975
  %v1040 = vpack.c.b16 %v976, %v976
  %v1041 = vpack.c.b16 %v977, %v977
  %v1042 = vpack.c.b16 %v978, %v978
  %v1043 = vpack.c.b16 %v979, %v979
  %v1044 = vpack.c.b16 %v980, %v980
  %v1045 = vpack.c.b16 %v981, %v981
  %v1046 = vpack.c.b16 %v982, %v982
  %v1047 = vpack.c.b16 %v983, %v983
  %1112 = vst [vmem:[%s3] sm:$0xf] %v984
  %1113 = vst [vmem:[%s3 + $0x4] sm:$0xf] %v985
  %1114 = vst [vmem:[%s3 + $0x8] sm:$0xf] %v986
  %1115 = vst [vmem:[%s3 + $0xc] sm:$0xf] %v987
  %1116 = vst [vmem:[%s3 + $0x10] sm:$0xf] %v988
  %1117 = vst [vmem:[%s3 + $0x14] sm:$0xf] %v989
  %1118 = vst [vmem:[%s3 + $0x18] sm:$0xf] %v990
  %1119 = vst [vmem:[%s3 + $0x1c] sm:$0xf] %v991
  %1120 = vst [vmem:[%s3 + $0x20] sm:$0xf] %v992
  %1121 = vst [vmem:[%s3 + $0x24] sm:$0xf] %v993
  %1122 = vst [vmem:[%s3 + $0x28] sm:$0xf] %v994
  %1123 = vst [vmem:[%s3 + $0x2c] sm:$0xf] %v995
  %1124 = vst [vmem:[%s3 + $0x30] sm:$0xf] %v996
  %1125 = vst [vmem:[%s3 + $0x34] sm:$0xf] %v997
  %1126 = vst [vmem:[%s3 + $0x38] sm:$0xf] %v998
  %1127 = vst [vmem:[%s3 + $0x3c] sm:$0xf] %v999
  %1128 = vst [vmem:[%s3 + $0x40] sm:$0xf] %v1000
  %1129 = vst [vmem:[%s3 + $0x44] sm:$0xf] %v1001
  %1130 = vst [vmem:[%s3 + $0x48] sm:$0xf] %v1002
  %1131 = vst [vmem:[%s3 + $0x4c] sm:$0xf] %v1003
  %1132 = vst [vmem:[%s3 + $0x50] sm:$0xf] %v1004
  %1133 = vst [vmem:[%s3 + $0x54] sm:$0xf] %v1005
  %1134 = vst [vmem:[%s3 + $0x58] sm:$0xf] %v1006
  %1135 = vst [vmem:[%s3 + $0x5c] sm:$0xf] %v1007
  %1136 = vst [vmem:[%s3 + $0x60] sm:$0xf] %v1008
  %1137 = vst [vmem:[%s3 + $0x64] sm:$0xf] %v1009
  %1138 = vst [vmem:[%s3 + $0x68] sm:$0xf] %v1010
  %1139 = vst [vmem:[%s3 + $0x6c] sm:$0xf] %v1011
  %1140 = vst [vmem:[%s3 + $0x70] sm:$0xf] %v1012
  %1141 = vst [vmem:[%s3 + $0x74] sm:$0xf] %v1013
  %1142 = vst [vmem:[%s3 + $0x78] sm:$0xf] %v1014
  %1143 = vst [vmem:[%s3 + $0x7c] sm:$0xf] %v1015
  %1144 = vst [vmem:[%s3 + $0x80] sm:$0xf] %v1016
  %1145 = vst [vmem:[%s3 + $0x84] sm:$0xf] %v1017
  %1146 = vst [vmem:[%s3 + $0x88] sm:$0xf] %v1018
  %1147 = vst [vmem:[%s3 + $0x8c] sm:$0xf] %v1019
  %1148 = vst [vmem:[%s3 + $0x90] sm:$0xf] %v1020
  %1149 = vst [vmem:[%s3 + $0x94] sm:$0xf] %v1021
  %1150 = vst [vmem:[%s3 + $0x98] sm:$0xf] %v1022
  %1151 = vst [vmem:[%s3 + $0x9c] sm:$0xf] %v1023
  %1152 = vst [vmem:[%s3 + $0xa0] sm:$0xf] %v1024
  %1153 = vst [vmem:[%s3 + $0xa4] sm:$0xf] %v1025
  %1154 = vst [vmem:[%s3 + $0xa8] sm:$0xf] %v1026
  %1155 = vst [vmem:[%s3 + $0xac] sm:$0xf] %v1027
  %1156 = vst [vmem:[%s3 + $0xb0] sm:$0xf] %v1028
  %1157 = vst [vmem:[%s3 + $0xb4] sm:$0xf] %v1029
  %1158 = vst [vmem:[%s3 + $0xb8] sm:$0xf] %v1030
  %1159 = vst [vmem:[%s3 + $0xbc] sm:$0xf] %v1031
  %1160 = vst [vmem:[%s3 + $0xc0] sm:$0xf] %v1032
  %1161 = vst [vmem:[%s3 + $0xc4] sm:$0xf] %v1033
  %1162 = vst [vmem:[%s3 + $0xc8] sm:$0xf] %v1034
  %1163 = vst [vmem:[%s3 + $0xcc] sm:$0xf] %v1035
  %1164 = vst [vmem:[%s3 + $0xd0] sm:$0xf] %v1036
  %1165 = vst [vmem:[%s3 + $0xd4] sm:$0xf] %v1037
  %1166 = vst [vmem:[%s3 + $0xd8] sm:$0xf] %v1038
  %1167 = vst [vmem:[%s3 + $0xdc] sm:$0xf] %v1039
  %1168 = vst [vmem:[%s3 + $0xe0] sm:$0xf] %v1040
  %1169 = vst [vmem:[%s3 + $0xe4] sm:$0xf] %v1041
  %1170 = vst [vmem:[%s3 + $0xe8] sm:$0xf] %v1042
  %1171 = vst [vmem:[%s3 + $0xec] sm:$0xf] %v1043
  %1172 = vst [vmem:[%s3 + $0xf0] sm:$0xf] %v1044
  %1173 = vst [vmem:[%s3 + $0xf4] sm:$0xf] %v1045
  %1174 = vst [vmem:[%s3 + $0xf8] sm:$0xf] %v1046
  %1175 = vst [vmem:[%s3 + $0xfc] sm:$0xf] %v1047
  // Predicated region
  $region14: #{discriminator_forward.5} parent=0 // pred_check
    _
  $region15: #{discriminator_forward.5} parent=0 // pred_check_branch
    %1177 = sbr.rel (0) target = $region17
  $region16: #{discriminator_forward.5} parent=0 // pred_region
    _
  $region17: #{discriminator_forward.5} parent=0 // pred_fallthru
    _
  // Predicated region
  $region18: #{discriminator_forward.5} parent=0 // pred_check
    _
  $region19: #{discriminator_forward.5} parent=0 // pred_check_branch
    %1179 = sbr.rel (0) target = $region21
  $region20: #{discriminator_forward.5} parent=0 // pred_region
    _
  $region21: #{discriminator_forward.5} parent=0 // pred_fallthru
    _

// kernel: discriminator_forward.6
$region0: #{discriminator_forward.6}
  #allocation0 [shape = 'u32[]', space=smem, size = 0x4, offset = 0x4, fixed_abs, tag = 'smem constant byte address 0x4 - core index']
  #allocation1 [shape = 'u32[144,128]{1,0:T(1,128)}', space=vmem, size = 0x12000, scoped, tag = 'internal scratch']
  %s0 = inlined_call_operand.vmem [shape: bf16[128,1024], index: 0, kind: input, shape index: {}]
  %s1 = inlined_call_operand.vmem [shape: bf16[1024,128], index: 1, kind: input, shape index: {}]
  %s2 = inlined_call_operand.vmem [shape: f32[128,128], index: 2, kind: output, shape index: {0}]
  %s3 = inlined_call_operand.vmem [shape: f32[1,8,128], index: 3, kind: output, shape index: {1}]
  %s4 = inlined_call_operand.vmem [shape: f32[1,8,128], index: 4, kind: output, shape index: {2}]
  %5 = xla_tuple %s2, %s3, %s4
  %s6 = sld [smem:[#allocation0]]
  $region34: #{discriminator_forward.6} parent=0
    _
  %s8 = ssub.s32 1, %s6
  %s9 = scalar_select 0, %s8, %s6
  // Predicated region
  $region2: #{discriminator_forward.6} parent=0 // pred_check
    _
  $region3: #{discriminator_forward.6} parent=0 // pred_check_branch
    %11 = sbr.rel (0) target = $region5
  $region4: #{discriminator_forward.6} parent=0 // pred_region
    _
  $region5: #{discriminator_forward.6} parent=0 // pred_fallthru
    _
  // Predicated region
  $region6: #{discriminator_forward.6} parent=0 // pred_check
    _
  $region7: #{discriminator_forward.6} parent=0 // pred_check_branch
    %13 = sbr.rel (0) target = $region9
  $region8: #{discriminator_forward.6} parent=0 // pred_region
    _
  $region9: #{discriminator_forward.6} parent=0 // pred_fallthru
    _
  %v15 = vld [vmem:[%s0] sm:$0xff]
  %v16 = vld [vmem:[%s0 + $0x8] sm:$0xff]
  %v17 = vld [vmem:[%s0 + $0x10] sm:$0xff]
  %v18 = vld [vmem:[%s0 + $0x18] sm:$0xff]
  %v19 = vld [vmem:[%s0 + $0x20] sm:$0xff]
  %v20 = vld [vmem:[%s0 + $0x28] sm:$0xff]
  %v21 = vld [vmem:[%s0 + $0x30] sm:$0xff]
  %v22 = vld [vmem:[%s0 + $0x38] sm:$0xff]
  %v23 = vld [vmem:[%s0 + $0x40] sm:$0xff]
  %v24 = vld [vmem:[%s0 + $0x48] sm:$0xff]
  %v25 = vld [vmem:[%s0 + $0x50] sm:$0xff]
  %v26 = vld [vmem:[%s0 + $0x58] sm:$0xff]
  %v27 = vld [vmem:[%s0 + $0x60] sm:$0xff]
  %v28 = vld [vmem:[%s0 + $0x68] sm:$0xff]
  %v29 = vld [vmem:[%s0 + $0x70] sm:$0xff]
  %v30 = vld [vmem:[%s0 + $0x78] sm:$0xff]
  %v31 = vld [vmem:[%s0 + $0x80] sm:$0xff]
  %v32 = vld [vmem:[%s0 + $0x88] sm:$0xff]
  %v33 = vld [vmem:[%s0 + $0x90] sm:$0xff]
  %v34 = vld [vmem:[%s0 + $0x98] sm:$0xff]
  %v35 = vld [vmem:[%s0 + $0xa0] sm:$0xff]
  %v36 = vld [vmem:[%s0 + $0xa8] sm:$0xff]
  %v37 = vld [vmem:[%s0 + $0xb0] sm:$0xff]
  %v38 = vld [vmem:[%s0 + $0xb8] sm:$0xff]
  %v39 = vld [vmem:[%s0 + $0xc0] sm:$0xff]
  %v40 = vld [vmem:[%s0 + $0xc8] sm:$0xff]
  %v41 = vld [vmem:[%s0 + $0xd0] sm:$0xff]
  %v42 = vld [vmem:[%s0 + $0xd8] sm:$0xff]
  %v43 = vld [vmem:[%s0 + $0xe0] sm:$0xff]
  %v44 = vld [vmem:[%s0 + $0xe8] sm:$0xff]
  %v45 = vld [vmem:[%s0 + $0xf0] sm:$0xff]
  %v46 = vld [vmem:[%s0 + $0xf8] sm:$0xff]
  %v47 = vld [vmem:[%s0 + $0x100] sm:$0xff]
  %v48 = vld [vmem:[%s0 + $0x108] sm:$0xff]
  %v49 = vld [vmem:[%s0 + $0x110] sm:$0xff]
  %v50 = vld [vmem:[%s0 + $0x118] sm:$0xff]
  %v51 = vld [vmem:[%s0 + $0x120] sm:$0xff]
  %v52 = vld [vmem:[%s0 + $0x128] sm:$0xff]
  %v53 = vld [vmem:[%s0 + $0x130] sm:$0xff]
  %v54 = vld [vmem:[%s0 + $0x138] sm:$0xff]
  %v55 = vld [vmem:[%s0 + $0x140] sm:$0xff]
  %v56 = vld [vmem:[%s0 + $0x148] sm:$0xff]
  %v57 = vld [vmem:[%s0 + $0x150] sm:$0xff]
  %v58 = vld [vmem:[%s0 + $0x158] sm:$0xff]
  %v59 = vld [vmem:[%s0 + $0x160] sm:$0xff]
  %v60 = vld [vmem:[%s0 + $0x168] sm:$0xff]
  %v61 = vld [vmem:[%s0 + $0x170] sm:$0xff]
  %v62 = vld [vmem:[%s0 + $0x178] sm:$0xff]
  %v63 = vld [vmem:[%s0 + $0x180] sm:$0xff]
  %v64 = vld [vmem:[%s0 + $0x188] sm:$0xff]
  %v65 = vld [vmem:[%s0 + $0x190] sm:$0xff]
  %v66 = vld [vmem:[%s0 + $0x198] sm:$0xff]
  %v67 = vld [vmem:[%s0 + $0x1a0] sm:$0xff]
  %v68 = vld [vmem:[%s0 + $0x1a8] sm:$0xff]
  %v69 = vld [vmem:[%s0 + $0x1b0] sm:$0xff]
  %v70 = vld [vmem:[%s0 + $0x1b8] sm:$0xff]
  %v71 = vld [vmem:[%s0 + $0x1c0] sm:$0xff]
  %v72 = vld [vmem:[%s0 + $0x1c8] sm:$0xff]
  %v73 = vld [vmem:[%s0 + $0x1d0] sm:$0xff]
  %v74 = vld [vmem:[%s0 + $0x1d8] sm:$0xff]
  %v75 = vld [vmem:[%s0 + $0x1e0] sm:$0xff]
  %v76 = vld [vmem:[%s0 + $0x1e8] sm:$0xff]
  %v77 = vld [vmem:[%s0 + $0x1f0] sm:$0xff]
  %v78 = vld [vmem:[%s0 + $0x1f8] sm:$0xff]
  %v79 = vld [vmem:[%s1] sm:$0xf]
  %v80 = vld [vmem:[%s1 + $0x4] sm:$0xf]
  %v81 = vld [vmem:[%s1 + $0x8] sm:$0xf]
  %v82 = vld [vmem:[%s1 + $0xc] sm:$0xf]
  %v83 = vld [vmem:[%s1 + $0x10] sm:$0xf]
  %v84 = vld [vmem:[%s1 + $0x14] sm:$0xf]
  %v85 = vld [vmem:[%s1 + $0x18] sm:$0xf]
  %v86 = vld [vmem:[%s1 + $0x1c] sm:$0xf]
  %v87 = vld [vmem:[%s1 + $0x20] sm:$0xf]
  %v88 = vld [vmem:[%s1 + $0x24] sm:$0xf]
  %v89 = vld [vmem:[%s1 + $0x28] sm:$0xf]
  %v90 = vld [vmem:[%s1 + $0x2c] sm:$0xf]
  %v91 = vld [vmem:[%s1 + $0x30] sm:$0xf]
  %v92 = vld [vmem:[%s1 + $0x34] sm:$0xf]
  %v93 = vld [vmem:[%s1 + $0x38] sm:$0xf]
  %v94 = vld [vmem:[%s1 + $0x3c] sm:$0xf]
  %v95 = vld [vmem:[%s1 + $0x40] sm:$0xf]
  %v96 = vld [vmem:[%s1 + $0x44] sm:$0xf]
  %v97 = vld [vmem:[%s1 + $0x48] sm:$0xf]
  %v98 = vld [vmem:[%s1 + $0x4c] sm:$0xf]
  %v99 = vld [vmem:[%s1 + $0x50] sm:$0xf]
  %v100 = vld [vmem:[%s1 + $0x54] sm:$0xf]
  %v101 = vld [vmem:[%s1 + $0x58] sm:$0xf]
  %v102 = vld [vmem:[%s1 + $0x5c] sm:$0xf]
  %v103 = vld [vmem:[%s1 + $0x60] sm:$0xf]
  %v104 = vld [vmem:[%s1 + $0x64] sm:$0xf]
  %v105 = vld [vmem:[%s1 + $0x68] sm:$0xf]
  %v106 = vld [vmem:[%s1 + $0x6c] sm:$0xf]
  %v107 = vld [vmem:[%s1 + $0x70] sm:$0xf]
  %v108 = vld [vmem:[%s1 + $0x74] sm:$0xf]
  %v109 = vld [vmem:[%s1 + $0x78] sm:$0xf]
  %v110 = vld [vmem:[%s1 + $0x7c] sm:$0xf]
  %v111 = vld [vmem:[%s1 + $0x80] sm:$0xf]
  %v112 = vld [vmem:[%s1 + $0x84] sm:$0xf]
  %v113 = vld [vmem:[%s1 + $0x88] sm:$0xf]
  %v114 = vld [vmem:[%s1 + $0x8c] sm:$0xf]
  %v115 = vld [vmem:[%s1 + $0x90] sm:$0xf]
  %v116 = vld [vmem:[%s1 + $0x94] sm:$0xf]
  %v117 = vld [vmem:[%s1 + $0x98] sm:$0xf]
  %v118 = vld [vmem:[%s1 + $0x9c] sm:$0xf]
  %v119 = vld [vmem:[%s1 + $0xa0] sm:$0xf]
  %v120 = vld [vmem:[%s1 + $0xa4] sm:$0xf]
  %v121 = vld [vmem:[%s1 + $0xa8] sm:$0xf]
  %v122 = vld [vmem:[%s1 + $0xac] sm:$0xf]
  %v123 = vld [vmem:[%s1 + $0xb0] sm:$0xf]
  %v124 = vld [vmem:[%s1 + $0xb4] sm:$0xf]
  %v125 = vld [vmem:[%s1 + $0xb8] sm:$0xf]
  %v126 = vld [vmem:[%s1 + $0xbc] sm:$0xf]
  %v127 = vld [vmem:[%s1 + $0xc0] sm:$0xf]
  %v128 = vld [vmem:[%s1 + $0xc4] sm:$0xf]
  %v129 = vld [vmem:[%s1 + $0xc8] sm:$0xf]
  %v130 = vld [vmem:[%s1 + $0xcc] sm:$0xf]
  %v131 = vld [vmem:[%s1 + $0xd0] sm:$0xf]
  %v132 = vld [vmem:[%s1 + $0xd4] sm:$0xf]
  %v133 = vld [vmem:[%s1 + $0xd8] sm:$0xf]
  %v134 = vld [vmem:[%s1 + $0xdc] sm:$0xf]
  %v135 = vld [vmem:[%s1 + $0xe0] sm:$0xf]
  %v136 = vld [vmem:[%s1 + $0xe4] sm:$0xf]
  %v137 = vld [vmem:[%s1 + $0xe8] sm:$0xf]
  %v138 = vld [vmem:[%s1 + $0xec] sm:$0xf]
  %v139 = vld [vmem:[%s1 + $0xf0] sm:$0xf]
  %v140 = vld [vmem:[%s1 + $0xf4] sm:$0xf]
  %v141 = vld [vmem:[%s1 + $0xf8] sm:$0xf]
  %v142 = vld [vmem:[%s1 + $0xfc] sm:$0xf]
  %v143 = vld [vmem:[%s1 + $0x100] sm:$0xf]
  %v144 = vld [vmem:[%s1 + $0x104] sm:$0xf]
  %v145 = vld [vmem:[%s1 + $0x108] sm:$0xf]
  %v146 = vld [vmem:[%s1 + $0x10c] sm:$0xf]
  %v147 = vld [vmem:[%s1 + $0x110] sm:$0xf]
  %v148 = vld [vmem:[%s1 + $0x114] sm:$0xf]
  %v149 = vld [vmem:[%s1 + $0x118] sm:$0xf]
  %v150 = vld [vmem:[%s1 + $0x11c] sm:$0xf]
  %v151 = vld [vmem:[%s1 + $0x120] sm:$0xf]
  %v152 = vld [vmem:[%s1 + $0x124] sm:$0xf]
  %v153 = vld [vmem:[%s1 + $0x128] sm:$0xf]
  %v154 = vld [vmem:[%s1 + $0x12c] sm:$0xf]
  %v155 = vld [vmem:[%s1 + $0x130] sm:$0xf]
  %v156 = vld [vmem:[%s1 + $0x134] sm:$0xf]
  %v157 = vld [vmem:[%s1 + $0x138] sm:$0xf]
  %v158 = vld [vmem:[%s1 + $0x13c] sm:$0xf]
  %v159 = vld [vmem:[%s1 + $0x140] sm:$0xf]
  %v160 = vld [vmem:[%s1 + $0x144] sm:$0xf]
  %v161 = vld [vmem:[%s1 + $0x148] sm:$0xf]
  %v162 = vld [vmem:[%s1 + $0x14c] sm:$0xf]
  %v163 = vld [vmem:[%s1 + $0x150] sm:$0xf]
  %v164 = vld [vmem:[%s1 + $0x154] sm:$0xf]
  %v165 = vld [vmem:[%s1 + $0x158] sm:$0xf]
  %v166 = vld [vmem:[%s1 + $0x15c] sm:$0xf]
  %v167 = vld [vmem:[%s1 + $0x160] sm:$0xf]
  %v168 = vld [vmem:[%s1 + $0x164] sm:$0xf]
  %v169 = vld [vmem:[%s1 + $0x168] sm:$0xf]
  %v170 = vld [vmem:[%s1 + $0x16c] sm:$0xf]
  %v171 = vld [vmem:[%s1 + $0x170] sm:$0xf]
  %v172 = vld [vmem:[%s1 + $0x174] sm:$0xf]
  %v173 = vld [vmem:[%s1 + $0x178] sm:$0xf]
  %v174 = vld [vmem:[%s1 + $0x17c] sm:$0xf]
  %v175 = vld [vmem:[%s1 + $0x180] sm:$0xf]
  %v176 = vld [vmem:[%s1 + $0x184] sm:$0xf]
  %v177 = vld [vmem:[%s1 + $0x188] sm:$0xf]
  %v178 = vld [vmem:[%s1 + $0x18c] sm:$0xf]
  %v179 = vld [vmem:[%s1 + $0x190] sm:$0xf]
  %v180 = vld [vmem:[%s1 + $0x194] sm:$0xf]
  %v181 = vld [vmem:[%s1 + $0x198] sm:$0xf]
  %v182 = vld [vmem:[%s1 + $0x19c] sm:$0xf]
  %v183 = vld [vmem:[%s1 + $0x1a0] sm:$0xf]
  %v184 = vld [vmem:[%s1 + $0x1a4] sm:$0xf]
  %v185 = vld [vmem:[%s1 + $0x1a8] sm:$0xf]
  %v186 = vld [vmem:[%s1 + $0x1ac] sm:$0xf]
  %v187 = vld [vmem:[%s1 + $0x1b0] sm:$0xf]
  %v188 = vld [vmem:[%s1 + $0x1b4] sm:$0xf]
  %v189 = vld [vmem:[%s1 + $0x1b8] sm:$0xf]
  %v190 = vld [vmem:[%s1 + $0x1bc] sm:$0xf]
  %v191 = vld [vmem:[%s1 + $0x1c0] sm:$0xf]
  %v192 = vld [vmem:[%s1 + $0x1c4] sm:$0xf]
  %v193 = vld [vmem:[%s1 + $0x1c8] sm:$0xf]
  %v194 = vld [vmem:[%s1 + $0x1cc] sm:$0xf]
  %v195 = vld [vmem:[%s1 + $0x1d0] sm:$0xf]
  %v196 = vld [vmem:[%s1 + $0x1d4] sm:$0xf]
  %v197 = vld [vmem:[%s1 + $0x1d8] sm:$0xf]
  %v198 = vld [vmem:[%s1 + $0x1dc] sm:$0xf]
  %v199 = vld [vmem:[%s1 + $0x1e0] sm:$0xf]
  %v200 = vld [vmem:[%s1 + $0x1e4] sm:$0xf]
  %v201 = vld [vmem:[%s1 + $0x1e8] sm:$0xf]
  %v202 = vld [vmem:[%s1 + $0x1ec] sm:$0xf]
  %v203 = vld [vmem:[%s1 + $0x1f0] sm:$0xf]
  %v204 = vld [vmem:[%s1 + $0x1f4] sm:$0xf]
  %v205 = vld [vmem:[%s1 + $0x1f8] sm:$0xf]
  %v206 = vld [vmem:[%s1 + $0x1fc] sm:$0xf]
  %v271 = vunpack.c.l.b16 %v15
  %v272 = vunpack.c.h.b16 %v15
  %v273 = vunpack.c.l.b16 %v16
  %v274 = vunpack.c.h.b16 %v16
  %v275 = vunpack.c.l.b16 %v17
  %v276 = vunpack.c.h.b16 %v17
  %v277 = vunpack.c.l.b16 %v18
  %v278 = vunpack.c.h.b16 %v18
  %v279 = vunpack.c.l.b16 %v19
  %v280 = vunpack.c.h.b16 %v19
  %v281 = vunpack.c.l.b16 %v20
  %v282 = vunpack.c.h.b16 %v20
  %v283 = vunpack.c.l.b16 %v21
  %v284 = vunpack.c.h.b16 %v21
  %v285 = vunpack.c.l.b16 %v22
  %v286 = vunpack.c.h.b16 %v22
  %v287 = vunpack.c.l.b16 %v23
  %v288 = vunpack.c.h.b16 %v23
  %v289 = vunpack.c.l.b16 %v24
  %v290 = vunpack.c.h.b16 %v24
  %v291 = vunpack.c.l.b16 %v25
  %v292 = vunpack.c.h.b16 %v25
  %v293 = vunpack.c.l.b16 %v26
  %v294 = vunpack.c.h.b16 %v26
  %v295 = vunpack.c.l.b16 %v27
  %v296 = vunpack.c.h.b16 %v27
  %v297 = vunpack.c.l.b16 %v28
  %v298 = vunpack.c.h.b16 %v28
  %v299 = vunpack.c.l.b16 %v29
  %v300 = vunpack.c.h.b16 %v29
  %v301 = vunpack.c.l.b16 %v30
  %v302 = vunpack.c.h.b16 %v30
  %v303 = vunpack.c.l.b16 %v31
  %v304 = vunpack.c.h.b16 %v31
  %v305 = vunpack.c.l.b16 %v32
  %v306 = vunpack.c.h.b16 %v32
  %v307 = vunpack.c.l.b16 %v33
  %v308 = vunpack.c.h.b16 %v33
  %v309 = vunpack.c.l.b16 %v34
  %v310 = vunpack.c.h.b16 %v34
  %v311 = vunpack.c.l.b16 %v35
  %v312 = vunpack.c.h.b16 %v35
  %v313 = vunpack.c.l.b16 %v36
  %v314 = vunpack.c.h.b16 %v36
  %v315 = vunpack.c.l.b16 %v37
  %v316 = vunpack.c.h.b16 %v37
  %v317 = vunpack.c.l.b16 %v38
  %v318 = vunpack.c.h.b16 %v38
  %v319 = vunpack.c.l.b16 %v39
  %v320 = vunpack.c.h.b16 %v39
  %v321 = vunpack.c.l.b16 %v40
  %v322 = vunpack.c.h.b16 %v40
  %v323 = vunpack.c.l.b16 %v41
  %v324 = vunpack.c.h.b16 %v41
  %v325 = vunpack.c.l.b16 %v42
  %v326 = vunpack.c.h.b16 %v42
  %v327 = vunpack.c.l.b16 %v43
  %v328 = vunpack.c.h.b16 %v43
  %v329 = vunpack.c.l.b16 %v44
  %v330 = vunpack.c.h.b16 %v44
  %v331 = vunpack.c.l.b16 %v45
  %v332 = vunpack.c.h.b16 %v45
  %v333 = vunpack.c.l.b16 %v46
  %v334 = vunpack.c.h.b16 %v46
  %v335 = vunpack.c.l.b16 %v47
  %v336 = vunpack.c.h.b16 %v47
  %v337 = vunpack.c.l.b16 %v48
  %v338 = vunpack.c.h.b16 %v48
  %v339 = vunpack.c.l.b16 %v49
  %v340 = vunpack.c.h.b16 %v49
  %v341 = vunpack.c.l.b16 %v50
  %v342 = vunpack.c.h.b16 %v50
  %v343 = vunpack.c.l.b16 %v51
  %v344 = vunpack.c.h.b16 %v51
  %v345 = vunpack.c.l.b16 %v52
  %v346 = vunpack.c.h.b16 %v52
  %v347 = vunpack.c.l.b16 %v53
  %v348 = vunpack.c.h.b16 %v53
  %v349 = vunpack.c.l.b16 %v54
  %v350 = vunpack.c.h.b16 %v54
  %v351 = vunpack.c.l.b16 %v55
  %v352 = vunpack.c.h.b16 %v55
  %v353 = vunpack.c.l.b16 %v56
  %v354 = vunpack.c.h.b16 %v56
  %v355 = vunpack.c.l.b16 %v57
  %v356 = vunpack.c.h.b16 %v57
  %v357 = vunpack.c.l.b16 %v58
  %v358 = vunpack.c.h.b16 %v58
  %v359 = vunpack.c.l.b16 %v59
  %v360 = vunpack.c.h.b16 %v59
  %v361 = vunpack.c.l.b16 %v60
  %v362 = vunpack.c.h.b16 %v60
  %v363 = vunpack.c.l.b16 %v61
  %v364 = vunpack.c.h.b16 %v61
  %v365 = vunpack.c.l.b16 %v62
  %v366 = vunpack.c.h.b16 %v62
  %v367 = vunpack.c.l.b16 %v63
  %v368 = vunpack.c.h.b16 %v63
  %v369 = vunpack.c.l.b16 %v64
  %v370 = vunpack.c.h.b16 %v64
  %v371 = vunpack.c.l.b16 %v65
  %v372 = vunpack.c.h.b16 %v65
  %v373 = vunpack.c.l.b16 %v66
  %v374 = vunpack.c.h.b16 %v66
  %v375 = vunpack.c.l.b16 %v67
  %v376 = vunpack.c.h.b16 %v67
  %v377 = vunpack.c.l.b16 %v68
  %v378 = vunpack.c.h.b16 %v68
  %v379 = vunpack.c.l.b16 %v69
  %v380 = vunpack.c.h.b16 %v69
  %v381 = vunpack.c.l.b16 %v70
  %v382 = vunpack.c.h.b16 %v70
  %v383 = vunpack.c.l.b16 %v71
  %v384 = vunpack.c.h.b16 %v71
  %v385 = vunpack.c.l.b16 %v72
  %v386 = vunpack.c.h.b16 %v72
  %v387 = vunpack.c.l.b16 %v73
  %v388 = vunpack.c.h.b16 %v73
  %v389 = vunpack.c.l.b16 %v74
  %v390 = vunpack.c.h.b16 %v74
  %v391 = vunpack.c.l.b16 %v75
  %v392 = vunpack.c.h.b16 %v75
  %v393 = vunpack.c.l.b16 %v76
  %v394 = vunpack.c.h.b16 %v76
  %v395 = vunpack.c.l.b16 %v77
  %v396 = vunpack.c.h.b16 %v77
  %v397 = vunpack.c.l.b16 %v78
  %v398 = vunpack.c.h.b16 %v78
  %v399 = vpack.c.b16 %v279, %v271
  %v400 = vpack.c.b16 %v280, %v272
  %v401 = vpack.c.b16 %v281, %v273
  %v402 = vpack.c.b16 %v282, %v274
  %v403 = vpack.c.b16 %v283, %v275
  %v404 = vpack.c.b16 %v284, %v276
  %v405 = vpack.c.b16 %v285, %v277
  %v406 = vpack.c.b16 %v286, %v278
  %v407 = vpack.c.b16 %v295, %v287
  %v408 = vpack.c.b16 %v296, %v288
  %v409 = vpack.c.b16 %v297, %v289
  %v410 = vpack.c.b16 %v298, %v290
  %v411 = vpack.c.b16 %v299, %v291
  %v412 = vpack.c.b16 %v300, %v292
  %v413 = vpack.c.b16 %v301, %v293
  %v414 = vpack.c.b16 %v302, %v294
  %v415 = vpack.c.b16 %v311, %v303
  %v416 = vpack.c.b16 %v312, %v304
  %v417 = vpack.c.b16 %v313, %v305
  %v418 = vpack.c.b16 %v314, %v306
  %v419 = vpack.c.b16 %v315, %v307
  %v420 = vpack.c.b16 %v316, %v308
  %v421 = vpack.c.b16 %v317, %v309
  %v422 = vpack.c.b16 %v318, %v310
  %v423 = vpack.c.b16 %v327, %v319
  %v424 = vpack.c.b16 %v328, %v320
  %v425 = vpack.c.b16 %v329, %v321
  %v426 = vpack.c.b16 %v330, %v322
  %v427 = vpack.c.b16 %v331, %v323
  %v428 = vpack.c.b16 %v332, %v324
  %v429 = vpack.c.b16 %v333, %v325
  %v430 = vpack.c.b16 %v334, %v326
  %v431 = vpack.c.b16 %v343, %v335
  %v432 = vpack.c.b16 %v344, %v336
  %v433 = vpack.c.b16 %v345, %v337
  %v434 = vpack.c.b16 %v346, %v338
  %v435 = vpack.c.b16 %v347, %v339
  %v436 = vpack.c.b16 %v348, %v340
  %v437 = vpack.c.b16 %v349, %v341
  %v438 = vpack.c.b16 %v350, %v342
  %v439 = vpack.c.b16 %v359, %v351
  %v440 = vpack.c.b16 %v360, %v352
  %v441 = vpack.c.b16 %v361, %v353
  %v442 = vpack.c.b16 %v362, %v354
  %v443 = vpack.c.b16 %v363, %v355
  %v444 = vpack.c.b16 %v364, %v356
  %v445 = vpack.c.b16 %v365, %v357
  %v446 = vpack.c.b16 %v366, %v358
  %v447 = vpack.c.b16 %v375, %v367
  %v448 = vpack.c.b16 %v376, %v368
  %v449 = vpack.c.b16 %v377, %v369
  %v450 = vpack.c.b16 %v378, %v370
  %v451 = vpack.c.b16 %v379, %v371
  %v452 = vpack.c.b16 %v380, %v372
  %v453 = vpack.c.b16 %v381, %v373
  %v454 = vpack.c.b16 %v382, %v374
  %v455 = vpack.c.b16 %v391, %v383
  %v456 = vpack.c.b16 %v392, %v384
  %v457 = vpack.c.b16 %v393, %v385
  %v458 = vpack.c.b16 %v394, %v386
  %v459 = vpack.c.b16 %v395, %v387
  %v460 = vpack.c.b16 %v396, %v388
  %v461 = vpack.c.b16 %v397, %v389
  %v462 = vpack.c.b16 %v398, %v390
  %v655 = vunpack.c.l.b16 %v79
  %v656 = vunpack.c.l.b16 %v80
  %v657 = vunpack.c.l.b16 %v81
  %v658 = vunpack.c.l.b16 %v82
  %v659 = vunpack.c.l.b16 %v83
  %v660 = vunpack.c.l.b16 %v84
  %v661 = vunpack.c.l.b16 %v85
  %v662 = vunpack.c.l.b16 %v86
  %v663 = vunpack.c.l.b16 %v87
  %v664 = vunpack.c.l.b16 %v88
  %v665 = vunpack.c.l.b16 %v89
  %v666 = vunpack.c.l.b16 %v90
  %v667 = vunpack.c.l.b16 %v91
  %v668 = vunpack.c.l.b16 %v92
  %v669 = vunpack.c.l.b16 %v93
  %v670 = vunpack.c.l.b16 %v94
  %v671 = vunpack.c.l.b16 %v95
  %v672 = vunpack.c.l.b16 %v96
  %v673 = vunpack.c.l.b16 %v97
  %v674 = vunpack.c.l.b16 %v98
  %v675 = vunpack.c.l.b16 %v99
  %v676 = vunpack.c.l.b16 %v100
  %v677 = vunpack.c.l.b16 %v101
  %v678 = vunpack.c.l.b16 %v102
  %v679 = vunpack.c.l.b16 %v103
  %v680 = vunpack.c.l.b16 %v104
  %v681 = vunpack.c.l.b16 %v105
  %v682 = vunpack.c.l.b16 %v106
  %v683 = vunpack.c.l.b16 %v107
  %v684 = vunpack.c.l.b16 %v108
  %v685 = vunpack.c.l.b16 %v109
  %v686 = vunpack.c.l.b16 %v110
  %v687 = vunpack.c.l.b16 %v111
  %v688 = vunpack.c.l.b16 %v112
  %v689 = vunpack.c.l.b16 %v113
  %v690 = vunpack.c.l.b16 %v114
  %v691 = vunpack.c.l.b16 %v115
  %v692 = vunpack.c.l.b16 %v116
  %v693 = vunpack.c.l.b16 %v117
  %v694 = vunpack.c.l.b16 %v118
  %v695 = vunpack.c.l.b16 %v119
  %v696 = vunpack.c.l.b16 %v120
  %v697 = vunpack.c.l.b16 %v121
  %v698 = vunpack.c.l.b16 %v122
  %v699 = vunpack.c.l.b16 %v123
  %v700 = vunpack.c.l.b16 %v124
  %v701 = vunpack.c.l.b16 %v125
  %v702 = vunpack.c.l.b16 %v126
  %v703 = vunpack.c.l.b16 %v127
  %v704 = vunpack.c.l.b16 %v128
  %v705 = vunpack.c.l.b16 %v129
  %v706 = vunpack.c.l.b16 %v130
  %v707 = vunpack.c.l.b16 %v131
  %v708 = vunpack.c.l.b16 %v132
  %v709 = vunpack.c.l.b16 %v133
  %v710 = vunpack.c.l.b16 %v134
  %v711 = vunpack.c.l.b16 %v135
  %v712 = vunpack.c.l.b16 %v136
  %v713 = vunpack.c.l.b16 %v137
  %v714 = vunpack.c.l.b16 %v138
  %v715 = vunpack.c.l.b16 %v139
  %v716 = vunpack.c.l.b16 %v140
  %v717 = vunpack.c.l.b16 %v141
  %v718 = vunpack.c.l.b16 %v142
  %v719 = vunpack.c.l.b16 %v143
  %v720 = vunpack.c.l.b16 %v144
  %v721 = vunpack.c.l.b16 %v145
  %v722 = vunpack.c.l.b16 %v146
  %v723 = vunpack.c.l.b16 %v147
  %v724 = vunpack.c.l.b16 %v148
  %v725 = vunpack.c.l.b16 %v149
  %v726 = vunpack.c.l.b16 %v150
  %v727 = vunpack.c.l.b16 %v151
  %v728 = vunpack.c.l.b16 %v152
  %v729 = vunpack.c.l.b16 %v153
  %v730 = vunpack.c.l.b16 %v154
  %v731 = vunpack.c.l.b16 %v155
  %v732 = vunpack.c.l.b16 %v156
  %v733 = vunpack.c.l.b16 %v157
  %v734 = vunpack.c.l.b16 %v158
  %v735 = vunpack.c.l.b16 %v159
  %v736 = vunpack.c.l.b16 %v160
  %v737 = vunpack.c.l.b16 %v161
  %v738 = vunpack.c.l.b16 %v162
  %v739 = vunpack.c.l.b16 %v163
  %v740 = vunpack.c.l.b16 %v164
  %v741 = vunpack.c.l.b16 %v165
  %v742 = vunpack.c.l.b16 %v166
  %v743 = vunpack.c.l.b16 %v167
  %v744 = vunpack.c.l.b16 %v168
  %v745 = vunpack.c.l.b16 %v169
  %v746 = vunpack.c.l.b16 %v170
  %v747 = vunpack.c.l.b16 %v171
  %v748 = vunpack.c.l.b16 %v172
  %v749 = vunpack.c.l.b16 %v173
  %v750 = vunpack.c.l.b16 %v174
  %v751 = vunpack.c.l.b16 %v175
  %v752 = vunpack.c.l.b16 %v176
  %v753 = vunpack.c.l.b16 %v177
  %v754 = vunpack.c.l.b16 %v178
  %v755 = vunpack.c.l.b16 %v179
  %v756 = vunpack.c.l.b16 %v180
  %v757 = vunpack.c.l.b16 %v181
  %v758 = vunpack.c.l.b16 %v182
  %v759 = vunpack.c.l.b16 %v183
  %v760 = vunpack.c.l.b16 %v184
  %v761 = vunpack.c.l.b16 %v185
  %v762 = vunpack.c.l.b16 %v186
  %v763 = vunpack.c.l.b16 %v187
  %v764 = vunpack.c.l.b16 %v188
  %v765 = vunpack.c.l.b16 %v189
  %v766 = vunpack.c.l.b16 %v190
  %v767 = vunpack.c.l.b16 %v191
  %v768 = vunpack.c.l.b16 %v192
  %v769 = vunpack.c.l.b16 %v193
  %v770 = vunpack.c.l.b16 %v194
  %v771 = vunpack.c.l.b16 %v195
  %v772 = vunpack.c.l.b16 %v196
  %v773 = vunpack.c.l.b16 %v197
  %v774 = vunpack.c.l.b16 %v198
  %v775 = vunpack.c.l.b16 %v199
  %v776 = vunpack.c.l.b16 %v200
  %v777 = vunpack.c.l.b16 %v201
  %v778 = vunpack.c.l.b16 %v202
  %v779 = vunpack.c.l.b16 %v203
  %v780 = vunpack.c.l.b16 %v204
  %v781 = vunpack.c.l.b16 %v205
  %v782 = vunpack.c.l.b16 %v206
  %v783 = vpack.c.b16 %v656, %v655
  %v784 = vpack.c.b16 %v658, %v657
  %v785 = vpack.c.b16 %v660, %v659
  %v786 = vpack.c.b16 %v662, %v661
  %v787 = vpack.c.b16 %v664, %v663
  %v788 = vpack.c.b16 %v666, %v665
  %v789 = vpack.c.b16 %v668, %v667
  %v790 = vpack.c.b16 %v670, %v669
  %v791 = vpack.c.b16 %v672, %v671
  %v792 = vpack.c.b16 %v674, %v673
  %v793 = vpack.c.b16 %v676, %v675
  %v794 = vpack.c.b16 %v678, %v677
  %v795 = vpack.c.b16 %v680, %v679
  %v796 = vpack.c.b16 %v682, %v681
  %v797 = vpack.c.b16 %v684, %v683
  %v798 = vpack.c.b16 %v686, %v685
  %v799 = vpack.c.b16 %v688, %v687
  %v800 = vpack.c.b16 %v690, %v689
  %v801 = vpack.c.b16 %v692, %v691
  %v802 = vpack.c.b16 %v694, %v693
  %v803 = vpack.c.b16 %v696, %v695
  %v804 = vpack.c.b16 %v698, %v697
  %v805 = vpack.c.b16 %v700, %v699
  %v806 = vpack.c.b16 %v702, %v701
  %v807 = vpack.c.b16 %v704, %v703
  %v808 = vpack.c.b16 %v706, %v705
  %v809 = vpack.c.b16 %v708, %v707
  %v810 = vpack.c.b16 %v710, %v709
  %v811 = vpack.c.b16 %v712, %v711
  %v812 = vpack.c.b16 %v714, %v713
  %v813 = vpack.c.b16 %v716, %v715
  %v814 = vpack.c.b16 %v718, %v717
  %v815 = vpack.c.b16 %v720, %v719
  %v816 = vpack.c.b16 %v722, %v721
  %v817 = vpack.c.b16 %v724, %v723
  %v818 = vpack.c.b16 %v726, %v725
  %v819 = vpack.c.b16 %v728, %v727
  %v820 = vpack.c.b16 %v730, %v729
  %v821 = vpack.c.b16 %v732, %v731
  %v822 = vpack.c.b16 %v734, %v733
  %v823 = vpack.c.b16 %v736, %v735
  %v824 = vpack.c.b16 %v738, %v737
  %v825 = vpack.c.b16 %v740, %v739
  %v826 = vpack.c.b16 %v742, %v741
  %v827 = vpack.c.b16 %v744, %v743
  %v828 = vpack.c.b16 %v746, %v745
  %v829 = vpack.c.b16 %v748, %v747
  %v830 = vpack.c.b16 %v750, %v749
  %v831 = vpack.c.b16 %v752, %v751
  %v832 = vpack.c.b16 %v754, %v753
  %v833 = vpack.c.b16 %v756, %v755
  %v834 = vpack.c.b16 %v758, %v757
  %v835 = vpack.c.b16 %v760, %v759
  %v836 = vpack.c.b16 %v762, %v761
  %v837 = vpack.c.b16 %v764, %v763
  %v838 = vpack.c.b16 %v766, %v765
  %v839 = vpack.c.b16 %v768, %v767
  %v840 = vpack.c.b16 %v770, %v769
  %v841 = vpack.c.b16 %v772, %v771
  %v842 = vpack.c.b16 %v774, %v773
  %v843 = vpack.c.b16 %v776, %v775
  %v844 = vpack.c.b16 %v778, %v777
  %v845 = vpack.c.b16 %v780, %v779
  %v846 = vpack.c.b16 %v782, %v781
  %911 = vmatprep.subr.bf16.mxu0 0
  %912 = vmatpush1.bf16.msra.mxu0 %v783
  %913 = vmatprep.subr.bf16.mxu0 0
  %914 = vmatpush1.bf16.msra.mxu0 %v784
  %915 = vmatprep.subr.bf16.mxu0 0
  %916 = vmatpush1.bf16.msra.mxu0 %v785
  %917 = vmatprep.subr.bf16.mxu0 0
  %918 = vmatpush1.bf16.msra.mxu0 %v786
  %919 = vmatprep.subr.bf16.mxu0 0
  %920 = vmatpush1.bf16.msra.mxu0 %v787
  %921 = vmatprep.subr.bf16.mxu0 0
  %922 = vmatpush1.bf16.msra.mxu0 %v788
  %923 = vmatprep.subr.bf16.mxu0 0
  %924 = vmatpush1.bf16.msra.mxu0 %v789
  %925 = vmatprep.subr.bf16.mxu0 0
  %926 = vmatpush1.bf16.msra.mxu0 %v790
  %927 = vmatprep.subr.bf16.mxu0 0
  %928 = vmatpush1.bf16.msra.mxu0 %v791
  %929 = vmatprep.subr.bf16.mxu0 0
  %930 = vmatpush1.bf16.msra.mxu0 %v792
  %931 = vmatprep.subr.bf16.mxu0 0
  %932 = vmatpush1.bf16.msra.mxu0 %v793
  %933 = vmatprep.subr.bf16.mxu0 0
  %934 = vmatpush1.bf16.msra.mxu0 %v794
  %935 = vmatprep.subr.bf16.mxu0 0
  %936 = vmatpush1.bf16.msra.mxu0 %v795
  %937 = vmatprep.subr.bf16.mxu0 0
  %938 = vmatpush1.bf16.msra.mxu0 %v796
  %939 = vmatprep.subr.bf16.mxu0 0
  %940 = vmatpush1.bf16.msra.mxu0 %v797
  %941 = vmatprep.subr.bf16.mxu0 0
  %942 = vmatpush1.bf16.msra.mxu0 %v798
  %943 = vmatprep.mubr.bf16.mxu0 %v400
  %944 = vmatmul.mubr.bf16.gmra.mrb[0].mxu0 %v399
  %v945 = vpop.f32.mrb[0].mxu0
  %v946 = vadd.f32 0.0, %v945
  %v947 = vpop.f32.mrb[0].mxu0
  %v948 = vpop.f32.mrb[0].mxu0
  %v949 = vadd.f32 0.0, %v948
  %v950 = vpop.f32.mrb[0].mxu0
  %951 = vmatprep.mubr.bf16.mxu0 %v408
  %952 = vmatmul.mubr.bf16.gmra.mrb[0].mxu0 %v407
  %v953 = vpop.f32.mrb[0].mxu0
  %v954 = vadd.f32 0.0, %v953
  %v955 = vpop.f32.mrb[0].mxu0
  %v956 = vpop.f32.mrb[0].mxu0
  %v957 = vadd.f32 0.0, %v956
  %v958 = vpop.f32.mrb[0].mxu0
  %959 = vmatprep.mubr.bf16.mxu0 %v416
  %960 = vmatmul.mubr.bf16.gmra.mrb[0].mxu0 %v415
  %v961 = vpop.f32.mrb[0].mxu0
  %v962 = vadd.f32 0.0, %v961
  %v963 = vpop.f32.mrb[0].mxu0
  %v964 = vpop.f32.mrb[0].mxu0
  %v965 = vadd.f32 0.0, %v964
  %v966 = vpop.f32.mrb[0].mxu0
  %967 = vmatprep.mubr.bf16.mxu0 %v424
  %968 = vmatmul.mubr.bf16.gmra.mrb[0].mxu0 %v423
  %v969 = vpop.f32.mrb[0].mxu0
  %v970 = vadd.f32 0.0, %v969
  %v971 = vpop.f32.mrb[0].mxu0
  %v972 = vpop.f32.mrb[0].mxu0
  %v973 = vadd.f32 0.0, %v972
  %v974 = vpop.f32.mrb[0].mxu0
  %975 = vmatprep.mubr.bf16.mxu0 %v432
  %976 = vmatmul.mubr.bf16.gmra.mrb[0].mxu0 %v431
  %v977 = vpop.f32.mrb[0].mxu0
  %v978 = vadd.f32 0.0, %v977
  %v979 = vpop.f32.mrb[0].mxu0
  %v980 = vpop.f32.mrb[0].mxu0
  %v981 = vadd.f32 0.0, %v980
  %v982 = vpop.f32.mrb[0].mxu0
  %983 = vmatprep.mubr.bf16.mxu0 %v440
  %984 = vmatmul.mubr.bf16.gmra.mrb[0].mxu0 %v439
  %v985 = vpop.f32.mrb[0].mxu0
  %v986 = vadd.f32 0.0, %v985
  %v987 = vpop.f32.mrb[0].mxu0
  %v988 = vpop.f32.mrb[0].mxu0
  %v989 = vadd.f32 0.0, %v988
  %v990 = vpop.f32.mrb[0].mxu0
  %991 = vmatprep.mubr.bf16.mxu0 %v448
  %992 = vmatmul.mubr.bf16.gmra.mrb[0].mxu0 %v447
  %v993 = vpop.f32.mrb[0].mxu0
  %v994 = vadd.f32 0.0, %v993
  %v995 = vpop.f32.mrb[0].mxu0
  %v996 = vpop.f32.mrb[0].mxu0
  %v997 = vadd.f32 0.0, %v996
  %v998 = vpop.f32.mrb[0].mxu0
  %999 = vmatprep.mubr.bf16.mxu0 %v456
  %1000 = vmatmul.mubr.bf16.gmra.mrb[0].mxu0 %v455
  %v1001 = vpop.f32.mrb[0].mxu0
  %v1002 = vadd.f32 0.0, %v1001
  %v1003 = vpop.f32.mrb[0].mxu0
  %v1004 = vpop.f32.mrb[0].mxu0
  %v1005 = vadd.f32 0.0, %v1004
  %v1006 = vpop.f32.mrb[0].mxu0
  %1007 = vdwg.mxu0
  %1008 = vmatprep.subr.bf16.mxu0 0
  %1009 = vmatpush1.bf16.msra.mxu0 %v799
  %1010 = vmatprep.subr.bf16.mxu0 0
  %1011 = vmatpush1.bf16.msra.mxu0 %v800
  %1012 = vmatprep.subr.bf16.mxu0 0
  %1013 = vmatpush1.bf16.msra.mxu0 %v801
  %1014 = vmatprep.subr.bf16.mxu0 0
  %1015 = vmatpush1.bf16.msra.mxu0 %v802
  %1016 = vmatprep.subr.bf16.mxu0 0
  %1017 = vmatpush1.bf16.msra.mxu0 %v803
  %1018 = vmatprep.subr.bf16.mxu0 0
  %1019 = vmatpush1.bf16.msra.mxu0 %v804
  %1020 = vmatprep.subr.bf16.mxu0 0
  %1021 = vmatpush1.bf16.msra.mxu0 %v805
  %1022 = vmatprep.subr.bf16.mxu0 0
  %1023 = vmatpush1.bf16.msra.mxu0 %v806
  %1024 = vmatprep.subr.bf16.mxu0 0
  %1025 = vmatpush1.bf16.msra.mxu0 %v807
  %1026 = vmatprep.subr.bf16.mxu0 0
  %1027 = vmatpush1.bf16.msra.mxu0 %v808
  %1028 = vmatprep.subr.bf16.mxu0 0
  %1029 = vmatpush1.bf16.msra.mxu0 %v809
  %1030 = vmatprep.subr.bf16.mxu0 0
  %1031 = vmatpush1.bf16.msra.mxu0 %v810
  %1032 = vmatprep.subr.bf16.mxu0 0
  %1033 = vmatpush1.bf16.msra.mxu0 %v811
  %1034 = vmatprep.subr.bf16.mxu0 0
  %1035 = vmatpush1.bf16.msra.mxu0 %v812
  %1036 = vmatprep.subr.bf16.mxu0 0
  %1037 = vmatpush1.bf16.msra.mxu0 %v813
  %1038 = vmatprep.subr.bf16.mxu0 0
  %1039 = vmatpush1.bf16.msra.mxu0 %v814
  %1040 = vmatprep.mubr.bf16.mxu0 %v402
  %1041 = vmatmul.mubr.bf16.gmra.mrb[0].mxu0 %v401
  %v1042 = vpop.f32.mrb[0].mxu0
  %v1043 = vadd.f32 %v946, %v1042
  %v1044 = vpop.f32.mrb[0].mxu0
  %v1045 = vpop.f32.mrb[0].mxu0
  %v1046 = vadd.f32 %v949, %v1045
  %v1047 = vpop.f32.mrb[0].mxu0
  %1048 = vmatprep.mubr.bf16.mxu0 %v410
  %1049 = vmatmul.mubr.bf16.gmra.mrb[0].mxu0 %v409
  %v1050 = vpop.f32.mrb[0].mxu0
  %v1051 = vadd.f32 %v954, %v1050
  %v1052 = vpop.f32.mrb[0].mxu0
  %v1053 = vpop.f32.mrb[0].mxu0
  %v1054 = vadd.f32 %v957, %v1053
  %v1055 = vpop.f32.mrb[0].mxu0
  %1056 = vmatprep.mubr.bf16.mxu0 %v418
  %1057 = vmatmul.mubr.bf16.gmra.mrb[0].mxu0 %v417
  %v1058 = vpop.f32.mrb[0].mxu0
  %v1059 = vadd.f32 %v962, %v1058
  %v1060 = vpop.f32.mrb[0].mxu0
  %v1061 = vpop.f32.mrb[0].mxu0
  %v1062 = vadd.f32 %v965, %v1061
  %v1063 = vpop.f32.mrb[0].mxu0
  %1064 = vmatprep.mubr.bf16.mxu0 %v426
  %1065 = vmatmul.mubr.bf16.gmra.mrb[0].mxu0 %v425
  %v1066 = vpop.f32.mrb[0].mxu0
  %v1067 = vadd.f32 %v970, %v1066
  %v1068 = vpop.f32.mrb[0].mxu0
  %v1069 = vpop.f32.mrb[0].mxu0
  %v1070 = vadd.f32 %v973, %v1069
  %v1071 = vpop.f32.mrb[0].mxu0
  %1072 = vmatprep.mubr.bf16.mxu0 %v434
  %1073 = vmatmul.mubr.bf16.gmra.mrb[0].mxu0 %v433
  %v1074 = vpop.f32.mrb[0].mxu0
  %v1075 = vadd.f32 %v978, %v1074
  %v1076 = vpop.f32.mrb[0].mxu0
  %v1077 = vpop.f32.mrb[0].mxu0
  %v1078 = vadd.f32 %v981, %v1077
  %v1079 = vpop.f32.mrb[0].mxu0
  %1080 = vmatprep.mubr.bf16.mxu0 %v442
  %1081 = vmatmul.mubr.bf16.gmra.mrb[0].mxu0 %v441
  %v1082 = vpop.f32.mrb[0].mxu0
  %v1083 = vadd.f32 %v986, %v1082
  %v1084 = vpop.f32.mrb[0].mxu0
  %v1085 = vpop.f32.mrb[0].mxu0
  %v1086 = vadd.f32 %v989, %v1085
  %v1087 = vpop.f32.mrb[0].mxu0
  %1088 = vmatprep.mubr.bf16.mxu0 %v450
  %1089 = vmatmul.mubr.bf16.gmra.mrb[0].mxu0 %v449
  %v1090 = vpop.f32.mrb[0].mxu0
  %v1091 = vadd.f32 %v994, %v1090
  %v1092 = vpop.f32.mrb[0].mxu0
  %v1093 = vpop.f32.mrb[0].mxu0
  %v1094 = vadd.f32 %v997, %v1093
  %v1095 = vpop.f32.mrb[0].mxu0
  %1096 = vmatprep.mubr.bf16.mxu0 %v458
  %1097 = vmatmul.mubr.bf16.gmra.mrb[0].mxu0 %v457
  %v1098 = vpop.f32.mrb[0].mxu0
  %v1099 = vadd.f32 %v1002, %v1098
  %v1100 = vpop.f32.mrb[0].mxu0
  %v1101 = vpop.f32.mrb[0].mxu0
  %v1102 = vadd.f32 %v1005, %v1101
  %v1103 = vpop.f32.mrb[0].mxu0
  %1104 = vdwg.mxu0
  %1105 = vmatprep.subr.bf16.mxu0 0
  %1106 = vmatpush1.bf16.msra.mxu0 %v815
  %1107 = vmatprep.subr.bf16.mxu0 0
  %1108 = vmatpush1.bf16.msra.mxu0 %v816
  %1109 = vmatprep.subr.bf16.mxu0 0
  %1110 = vmatpush1.bf16.msra.mxu0 %v817
  %1111 = vmatprep.subr.bf16.mxu0 0
  %1112 = vmatpush1.bf16.msra.mxu0 %v818
  %1113 = vmatprep.subr.bf16.mxu0 0
  %1114 = vmatpush1.bf16.msra.mxu0 %v819
  %1115 = vmatprep.subr.bf16.mxu0 0
  %1116 = vmatpush1.bf16.msra.mxu0 %v820
  %1117 = vmatprep.subr.bf16.mxu0 0
  %1118 = vmatpush1.bf16.msra.mxu0 %v821
  %1119 = vmatprep.subr.bf16.mxu0 0
  %1120 = vmatpush1.bf16.msra.mxu0 %v822
  %1121 = vmatprep.subr.bf16.mxu0 0
  %1122 = vmatpush1.bf16.msra.mxu0 %v823
  %1123 = vmatprep.subr.bf16.mxu0 0
  %1124 = vmatpush1.bf16.msra.mxu0 %v824
  %1125 = vmatprep.subr.bf16.mxu0 0
  %1126 = vmatpush1.bf16.msra.mxu0 %v825
  %1127 = vmatprep.subr.bf16.mxu0 0
  %1128 = vmatpush1.bf16.msra.mxu0 %v826
  %1129 = vmatprep.subr.bf16.mxu0 0
  %1130 = vmatpush1.bf16.msra.mxu0 %v827
  %1131 = vmatprep.subr.bf16.mxu0 0
  %1132 = vmatpush1.bf16.msra.mxu0 %v828
  %1133 = vmatprep.subr.bf16.mxu0 0
  %1134 = vmatpush1.bf16.msra.mxu0 %v829
  %1135 = vmatprep.subr.bf16.mxu0 0
  %1136 = vmatpush1.bf16.msra.mxu0 %v830
  %1137 = vmatprep.mubr.bf16.mxu0 %v404
  %1138 = vmatmul.mubr.bf16.gmra.mrb[0].mxu0 %v403
  %v1139 = vpop.f32.mrb[0].mxu0
  %v1140 = vadd.f32 %v1043, %v1139
  %v1141 = vpop.f32.mrb[0].mxu0
  %v1142 = vpop.f32.mrb[0].mxu0
  %v1143 = vadd.f32 %v1046, %v1142
  %v1144 = vpop.f32.mrb[0].mxu0
  %1145 = vmatprep.mubr.bf16.mxu0 %v412
  %1146 = vmatmul.mubr.bf16.gmra.mrb[0].mxu0 %v411
  %v1147 = vpop.f32.mrb[0].mxu0
  %v1148 = vadd.f32 %v1051, %v1147
  %v1149 = vpop.f32.mrb[0].mxu0
  %v1150 = vpop.f32.mrb[0].mxu0
  %v1151 = vadd.f32 %v1054, %v1150
  %v1152 = vpop.f32.mrb[0].mxu0
  %1153 = vmatprep.mubr.bf16.mxu0 %v420
  %1154 = vmatmul.mubr.bf16.gmra.mrb[0].mxu0 %v419
  %v1155 = vpop.f32.mrb[0].mxu0
  %v1156 = vadd.f32 %v1059, %v1155
  %v1157 = vpop.f32.mrb[0].mxu0
  %v1158 = vpop.f32.mrb[0].mxu0
  %v1159 = vadd.f32 %v1062, %v1158
  %v1160 = vpop.f32.mrb[0].mxu0
  %1161 = vmatprep.mubr.bf16.mxu0 %v428
  %1162 = vmatmul.mubr.bf16.gmra.mrb[0].mxu0 %v427
  %v1163 = vpop.f32.mrb[0].mxu0
  %v1164 = vadd.f32 %v1067, %v1163
  %v1165 = vpop.f32.mrb[0].mxu0
  %v1166 = vpop.f32.mrb[0].mxu0
  %v1167 = vadd.f32 %v1070, %v1166
  %v1168 = vpop.f32.mrb[0].mxu0
  %1169 = vmatprep.mubr.bf16.mxu0 %v436
  %1170 = vmatmul.mubr.bf16.gmra.mrb[0].mxu0 %v435
  %v1171 = vpop.f32.mrb[0].mxu0
  %v1172 = vadd.f32 %v1075, %v1171
  %v1173 = vpop.f32.mrb[0].mxu0
  %v1174 = vpop.f32.mrb[0].mxu0
  %v1175 = vadd.f32 %v1078, %v1174
  %v1176 = vpop.f32.mrb[0].mxu0
  %1177 = vmatprep.mubr.bf16.mxu0 %v444
  %1178 = vmatmul.mubr.bf16.gmra.mrb[0].mxu0 %v443
  %v1179 = vpop.f32.mrb[0].mxu0
  %v1180 = vadd.f32 %v1083, %v1179
  %v1181 = vpop.f32.mrb[0].mxu0
  %v1182 = vpop.f32.mrb[0].mxu0
  %v1183 = vadd.f32 %v1086, %v1182
  %v1184 = vpop.f32.mrb[0].mxu0
  %1185 = vmatprep.mubr.bf16.mxu0 %v452
  %1186 = vmatmul.mubr.bf16.gmra.mrb[0].mxu0 %v451
  %v1187 = vpop.f32.mrb[0].mxu0
  %v1188 = vadd.f32 %v1091, %v1187
  %v1189 = vpop.f32.mrb[0].mxu0
  %v1190 = vpop.f32.mrb[0].mxu0
  %v1191 = vadd.f32 %v1094, %v1190
  %v1192 = vpop.f32.mrb[0].mxu0
  %1193 = vmatprep.mubr.bf16.mxu0 %v460
  %1194 = vmatmul.mubr.bf16.gmra.mrb[0].mxu0 %v459
  %v1195 = vpop.f32.mrb[0].mxu0
  %v1196 = vadd.f32 %v1099, %v1195
  %v1197 = vpop.f32.mrb[0].mxu0
  %v1198 = vpop.f32.mrb[0].mxu0
  %v1199 = vadd.f32 %v1102, %v1198
  %v1200 = vpop.f32.mrb[0].mxu0
  %1201 = vdwg.mxu0
  %1202 = vmatprep.subr.bf16.mxu0 0
  %1203 = vmatpush1.bf16.msra.mxu0 %v831
  %1204 = vmatprep.subr.bf16.mxu0 0
  %1205 = vmatpush1.bf16.msra.mxu0 %v832
  %1206 = vmatprep.subr.bf16.mxu0 0
  %1207 = vmatpush1.bf16.msra.mxu0 %v833
  %1208 = vmatprep.subr.bf16.mxu0 0
  %1209 = vmatpush1.bf16.msra.mxu0 %v834
  %1210 = vmatprep.subr.bf16.mxu0 0
  %1211 = vmatpush1.bf16.msra.mxu0 %v835
  %1212 = vmatprep.subr.bf16.mxu0 0
  %1213 = vmatpush1.bf16.msra.mxu0 %v836
  %1214 = vmatprep.subr.bf16.mxu0 0
  %1215 = vmatpush1.bf16.msra.mxu0 %v837
  %1216 = vmatprep.subr.bf16.mxu0 0
  %1217 = vmatpush1.bf16.msra.mxu0 %v838
  %1218 = vmatprep.subr.bf16.mxu0 0
  %1219 = vmatpush1.bf16.msra.mxu0 %v839
  %1220 = vmatprep.subr.bf16.mxu0 0
  %1221 = vmatpush1.bf16.msra.mxu0 %v840
  %1222 = vmatprep.subr.bf16.mxu0 0
  %1223 = vmatpush1.bf16.msra.mxu0 %v841
  %1224 = vmatprep.subr.bf16.mxu0 0
  %1225 = vmatpush1.bf16.msra.mxu0 %v842
  %1226 = vmatprep.subr.bf16.mxu0 0
  %1227 = vmatpush1.bf16.msra.mxu0 %v843
  %1228 = vmatprep.subr.bf16.mxu0 0
  %1229 = vmatpush1.bf16.msra.mxu0 %v844
  %1230 = vmatprep.subr.bf16.mxu0 0
  %1231 = vmatpush1.bf16.msra.mxu0 %v845
  %1232 = vmatprep.subr.bf16.mxu0 0
  %1233 = vmatpush1.bf16.msra.mxu0 %v846
  %1234 = vmatprep.mubr.bf16.mxu0 %v406
  %1235 = vmatmul.mubr.bf16.gmra.mrb[0].mxu0 %v405
  %v1236 = vpop.f32.mrb[0].mxu0
  %v1237 = vadd.f32 %v1140, %v1236
  %v1238 = vpop.f32.mrb[0].mxu0
  %v1239 = vpop.f32.mrb[0].mxu0
  %v1240 = vadd.f32 %v1143, %v1239
  %v1241 = vpop.f32.mrb[0].mxu0
  %1242 = vmatprep.mubr.bf16.mxu0 %v414
  %1243 = vmatmul.mubr.bf16.gmra.mrb[0].mxu0 %v413
  %v1244 = vpop.f32.mrb[0].mxu0
  %v1245 = vadd.f32 %v1148, %v1244
  %v1246 = vpop.f32.mrb[0].mxu0
  %v1247 = vpop.f32.mrb[0].mxu0
  %v1248 = vadd.f32 %v1151, %v1247
  %v1249 = vpop.f32.mrb[0].mxu0
  %1250 = vmatprep.mubr.bf16.mxu0 %v422
  %1251 = vmatmul.mubr.bf16.gmra.mrb[0].mxu0 %v421
  %v1252 = vpop.f32.mrb[0].mxu0
  %v1253 = vadd.f32 %v1156, %v1252
  %v1254 = vpop.f32.mrb[0].mxu0
  %v1255 = vpop.f32.mrb[0].mxu0
  %v1256 = vadd.f32 %v1159, %v1255
  %v1257 = vpop.f32.mrb[0].mxu0
  %1258 = vmatprep.mubr.bf16.mxu0 %v430
  %1259 = vmatmul.mubr.bf16.gmra.mrb[0].mxu0 %v429
  %v1260 = vpop.f32.mrb[0].mxu0
  %v1261 = vadd.f32 %v1164, %v1260
  %v1262 = vpop.f32.mrb[0].mxu0
  %v1263 = vpop.f32.mrb[0].mxu0
  %v1264 = vadd.f32 %v1167, %v1263
  %v1265 = vpop.f32.mrb[0].mxu0
  %1266 = vmatprep.mubr.bf16.mxu0 %v438
  %1267 = vmatmul.mubr.bf16.gmra.mrb[0].mxu0 %v437
  %v1268 = vpop.f32.mrb[0].mxu0
  %v1269 = vadd.f32 %v1172, %v1268
  %v1270 = vpop.f32.mrb[0].mxu0
  %v1271 = vpop.f32.mrb[0].mxu0
  %v1272 = vadd.f32 %v1175, %v1271
  %v1273 = vpop.f32.mrb[0].mxu0
  %1274 = vmatprep.mubr.bf16.mxu0 %v446
  %1275 = vmatmul.mubr.bf16.gmra.mrb[0].mxu0 %v445
  %v1276 = vpop.f32.mrb[0].mxu0
  %v1277 = vadd.f32 %v1180, %v1276
  %v1278 = vpop.f32.mrb[0].mxu0
  %v1279 = vpop.f32.mrb[0].mxu0
  %v1280 = vadd.f32 %v1183, %v1279
  %v1281 = vpop.f32.mrb[0].mxu0
  %1282 = vmatprep.mubr.bf16.mxu0 %v454
  %1283 = vmatmul.mubr.bf16.gmra.mrb[0].mxu0 %v453
  %v1284 = vpop.f32.mrb[0].mxu0
  %v1285 = vadd.f32 %v1188, %v1284
  %v1286 = vpop.f32.mrb[0].mxu0
  %v1287 = vpop.f32.mrb[0].mxu0
  %v1288 = vadd.f32 %v1191, %v1287
  %v1289 = vpop.f32.mrb[0].mxu0
  %1290 = vmatprep.mubr.bf16.mxu0 %v462
  %1291 = vmatmul.mubr.bf16.gmra.mrb[0].mxu0 %v461
  %v1292 = vpop.f32.mrb[0].mxu0
  %v1293 = vadd.f32 %v1196, %v1292
  %v1294 = vpop.f32.mrb[0].mxu0
  %v1295 = vpop.f32.mrb[0].mxu0
  %v1296 = vadd.f32 %v1199, %v1295
  %v1297 = vpop.f32.mrb[0].mxu0
  %1298 = vdwg.mxu0
  %1299 = vst [vmem:[%s2] sm:$0xff] %v1237
  %1300 = vst [vmem:[%s2 + $0x8] sm:$0xff] %v1240
  %1301 = vst [vmem:[%s2 + $0x10] sm:$0xff] %v1245
  %1302 = vst [vmem:[%s2 + $0x18] sm:$0xff] %v1248
  %1303 = vst [vmem:[%s2 + $0x20] sm:$0xff] %v1253
  %1304 = vst [vmem:[%s2 + $0x28] sm:$0xff] %v1256
  %1305 = vst [vmem:[%s2 + $0x30] sm:$0xff] %v1261
  %1306 = vst [vmem:[%s2 + $0x38] sm:$0xff] %v1264
  %1307 = vst [vmem:[%s2 + $0x40] sm:$0xff] %v1269
  %1308 = vst [vmem:[%s2 + $0x48] sm:$0xff] %v1272
  %1309 = vst [vmem:[%s2 + $0x50] sm:$0xff] %v1277
  %1310 = vst [vmem:[%s2 + $0x58] sm:$0xff] %v1280
  %1311 = vst [vmem:[%s2 + $0x60] sm:$0xff] %v1285
  %1312 = vst [vmem:[%s2 + $0x68] sm:$0xff] %v1288
  %1313 = vst [vmem:[%s2 + $0x70] sm:$0xff] %v1293
  %1314 = vst [vmem:[%s2 + $0x78] sm:$0xff] %v1296
  %v1315 = vadd.f32 %v1237, %v1240
  %v1316 = vadd.f32 %v1315, %v1245
  %v1317 = vadd.f32 %v1316, %v1248
  %v1318 = vadd.f32 %v1317, %v1253
  %v1319 = vadd.f32 %v1318, %v1256
  %v1320 = vadd.f32 %v1319, %v1261
  %v1321 = vadd.f32 %v1320, %v1264
  %v1322 = vadd.f32 %v1321, %v1269
  %v1323 = vadd.f32 %v1322, %v1272
  %v1324 = vadd.f32 %v1323, %v1277
  %v1325 = vadd.f32 %v1324, %v1280
  %v1326 = vadd.f32 %v1325, %v1285
  %v1327 = vadd.f32 %v1326, %v1288
  %v1328 = vadd.f32 %v1327, %v1293
  %v1329 = vadd.f32 %v1328, %v1296
  %v1330 = vrot.slane %v1329, 4
  %v1331 = vadd.f32 %v1329, %v1330
  %v1332 = vrot.slane %v1331, 2
  %v1333 = vadd.f32 %v1331, %v1332
  %v1334 = vrot.slane %v1333, 1
  %v1335 = vadd.f32 %v1333, %v1334
  %v1336 = vmul.f32 %v1237, %v1237
  %v1337 = vmul.f32 %v1240, %v1240
  %v1338 = vmul.f32 %v1245, %v1245
  %v1339 = vmul.f32 %v1248, %v1248
  %v1340 = vmul.f32 %v1253, %v1253
  %v1341 = vmul.f32 %v1256, %v1256
  %v1342 = vmul.f32 %v1261, %v1261
  %v1343 = vmul.f32 %v1264, %v1264
  %v1344 = vmul.f32 %v1269, %v1269
  %v1345 = vmul.f32 %v1272, %v1272
  %v1346 = vmul.f32 %v1277, %v1277
  %v1347 = vmul.f32 %v1280, %v1280
  %v1348 = vmul.f32 %v1285, %v1285
  %v1349 = vmul.f32 %v1288, %v1288
  %v1350 = vmul.f32 %v1293, %v1293
  %v1351 = vmul.f32 %v1296, %v1296
  %v1352 = vadd.f32 %v1336, %v1337
  %v1353 = vadd.f32 %v1352, %v1338
  %v1354 = vadd.f32 %v1353, %v1339
  %v1355 = vadd.f32 %v1354, %v1340
  %v1356 = vadd.f32 %v1355, %v1341
  %v1357 = vadd.f32 %v1356, %v1342
  %v1358 = vadd.f32 %v1357, %v1343
  %v1359 = vadd.f32 %v1358, %v1344
  %v1360 = vadd.f32 %v1359, %v1345
  %v1361 = vadd.f32 %v1360, %v1346
  %v1362 = vadd.f32 %v1361, %v1347
  %v1363 = vadd.f32 %v1362, %v1348
  %v1364 = vadd.f32 %v1363, %v1349
  %v1365 = vadd.f32 %v1364, %v1350
  %v1366 = vadd.f32 %v1365, %v1351
  %v1367 = vrot.slane %v1366, 4
  %v1368 = vadd.f32 %v1366, %v1367
  %v1369 = vrot.slane %v1368, 2
  %v1370 = vadd.f32 %v1368, %v1369
  %v1371 = vrot.slane %v1370, 1
  %v1372 = vadd.f32 %v1370, %v1371
  %1373 = vst [vmem:[%s3] sm:$0xff] %v1335
  %1374 = vst [vmem:[%s4] sm:$0xff] %v1372
  // Predicated region
  $region10: #{discriminator_forward.6} parent=0 // pred_check
    _
  $region11: #{discriminator_forward.6} parent=0 // pred_check_branch
    %1376 = sbr.rel (0) target = $region13
  $region12: #{discriminator_forward.6} parent=0 // pred_region
    _
  $region13: #{discriminator_forward.6} parent=0 // pred_fallthru
    _
  // Predicated region
  $region14: #{discriminator_forward.6} parent=0 // pred_check
    _
  $region15: #{discriminator_forward.6} parent=0 // pred_check_branch
    %1378 = sbr.rel (0) target = $region17
  $region16: #{discriminator_forward.6} parent=0 // pred_region
    _
  $region17: #{discriminator_forward.6} parent=0 // pred_fallthru
    _
  // Predicated region
  $region18: #{discriminator_forward.6} parent=0 // pred_check
    _
  $region19: #{discriminator_forward.6} parent=0 // pred_check_branch
    %1380 = sbr.rel (0) target = $region21
  $region20: #{discriminator_forward.6} parent=0 // pred_region
    _
  $region21: #{discriminator_forward.6} parent=0 // pred_fallthru
    _
  // Predicated region
  $region22: #{discriminator_forward.6} parent=0 // pred_check
    _
  $region23: #{discriminator_forward.6} parent=0 // pred_check_branch
    %1382 = sbr.rel (0) target = $region25
  $region24: #{discriminator_forward.6} parent=0 // pred_region
    _
  $region25: #{discriminator_forward.6} parent=0 // pred_fallthru
    _
  // Predicated region
  $region26: #{discriminator_forward.6} parent=0 // pred_check
    _
  $region27: #{discriminator_forward.6} parent=0 // pred_check_branch
    %1384 = sbr.rel (0) target = $region29
  $region28: #{discriminator_forward.6} parent=0 // pred_region
    _
  $region29: #{discriminator_forward.6} parent=0 // pred_fallthru
    _
  // Predicated region
  $region30: #{discriminator_forward.6} parent=0 // pred_check
    _
  $region31: #{discriminator_forward.6} parent=0 // pred_check_branch
    %1386 = sbr.rel (0) target = $region33
  $region32: #{discriminator_forward.6} parent=0 // pred_region
    _
  $region33: #{discriminator_forward.6} parent=0 // pred_fallthru
    _

// kernel: discriminator_forward.7
$region0: #{discriminator_forward.7}
  #allocation0 [shape = 'u32[]', space=smem, size = 0x4, offset = 0x4, fixed_abs, tag = 'smem constant byte address 0x4 - core index']
  #allocation1 [shape = 'u32[144,128]{1,0:T(1,128)}', space=vmem, size = 0x12000, scoped, tag = 'internal scratch']
  %s0 = inlined_call_operand.vmem [shape: f32[128,128], index: 0, kind: input, shape index: {}]
  %s1 = inlined_call_operand.vmem [shape: f32[1,128], index: 1, kind: input, shape index: {}]
  %s2 = inlined_call_operand.vmem [shape: f32[1,128], index: 2, kind: input, shape index: {}]
  %s3 = inlined_call_operand.vmem [shape: bf16[128,128], index: 3, kind: output, shape index: {}]
  %s4 = sld [smem:[#allocation0]]
  $region22: #{discriminator_forward.7} parent=0
    _
  %s6 = ssub.s32 1, %s4
  %s7 = scalar_select 0, %s6, %s4
  // Predicated region
  $region2: #{discriminator_forward.7} parent=0 // pred_check
    _
  $region3: #{discriminator_forward.7} parent=0 // pred_check_branch
    %9 = sbr.rel (0) target = $region5
  $region4: #{discriminator_forward.7} parent=0 // pred_region
    _
  $region5: #{discriminator_forward.7} parent=0 // pred_fallthru
    _
  // Predicated region
  $region6: #{discriminator_forward.7} parent=0 // pred_check
    _
  $region7: #{discriminator_forward.7} parent=0 // pred_check_branch
    %11 = sbr.rel (0) target = $region9
  $region8: #{discriminator_forward.7} parent=0 // pred_region
    _
  $region9: #{discriminator_forward.7} parent=0 // pred_fallthru
    _
  // Predicated region
  $region10: #{discriminator_forward.7} parent=0 // pred_check
    _
  $region11: #{discriminator_forward.7} parent=0 // pred_check_branch
    %13 = sbr.rel (0) target = $region13
  $region12: #{discriminator_forward.7} parent=0 // pred_region
    _
  $region13: #{discriminator_forward.7} parent=0 // pred_fallthru
    _
  %v14 = vld [vmem:[%s0] sm:$0xff]
  %v15 = vld [vmem:[%s0 + $0x8] sm:$0xff]
  %v16 = vld [vmem:[%s0 + $0x10] sm:$0xff]
  %v17 = vld [vmem:[%s0 + $0x18] sm:$0xff]
  %v18 = vld [vmem:[%s0 + $0x20] sm:$0xff]
  %v19 = vld [vmem:[%s0 + $0x28] sm:$0xff]
  %v20 = vld [vmem:[%s0 + $0x30] sm:$0xff]
  %v21 = vld [vmem:[%s0 + $0x38] sm:$0xff]
  %v22 = vld [vmem:[%s0 + $0x40] sm:$0xff]
  %v23 = vld [vmem:[%s0 + $0x48] sm:$0xff]
  %v24 = vld [vmem:[%s0 + $0x50] sm:$0xff]
  %v25 = vld [vmem:[%s0 + $0x58] sm:$0xff]
  %v26 = vld [vmem:[%s0 + $0x60] sm:$0xff]
  %v27 = vld [vmem:[%s0 + $0x68] sm:$0xff]
  %v28 = vld [vmem:[%s0 + $0x70] sm:$0xff]
  %v29 = vld [vmem:[%s0 + $0x78] sm:$0xff]
  %v30 = vld [vmem:[%s1] sm:$0x1]
  %v32 = vlaneseq
  %v33 = vshrl.u32 %v32, 7
  %v34 = vsub.s32 0, %v33
  %v35 = vrot.slane %v30, %v34
  %v37 = vmul.f32 %v14, %v35
  %v38 = vmul.f32 %v15, %v35
  %v39 = vmul.f32 %v16, %v35
  %v40 = vmul.f32 %v17, %v35
  %v41 = vmul.f32 %v18, %v35
  %v42 = vmul.f32 %v19, %v35
  %v43 = vmul.f32 %v20, %v35
  %v44 = vmul.f32 %v21, %v35
  %v45 = vmul.f32 %v22, %v35
  %v46 = vmul.f32 %v23, %v35
  %v47 = vmul.f32 %v24, %v35
  %v48 = vmul.f32 %v25, %v35
  %v49 = vmul.f32 %v26, %v35
  %v50 = vmul.f32 %v27, %v35
  %v51 = vmul.f32 %v28, %v35
  %v52 = vmul.f32 %v29, %v35
  %v53 = vld [vmem:[%s2] sm:$0x1]
  %v55 = vlaneseq
  %v56 = vshrl.u32 %v55, 7
  %v57 = vsub.s32 0, %v56
  %v58 = vrot.slane %v53, %v57
  %v60 = vadd.f32 %v37, %v58
  %v61 = vadd.f32 %v38, %v58
  %v62 = vadd.f32 %v39, %v58
  %v63 = vadd.f32 %v40, %v58
  %v64 = vadd.f32 %v41, %v58
  %v65 = vadd.f32 %v42, %v58
  %v66 = vadd.f32 %v43, %v58
  %v67 = vadd.f32 %v44, %v58
  %v68 = vadd.f32 %v45, %v58
  %v69 = vadd.f32 %v46, %v58
  %v70 = vadd.f32 %v47, %v58
  %v71 = vadd.f32 %v48, %v58
  %v72 = vadd.f32 %v49, %v58
  %v73 = vadd.f32 %v50, %v58
  %v74 = vadd.f32 %v51, %v58
  %v75 = vadd.f32 %v52, %v58
  %vm76 = vcmp.gt.f32.partialorder %v60, 0.0
  %vm77 = vcmp.gt.f32.partialorder %v61, 0.0
  %vm78 = vcmp.gt.f32.partialorder %v62, 0.0
  %vm79 = vcmp.gt.f32.partialorder %v63, 0.0
  %vm80 = vcmp.gt.f32.partialorder %v64, 0.0
  %vm81 = vcmp.gt.f32.partialorder %v65, 0.0
  %vm82 = vcmp.gt.f32.partialorder %v66, 0.0
  %vm83 = vcmp.gt.f32.partialorder %v67, 0.0
  %vm84 = vcmp.gt.f32.partialorder %v68, 0.0
  %vm85 = vcmp.gt.f32.partialorder %v69, 0.0
  %vm86 = vcmp.gt.f32.partialorder %v70, 0.0
  %vm87 = vcmp.gt.f32.partialorder %v71, 0.0
  %vm88 = vcmp.gt.f32.partialorder %v72, 0.0
  %vm89 = vcmp.gt.f32.partialorder %v73, 0.0
  %vm90 = vcmp.gt.f32.partialorder %v74, 0.0
  %vm91 = vcmp.gt.f32.partialorder %v75, 0.0
  %v92 = vmul.f32 %v60, 0.2
  %v93 = vmul.f32 %v61, 0.2
  %v94 = vmul.f32 %v62, 0.2
  %v95 = vmul.f32 %v63, 0.2
  %v96 = vmul.f32 %v64, 0.2
  %v97 = vmul.f32 %v65, 0.2
  %v98 = vmul.f32 %v66, 0.2
  %v99 = vmul.f32 %v67, 0.2
  %v100 = vmul.f32 %v68, 0.2
  %v101 = vmul.f32 %v69, 0.2
  %v102 = vmul.f32 %v70, 0.2
  %v103 = vmul.f32 %v71, 0.2
  %v104 = vmul.f32 %v72, 0.2
  %v105 = vmul.f32 %v73, 0.2
  %v106 = vmul.f32 %v74, 0.2
  %v107 = vmul.f32 %v75, 0.2
  %v108 = vsel %vm76, %v60, %v92
  %v109 = vsel %vm77, %v61, %v93
  %v110 = vsel %vm78, %v62, %v94
  %v111 = vsel %vm79, %v63, %v95
  %v112 = vsel %vm80, %v64, %v96
  %v113 = vsel %vm81, %v65, %v97
  %v114 = vsel %vm82, %v66, %v98
  %v115 = vsel %vm83, %v67, %v99
  %v116 = vsel %vm84, %v68, %v100
  %v117 = vsel %vm85, %v69, %v101
  %v118 = vsel %vm86, %v70, %v102
  %v119 = vsel %vm87, %v71, %v103
  %v120 = vsel %vm88, %v72, %v104
  %v121 = vsel %vm89, %v73, %v105
  %v122 = vsel %vm90, %v74, %v106
  %v123 = vsel %vm91, %v75, %v107
  %v124 = vpack.c.bf16 %v109, %v108
  %v125 = vpack.c.bf16 %v111, %v110
  %v126 = vpack.c.bf16 %v113, %v112
  %v127 = vpack.c.bf16 %v115, %v114
  %v128 = vpack.c.bf16 %v117, %v116
  %v129 = vpack.c.bf16 %v119, %v118
  %v130 = vpack.c.bf16 %v121, %v120
  %v131 = vpack.c.bf16 %v123, %v122
  %v140 = vunpack.c.l.b16 %v124
  %v141 = vunpack.c.h.b16 %v124
  %v142 = vunpack.c.l.b16 %v125
  %v143 = vunpack.c.h.b16 %v125
  %v144 = vunpack.c.l.b16 %v126
  %v145 = vunpack.c.h.b16 %v126
  %v146 = vunpack.c.l.b16 %v127
  %v147 = vunpack.c.h.b16 %v127
  %v148 = vunpack.c.l.b16 %v128
  %v149 = vunpack.c.h.b16 %v128
  %v150 = vunpack.c.l.b16 %v129
  %v151 = vunpack.c.h.b16 %v129
  %v152 = vunpack.c.l.b16 %v130
  %v153 = vunpack.c.h.b16 %v130
  %v154 = vunpack.c.l.b16 %v131
  %v155 = vunpack.c.h.b16 %v131
  %v156 = vpack.c.b16 %v140, %v140
  %v157 = vpack.c.b16 %v141, %v141
  %v158 = vpack.c.b16 %v142, %v142
  %v159 = vpack.c.b16 %v143, %v143
  %v160 = vpack.c.b16 %v144, %v144
  %v161 = vpack.c.b16 %v145, %v145
  %v162 = vpack.c.b16 %v146, %v146
  %v163 = vpack.c.b16 %v147, %v147
  %v164 = vpack.c.b16 %v148, %v148
  %v165 = vpack.c.b16 %v149, %v149
  %v166 = vpack.c.b16 %v150, %v150
  %v167 = vpack.c.b16 %v151, %v151
  %v168 = vpack.c.b16 %v152, %v152
  %v169 = vpack.c.b16 %v153, %v153
  %v170 = vpack.c.b16 %v154, %v154
  %v171 = vpack.c.b16 %v155, %v155
  %188 = vst [vmem:[%s3] sm:$0xf] %v156
  %189 = vst [vmem:[%s3 + $0x4] sm:$0xf] %v157
  %190 = vst [vmem:[%s3 + $0x8] sm:$0xf] %v158
  %191 = vst [vmem:[%s3 + $0xc] sm:$0xf] %v159
  %192 = vst [vmem:[%s3 + $0x10] sm:$0xf] %v160
  %193 = vst [vmem:[%s3 + $0x14] sm:$0xf] %v161
  %194 = vst [vmem:[%s3 + $0x18] sm:$0xf] %v162
  %195 = vst [vmem:[%s3 + $0x1c] sm:$0xf] %v163
  %196 = vst [vmem:[%s3 + $0x20] sm:$0xf] %v164
  %197 = vst [vmem:[%s3 + $0x24] sm:$0xf] %v165
  %198 = vst [vmem:[%s3 + $0x28] sm:$0xf] %v166
  %199 = vst [vmem:[%s3 + $0x2c] sm:$0xf] %v167
  %200 = vst [vmem:[%s3 + $0x30] sm:$0xf] %v168
  %201 = vst [vmem:[%s3 + $0x34] sm:$0xf] %v169
  %202 = vst [vmem:[%s3 + $0x38] sm:$0xf] %v170
  %203 = vst [vmem:[%s3 + $0x3c] sm:$0xf] %v171
  // Predicated region
  $region14: #{discriminator_forward.7} parent=0 // pred_check
    _
  $region15: #{discriminator_forward.7} parent=0 // pred_check_branch
    %205 = sbr.rel (0) target = $region17
  $region16: #{discriminator_forward.7} parent=0 // pred_region
    _
  $region17: #{discriminator_forward.7} parent=0 // pred_fallthru
    _
  // Predicated region
  $region18: #{discriminator_forward.7} parent=0 // pred_check
    _
  $region19: #{discriminator_forward.7} parent=0 // pred_check_branch
    %207 = sbr.rel (0) target = $region21
  $region20: #{discriminator_forward.7} parent=0 // pred_region
    _
  $region21: #{discriminator_forward.7} parent=0 // pred_fallthru
    _

// kernel: discriminator_forward.9
$region0: #{discriminator_forward.9}
  #allocation0 [shape = 'u32[]', space=smem, size = 0x4, offset = 0x4, fixed_abs, tag = 'smem constant byte address 0x4 - core index']
  #allocation1 [shape = 'u32[144,128]{1,0:T(1,128)}', space=vmem, size = 0x12000, scoped, tag = 'internal scratch']
  %s0 = inlined_call_operand.vmem [shape: f32[32,256], index: 0, kind: input, shape index: {}]
  %s1 = inlined_call_operand.vmem [shape: f32[1,256], index: 1, kind: input, shape index: {}]
  %s2 = inlined_call_operand.vmem [shape: f32[1,256], index: 2, kind: input, shape index: {}]
  %s3 = inlined_call_operand.vmem [shape: bf16[32,256], index: 3, kind: output, shape index: {}]
  %s4 = sld [smem:[#allocation0]]
  $region22: #{discriminator_forward.9} parent=0
    _
  %s6 = ssub.s32 1, %s4
  %s7 = scalar_select 0, %s6, %s4
  // Predicated region
  $region2: #{discriminator_forward.9} parent=0 // pred_check
    _
  $region3: #{discriminator_forward.9} parent=0 // pred_check_branch
    %9 = sbr.rel (0) target = $region5
  $region4: #{discriminator_forward.9} parent=0 // pred_region
    _
  $region5: #{discriminator_forward.9} parent=0 // pred_fallthru
    _
  // Predicated region
  $region6: #{discriminator_forward.9} parent=0 // pred_check
    _
  $region7: #{discriminator_forward.9} parent=0 // pred_check_branch
    %11 = sbr.rel (0) target = $region9
  $region8: #{discriminator_forward.9} parent=0 // pred_region
    _
  $region9: #{discriminator_forward.9} parent=0 // pred_fallthru
    _
  // Predicated region
  $region10: #{discriminator_forward.9} parent=0 // pred_check
    _
  $region11: #{discriminator_forward.9} parent=0 // pred_check_branch
    %13 = sbr.rel (0) target = $region13
  $region12: #{discriminator_forward.9} parent=0 // pred_region
    _
  $region13: #{discriminator_forward.9} parent=0 // pred_fallthru
    _
  %v14 = vld [vmem:[%s0] sm:$0xff]
  %v15 = vld [vmem:[%s0 + $0x8] sm:$0xff]
  %v16 = vld [vmem:[%s0 + $0x10] sm:$0xff]
  %v17 = vld [vmem:[%s0 + $0x18] sm:$0xff]
  %v18 = vld [vmem:[%s0 + $0x20] sm:$0xff]
  %v19 = vld [vmem:[%s0 + $0x28] sm:$0xff]
  %v20 = vld [vmem:[%s0 + $0x30] sm:$0xff]
  %v21 = vld [vmem:[%s0 + $0x38] sm:$0xff]
  %v22 = vld [vmem:[%s1] sm:$0x3]
  %v24 = vlaneseq
  %v25 = vshrl.u32 %v24, 7
  %v26 = vsub.s32 0, %v25
  %v27 = vrot.slane %v22, %v26
  %v28 = vlaneseq
  %v29 = vshrl.u32 %v28, 7
  %v30 = vsub.s32 1, %v29
  %v31 = vrot.slane %v22, %v30
  %v34 = vmul.f32 %v14, %v27
  %v35 = vmul.f32 %v15, %v31
  %v36 = vmul.f32 %v16, %v27
  %v37 = vmul.f32 %v17, %v31
  %v38 = vmul.f32 %v18, %v27
  %v39 = vmul.f32 %v19, %v31
  %v40 = vmul.f32 %v20, %v27
  %v41 = vmul.f32 %v21, %v31
  %v42 = vld [vmem:[%s2] sm:$0x3]
  %v44 = vlaneseq
  %v45 = vshrl.u32 %v44, 7
  %v46 = vsub.s32 0, %v45
  %v47 = vrot.slane %v42, %v46
  %v48 = vlaneseq
  %v49 = vshrl.u32 %v48, 7
  %v50 = vsub.s32 1, %v49
  %v51 = vrot.slane %v42, %v50
  %v54 = vadd.f32 %v34, %v47
  %v55 = vadd.f32 %v35, %v51
  %v56 = vadd.f32 %v36, %v47
  %v57 = vadd.f32 %v37, %v51
  %v58 = vadd.f32 %v38, %v47
  %v59 = vadd.f32 %v39, %v51
  %v60 = vadd.f32 %v40, %v47
  %v61 = vadd.f32 %v41, %v51
  %vm62 = vcmp.gt.f32.partialorder %v54, 0.0
  %vm63 = vcmp.gt.f32.partialorder %v55, 0.0
  %vm64 = vcmp.gt.f32.partialorder %v56, 0.0
  %vm65 = vcmp.gt.f32.partialorder %v57, 0.0
  %vm66 = vcmp.gt.f32.partialorder %v58, 0.0
  %vm67 = vcmp.gt.f32.partialorder %v59, 0.0
  %vm68 = vcmp.gt.f32.partialorder %v60, 0.0
  %vm69 = vcmp.gt.f32.partialorder %v61, 0.0
  %v70 = vmul.f32 %v54, 0.2
  %v71 = vmul.f32 %v55, 0.2
  %v72 = vmul.f32 %v56, 0.2
  %v73 = vmul.f32 %v57, 0.2
  %v74 = vmul.f32 %v58, 0.2
  %v75 = vmul.f32 %v59, 0.2
  %v76 = vmul.f32 %v60, 0.2
  %v77 = vmul.f32 %v61, 0.2
  %v78 = vsel %vm62, %v54, %v70
  %v79 = vsel %vm63, %v55, %v71
  %v80 = vsel %vm64, %v56, %v72
  %v81 = vsel %vm65, %v57, %v73
  %v82 = vsel %vm66, %v58, %v74
  %v83 = vsel %vm67, %v59, %v75
  %v84 = vsel %vm68, %v60, %v76
  %v85 = vsel %vm69, %v61, %v77
  %v86 = vpack.c.bf16 %v80, %v78
  %v87 = vpack.c.bf16 %v81, %v79
  %v88 = vpack.c.bf16 %v84, %v82
  %v89 = vpack.c.bf16 %v85, %v83
  %v94 = vunpack.c.l.b16 %v86
  %v95 = vunpack.c.l.b16 %v87
  %v96 = vunpack.c.h.b16 %v86
  %v97 = vunpack.c.h.b16 %v87
  %v98 = vunpack.c.l.b16 %v88
  %v99 = vunpack.c.l.b16 %v89
  %v100 = vunpack.c.h.b16 %v88
  %v101 = vunpack.c.h.b16 %v89
  %v102 = vpack.c.b16 %v95, %v94
  %v103 = vpack.c.b16 %v97, %v96
  %v104 = vpack.c.b16 %v99, %v98
  %v105 = vpack.c.b16 %v101, %v100
  %110 = vst [vmem:[%s3] sm:$0xff] %v102
  %111 = vst [vmem:[%s3 + $0x8] sm:$0xff] %v103
  %112 = vst [vmem:[%s3 + $0x10] sm:$0xff] %v104
  %113 = vst [vmem:[%s3 + $0x18] sm:$0xff] %v105
  // Predicated region
  $region14: #{discriminator_forward.9} parent=0 // pred_check
    _
  $region15: #{discriminator_forward.9} parent=0 // pred_check_branch
    %115 = sbr.rel (0) target = $region17
  $region16: #{discriminator_forward.9} parent=0 // pred_region
    _
  $region17: #{discriminator_forward.9} parent=0 // pred_fallthru
    _
  // Predicated region
  $region18: #{discriminator_forward.9} parent=0 // pred_check
    _
  $region19: #{discriminator_forward.9} parent=0 // pred_check_branch
    %117 = sbr.rel (0) target = $region21
  $region20: #{discriminator_forward.9} parent=0 // pred_region
    _
  $region21: #{discriminator_forward.9} parent=0 // pred_fallthru
    _

// kernel: discriminator_forward.8
$region0: #{discriminator_forward.8}
  #allocation0 [shape = 'u32[]', space=smem, size = 0x4, offset = 0x4, fixed_abs, tag = 'smem constant byte address 0x4 - core index']
  #allocation1 [shape = 'u32[144,128]{1,0:T(1,128)}', space=vmem, size = 0x12000, scoped, tag = 'internal scratch']
  %s0 = inlined_call_operand.vmem [shape: bf16[32,2048], index: 0, kind: input, shape index: {}]
  %s1 = inlined_call_operand.vmem [shape: bf16[2048,256], index: 1, kind: input, shape index: {}]
  %s2 = inlined_call_operand.vmem [shape: f32[32,256], index: 2, kind: output, shape index: {0}]
  %s3 = inlined_call_operand.vmem [shape: f32[1,8,256], index: 3, kind: output, shape index: {1}]
  %s4 = inlined_call_operand.vmem [shape: f32[1,8,256], index: 4, kind: output, shape index: {2}]
  %5 = xla_tuple %s2, %s3, %s4
  %s6 = sld [smem:[#allocation0]]
  $region34: #{discriminator_forward.8} parent=0
    _
  %s8 = ssub.s32 1, %s6
  %s9 = scalar_select 0, %s8, %s6
  // Predicated region
  $region2: #{discriminator_forward.8} parent=0 // pred_check
    _
  $region3: #{discriminator_forward.8} parent=0 // pred_check_branch
    %11 = sbr.rel (0) target = $region5
  $region4: #{discriminator_forward.8} parent=0 // pred_region
    _
  $region5: #{discriminator_forward.8} parent=0 // pred_fallthru
    _
  // Predicated region
  $region6: #{discriminator_forward.8} parent=0 // pred_check
    _
  $region7: #{discriminator_forward.8} parent=0 // pred_check_branch
    %13 = sbr.rel (0) target = $region9
  $region8: #{discriminator_forward.8} parent=0 // pred_region
    _
  $region9: #{discriminator_forward.8} parent=0 // pred_fallthru
    _
  %v14 = vld [vmem:[%s0] sm:$0xff]
  %v15 = vld [vmem:[%s0 + $0x8] sm:$0xff]
  %v16 = vld [vmem:[%s0 + $0x10] sm:$0xff]
  %v17 = vld [vmem:[%s0 + $0x18] sm:$0xff]
  %v18 = vld [vmem:[%s0 + $0x20] sm:$0xff]
  %v19 = vld [vmem:[%s0 + $0x28] sm:$0xff]
  %v20 = vld [vmem:[%s0 + $0x30] sm:$0xff]
  %v21 = vld [vmem:[%s0 + $0x38] sm:$0xff]
  %v22 = vld [vmem:[%s0 + $0x40] sm:$0xff]
  %v23 = vld [vmem:[%s0 + $0x48] sm:$0xff]
  %v24 = vld [vmem:[%s0 + $0x50] sm:$0xff]
  %v25 = vld [vmem:[%s0 + $0x58] sm:$0xff]
  %v26 = vld [vmem:[%s0 + $0x60] sm:$0xff]
  %v27 = vld [vmem:[%s0 + $0x68] sm:$0xff]
  %v28 = vld [vmem:[%s0 + $0x70] sm:$0xff]
  %v29 = vld [vmem:[%s0 + $0x78] sm:$0xff]
  %v30 = vld [vmem:[%s0 + $0x80] sm:$0xff]
  %v31 = vld [vmem:[%s0 + $0x88] sm:$0xff]
  %v32 = vld [vmem:[%s0 + $0x90] sm:$0xff]
  %v33 = vld [vmem:[%s0 + $0x98] sm:$0xff]
  %v34 = vld [vmem:[%s0 + $0xa0] sm:$0xff]
  %v35 = vld [vmem:[%s0 + $0xa8] sm:$0xff]
  %v36 = vld [vmem:[%s0 + $0xb0] sm:$0xff]
  %v37 = vld [vmem:[%s0 + $0xb8] sm:$0xff]
  %v38 = vld [vmem:[%s0 + $0xc0] sm:$0xff]
  %v39 = vld [vmem:[%s0 + $0xc8] sm:$0xff]
  %v40 = vld [vmem:[%s0 + $0xd0] sm:$0xff]
  %v41 = vld [vmem:[%s0 + $0xd8] sm:$0xff]
  %v42 = vld [vmem:[%s0 + $0xe0] sm:$0xff]
  %v43 = vld [vmem:[%s0 + $0xe8] sm:$0xff]
  %v44 = vld [vmem:[%s0 + $0xf0] sm:$0xff]
  %v45 = vld [vmem:[%s0 + $0xf8] sm:$0xff]
  %v46 = vld [vmem:[%s1] sm:$0xff]
  %v47 = vld [vmem:[%s1 + $0x8] sm:$0xff]
  %v48 = vld [vmem:[%s1 + $0x10] sm:$0xff]
  %v49 = vld [vmem:[%s1 + $0x18] sm:$0xff]
  %v50 = vld [vmem:[%s1 + $0x20] sm:$0xff]
  %v51 = vld [vmem:[%s1 + $0x28] sm:$0xff]
  %v52 = vld [vmem:[%s1 + $0x30] sm:$0xff]
  %v53 = vld [vmem:[%s1 + $0x38] sm:$0xff]
  %v54 = vld [vmem:[%s1 + $0x40] sm:$0xff]
  %v55 = vld [vmem:[%s1 + $0x48] sm:$0xff]
  %v56 = vld [vmem:[%s1 + $0x50] sm:$0xff]
  %v57 = vld [vmem:[%s1 + $0x58] sm:$0xff]
  %v58 = vld [vmem:[%s1 + $0x60] sm:$0xff]
  %v59 = vld [vmem:[%s1 + $0x68] sm:$0xff]
  %v60 = vld [vmem:[%s1 + $0x70] sm:$0xff]
  %v61 = vld [vmem:[%s1 + $0x78] sm:$0xff]
  %v62 = vld [vmem:[%s1 + $0x80] sm:$0xff]
  %v63 = vld [vmem:[%s1 + $0x88] sm:$0xff]
  %v64 = vld [vmem:[%s1 + $0x90] sm:$0xff]
  %v65 = vld [vmem:[%s1 + $0x98] sm:$0xff]
  %v66 = vld [vmem:[%s1 + $0xa0] sm:$0xff]
  %v67 = vld [vmem:[%s1 + $0xa8] sm:$0xff]
  %v68 = vld [vmem:[%s1 + $0xb0] sm:$0xff]
  %v69 = vld [vmem:[%s1 + $0xb8] sm:$0xff]
  %v70 = vld [vmem:[%s1 + $0xc0] sm:$0xff]
  %v71 = vld [vmem:[%s1 + $0xc8] sm:$0xff]
  %v72 = vld [vmem:[%s1 + $0xd0] sm:$0xff]
  %v73 = vld [vmem:[%s1 + $0xd8] sm:$0xff]
  %v74 = vld [vmem:[%s1 + $0xe0] sm:$0xff]
  %v75 = vld [vmem:[%s1 + $0xe8] sm:$0xff]
  %v76 = vld [vmem:[%s1 + $0xf0] sm:$0xff]
  %v77 = vld [vmem:[%s1 + $0xf8] sm:$0xff]
  %v78 = vld [vmem:[%s1 + $0x100] sm:$0xff]
  %v79 = vld [vmem:[%s1 + $0x108] sm:$0xff]
  %v80 = vld [vmem:[%s1 + $0x110] sm:$0xff]
  %v81 = vld [vmem:[%s1 + $0x118] sm:$0xff]
  %v82 = vld [vmem:[%s1 + $0x120] sm:$0xff]
  %v83 = vld [vmem:[%s1 + $0x128] sm:$0xff]
  %v84 = vld [vmem:[%s1 + $0x130] sm:$0xff]
  %v85 = vld [vmem:[%s1 + $0x138] sm:$0xff]
  %v86 = vld [vmem:[%s1 + $0x140] sm:$0xff]
  %v87 = vld [vmem:[%s1 + $0x148] sm:$0xff]
  %v88 = vld [vmem:[%s1 + $0x150] sm:$0xff]
  %v89 = vld [vmem:[%s1 + $0x158] sm:$0xff]
  %v90 = vld [vmem:[%s1 + $0x160] sm:$0xff]
  %v91 = vld [vmem:[%s1 + $0x168] sm:$0xff]
  %v92 = vld [vmem:[%s1 + $0x170] sm:$0xff]
  %v93 = vld [vmem:[%s1 + $0x178] sm:$0xff]
  %v94 = vld [vmem:[%s1 + $0x180] sm:$0xff]
  %v95 = vld [vmem:[%s1 + $0x188] sm:$0xff]
  %v96 = vld [vmem:[%s1 + $0x190] sm:$0xff]
  %v97 = vld [vmem:[%s1 + $0x198] sm:$0xff]
  %v98 = vld [vmem:[%s1 + $0x1a0] sm:$0xff]
  %v99 = vld [vmem:[%s1 + $0x1a8] sm:$0xff]
  %v100 = vld [vmem:[%s1 + $0x1b0] sm:$0xff]
  %v101 = vld [vmem:[%s1 + $0x1b8] sm:$0xff]
  %v102 = vld [vmem:[%s1 + $0x1c0] sm:$0xff]
  %v103 = vld [vmem:[%s1 + $0x1c8] sm:$0xff]
  %v104 = vld [vmem:[%s1 + $0x1d0] sm:$0xff]
  %v105 = vld [vmem:[%s1 + $0x1d8] sm:$0xff]
  %v106 = vld [vmem:[%s1 + $0x1e0] sm:$0xff]
  %v107 = vld [vmem:[%s1 + $0x1e8] sm:$0xff]
  %v108 = vld [vmem:[%s1 + $0x1f0] sm:$0xff]
  %v109 = vld [vmem:[%s1 + $0x1f8] sm:$0xff]
  %v110 = vld [vmem:[%s1 + $0x200] sm:$0xff]
  %v111 = vld [vmem:[%s1 + $0x208] sm:$0xff]
  %v112 = vld [vmem:[%s1 + $0x210] sm:$0xff]
  %v113 = vld [vmem:[%s1 + $0x218] sm:$0xff]
  %v114 = vld [vmem:[%s1 + $0x220] sm:$0xff]
  %v115 = vld [vmem:[%s1 + $0x228] sm:$0xff]
  %v116 = vld [vmem:[%s1 + $0x230] sm:$0xff]
  %v117 = vld [vmem:[%s1 + $0x238] sm:$0xff]
  %v118 = vld [vmem:[%s1 + $0x240] sm:$0xff]
  %v119 = vld [vmem:[%s1 + $0x248] sm:$0xff]
  %v120 = vld [vmem:[%s1 + $0x250] sm:$0xff]
  %v121 = vld [vmem:[%s1 + $0x258] sm:$0xff]
  %v122 = vld [vmem:[%s1 + $0x260] sm:$0xff]
  %v123 = vld [vmem:[%s1 + $0x268] sm:$0xff]
  %v124 = vld [vmem:[%s1 + $0x270] sm:$0xff]
  %v125 = vld [vmem:[%s1 + $0x278] sm:$0xff]
  %v126 = vld [vmem:[%s1 + $0x280] sm:$0xff]
  %v127 = vld [vmem:[%s1 + $0x288] sm:$0xff]
  %v128 = vld [vmem:[%s1 + $0x290] sm:$0xff]
  %v129 = vld [vmem:[%s1 + $0x298] sm:$0xff]
  %v130 = vld [vmem:[%s1 + $0x2a0] sm:$0xff]
  %v131 = vld [vmem:[%s1 + $0x2a8] sm:$0xff]
  %v132 = vld [vmem:[%s1 + $0x2b0] sm:$0xff]
  %v133 = vld [vmem:[%s1 + $0x2b8] sm:$0xff]
  %v134 = vld [vmem:[%s1 + $0x2c0] sm:$0xff]
  %v135 = vld [vmem:[%s1 + $0x2c8] sm:$0xff]
  %v136 = vld [vmem:[%s1 + $0x2d0] sm:$0xff]
  %v137 = vld [vmem:[%s1 + $0x2d8] sm:$0xff]
  %v138 = vld [vmem:[%s1 + $0x2e0] sm:$0xff]
  %v139 = vld [vmem:[%s1 + $0x2e8] sm:$0xff]
  %v140 = vld [vmem:[%s1 + $0x2f0] sm:$0xff]
  %v141 = vld [vmem:[%s1 + $0x2f8] sm:$0xff]
  %v142 = vld [vmem:[%s1 + $0x300] sm:$0xff]
  %v143 = vld [vmem:[%s1 + $0x308] sm:$0xff]
  %v144 = vld [vmem:[%s1 + $0x310] sm:$0xff]
  %v145 = vld [vmem:[%s1 + $0x318] sm:$0xff]
  %v146 = vld [vmem:[%s1 + $0x320] sm:$0xff]
  %v147 = vld [vmem:[%s1 + $0x328] sm:$0xff]
  %v148 = vld [vmem:[%s1 + $0x330] sm:$0xff]
  %v149 = vld [vmem:[%s1 + $0x338] sm:$0xff]
  %v150 = vld [vmem:[%s1 + $0x340] sm:$0xff]
  %v151 = vld [vmem:[%s1 + $0x348] sm:$0xff]
  %v152 = vld [vmem:[%s1 + $0x350] sm:$0xff]
  %v153 = vld [vmem:[%s1 + $0x358] sm:$0xff]
  %v154 = vld [vmem:[%s1 + $0x360] sm:$0xff]
  %v155 = vld [vmem:[%s1 + $0x368] sm:$0xff]
  %v156 = vld [vmem:[%s1 + $0x370] sm:$0xff]
  %v157 = vld [vmem:[%s1 + $0x378] sm:$0xff]
  %v158 = vld [vmem:[%s1 + $0x380] sm:$0xff]
  %v159 = vld [vmem:[%s1 + $0x388] sm:$0xff]
  %v160 = vld [vmem:[%s1 + $0x390] sm:$0xff]
  %v161 = vld [vmem:[%s1 + $0x398] sm:$0xff]
  %v162 = vld [vmem:[%s1 + $0x3a0] sm:$0xff]
  %v163 = vld [vmem:[%s1 + $0x3a8] sm:$0xff]
  %v164 = vld [vmem:[%s1 + $0x3b0] sm:$0xff]
  %v165 = vld [vmem:[%s1 + $0x3b8] sm:$0xff]
  %v166 = vld [vmem:[%s1 + $0x3c0] sm:$0xff]
  %v167 = vld [vmem:[%s1 + $0x3c8] sm:$0xff]
  %v168 = vld [vmem:[%s1 + $0x3d0] sm:$0xff]
  %v169 = vld [vmem:[%s1 + $0x3d8] sm:$0xff]
  %v170 = vld [vmem:[%s1 + $0x3e0] sm:$0xff]
  %v171 = vld [vmem:[%s1 + $0x3e8] sm:$0xff]
  %v172 = vld [vmem:[%s1 + $0x3f0] sm:$0xff]
  %v173 = vld [vmem:[%s1 + $0x3f8] sm:$0xff]
  %v174 = vld [vmem:[%s1 + $0x400] sm:$0xff]
  %v175 = vld [vmem:[%s1 + $0x408] sm:$0xff]
  %v176 = vld [vmem:[%s1 + $0x410] sm:$0xff]
  %v177 = vld [vmem:[%s1 + $0x418] sm:$0xff]
  %v178 = vld [vmem:[%s1 + $0x420] sm:$0xff]
  %v179 = vld [vmem:[%s1 + $0x428] sm:$0xff]
  %v180 = vld [vmem:[%s1 + $0x430] sm:$0xff]
  %v181 = vld [vmem:[%s1 + $0x438] sm:$0xff]
  %v182 = vld [vmem:[%s1 + $0x440] sm:$0xff]
  %v183 = vld [vmem:[%s1 + $0x448] sm:$0xff]
  %v184 = vld [vmem:[%s1 + $0x450] sm:$0xff]
  %v185 = vld [vmem:[%s1 + $0x458] sm:$0xff]
  %v186 = vld [vmem:[%s1 + $0x460] sm:$0xff]
  %v187 = vld [vmem:[%s1 + $0x468] sm:$0xff]
  %v188 = vld [vmem:[%s1 + $0x470] sm:$0xff]
  %v189 = vld [vmem:[%s1 + $0x478] sm:$0xff]
  %v190 = vld [vmem:[%s1 + $0x480] sm:$0xff]
  %v191 = vld [vmem:[%s1 + $0x488] sm:$0xff]
  %v192 = vld [vmem:[%s1 + $0x490] sm:$0xff]
  %v193 = vld [vmem:[%s1 + $0x498] sm:$0xff]
  %v194 = vld [vmem:[%s1 + $0x4a0] sm:$0xff]
  %v195 = vld [vmem:[%s1 + $0x4a8] sm:$0xff]
  %v196 = vld [vmem:[%s1 + $0x4b0] sm:$0xff]
  %v197 = vld [vmem:[%s1 + $0x4b8] sm:$0xff]
  %v198 = vld [vmem:[%s1 + $0x4c0] sm:$0xff]
  %v199 = vld [vmem:[%s1 + $0x4c8] sm:$0xff]
  %v200 = vld [vmem:[%s1 + $0x4d0] sm:$0xff]
  %v201 = vld [vmem:[%s1 + $0x4d8] sm:$0xff]
  %v202 = vld [vmem:[%s1 + $0x4e0] sm:$0xff]
  %v203 = vld [vmem:[%s1 + $0x4e8] sm:$0xff]
  %v204 = vld [vmem:[%s1 + $0x4f0] sm:$0xff]
  %v205 = vld [vmem:[%s1 + $0x4f8] sm:$0xff]
  %v206 = vld [vmem:[%s1 + $0x500] sm:$0xff]
  %v207 = vld [vmem:[%s1 + $0x508] sm:$0xff]
  %v208 = vld [vmem:[%s1 + $0x510] sm:$0xff]
  %v209 = vld [vmem:[%s1 + $0x518] sm:$0xff]
  %v210 = vld [vmem:[%s1 + $0x520] sm:$0xff]
  %v211 = vld [vmem:[%s1 + $0x528] sm:$0xff]
  %v212 = vld [vmem:[%s1 + $0x530] sm:$0xff]
  %v213 = vld [vmem:[%s1 + $0x538] sm:$0xff]
  %v214 = vld [vmem:[%s1 + $0x540] sm:$0xff]
  %v215 = vld [vmem:[%s1 + $0x548] sm:$0xff]
  %v216 = vld [vmem:[%s1 + $0x550] sm:$0xff]
  %v217 = vld [vmem:[%s1 + $0x558] sm:$0xff]
  %v218 = vld [vmem:[%s1 + $0x560] sm:$0xff]
  %v219 = vld [vmem:[%s1 + $0x568] sm:$0xff]
  %v220 = vld [vmem:[%s1 + $0x570] sm:$0xff]
  %v221 = vld [vmem:[%s1 + $0x578] sm:$0xff]
  %v222 = vld [vmem:[%s1 + $0x580] sm:$0xff]
  %v223 = vld [vmem:[%s1 + $0x588] sm:$0xff]
  %v224 = vld [vmem:[%s1 + $0x590] sm:$0xff]
  %v225 = vld [vmem:[%s1 + $0x598] sm:$0xff]
  %v226 = vld [vmem:[%s1 + $0x5a0] sm:$0xff]
  %v227 = vld [vmem:[%s1 + $0x5a8] sm:$0xff]
  %v228 = vld [vmem:[%s1 + $0x5b0] sm:$0xff]
  %v229 = vld [vmem:[%s1 + $0x5b8] sm:$0xff]
  %v230 = vld [vmem:[%s1 + $0x5c0] sm:$0xff]
  %v231 = vld [vmem:[%s1 + $0x5c8] sm:$0xff]
  %v232 = vld [vmem:[%s1 + $0x5d0] sm:$0xff]
  %v233 = vld [vmem:[%s1 + $0x5d8] sm:$0xff]
  %v234 = vld [vmem:[%s1 + $0x5e0] sm:$0xff]
  %v235 = vld [vmem:[%s1 + $0x5e8] sm:$0xff]
  %v236 = vld [vmem:[%s1 + $0x5f0] sm:$0xff]
  %v237 = vld [vmem:[%s1 + $0x5f8] sm:$0xff]
  %v238 = vld [vmem:[%s1 + $0x600] sm:$0xff]
  %v239 = vld [vmem:[%s1 + $0x608] sm:$0xff]
  %v240 = vld [vmem:[%s1 + $0x610] sm:$0xff]
  %v241 = vld [vmem:[%s1 + $0x618] sm:$0xff]
  %v242 = vld [vmem:[%s1 + $0x620] sm:$0xff]
  %v243 = vld [vmem:[%s1 + $0x628] sm:$0xff]
  %v244 = vld [vmem:[%s1 + $0x630] sm:$0xff]
  %v245 = vld [vmem:[%s1 + $0x638] sm:$0xff]
  %v246 = vld [vmem:[%s1 + $0x640] sm:$0xff]
  %v247 = vld [vmem:[%s1 + $0x648] sm:$0xff]
  %v248 = vld [vmem:[%s1 + $0x650] sm:$0xff]
  %v249 = vld [vmem:[%s1 + $0x658] sm:$0xff]
  %v250 = vld [vmem:[%s1 + $0x660] sm:$0xff]
  %v251 = vld [vmem:[%s1 + $0x668] sm:$0xff]
  %v252 = vld [vmem:[%s1 + $0x670] sm:$0xff]
  %v253 = vld [vmem:[%s1 + $0x678] sm:$0xff]
  %v254 = vld [vmem:[%s1 + $0x680] sm:$0xff]
  %v255 = vld [vmem:[%s1 + $0x688] sm:$0xff]
  %v256 = vld [vmem:[%s1 + $0x690] sm:$0xff]
  %v257 = vld [vmem:[%s1 + $0x698] sm:$0xff]
  %v258 = vld [vmem:[%s1 + $0x6a0] sm:$0xff]
  %v259 = vld [vmem:[%s1 + $0x6a8] sm:$0xff]
  %v260 = vld [vmem:[%s1 + $0x6b0] sm:$0xff]
  %v261 = vld [vmem:[%s1 + $0x6b8] sm:$0xff]
  %v262 = vld [vmem:[%s1 + $0x6c0] sm:$0xff]
  %v263 = vld [vmem:[%s1 + $0x6c8] sm:$0xff]
  %v264 = vld [vmem:[%s1 + $0x6d0] sm:$0xff]
  %v265 = vld [vmem:[%s1 + $0x6d8] sm:$0xff]
  %v266 = vld [vmem:[%s1 + $0x6e0] sm:$0xff]
  %v267 = vld [vmem:[%s1 + $0x6e8] sm:$0xff]
  %v268 = vld [vmem:[%s1 + $0x6f0] sm:$0xff]
  %v269 = vld [vmem:[%s1 + $0x6f8] sm:$0xff]
  %v270 = vld [vmem:[%s1 + $0x700] sm:$0xff]
  %v271 = vld [vmem:[%s1 + $0x708] sm:$0xff]
  %v272 = vld [vmem:[%s1 + $0x710] sm:$0xff]
  %v273 = vld [vmem:[%s1 + $0x718] sm:$0xff]
  %v274 = vld [vmem:[%s1 + $0x720] sm:$0xff]
  %v275 = vld [vmem:[%s1 + $0x728] sm:$0xff]
  %v276 = vld [vmem:[%s1 + $0x730] sm:$0xff]
  %v277 = vld [vmem:[%s1 + $0x738] sm:$0xff]
  %v278 = vld [vmem:[%s1 + $0x740] sm:$0xff]
  %v279 = vld [vmem:[%s1 + $0x748] sm:$0xff]
  %v280 = vld [vmem:[%s1 + $0x750] sm:$0xff]
  %v281 = vld [vmem:[%s1 + $0x758] sm:$0xff]
  %v282 = vld [vmem:[%s1 + $0x760] sm:$0xff]
  %v283 = vld [vmem:[%s1 + $0x768] sm:$0xff]
  %v284 = vld [vmem:[%s1 + $0x770] sm:$0xff]
  %v285 = vld [vmem:[%s1 + $0x778] sm:$0xff]
  %v286 = vld [vmem:[%s1 + $0x780] sm:$0xff]
  %v287 = vld [vmem:[%s1 + $0x788] sm:$0xff]
  %v288 = vld [vmem:[%s1 + $0x790] sm:$0xff]
  %v289 = vld [vmem:[%s1 + $0x798] sm:$0xff]
  %v290 = vld [vmem:[%s1 + $0x7a0] sm:$0xff]
  %v291 = vld [vmem:[%s1 + $0x7a8] sm:$0xff]
  %v292 = vld [vmem:[%s1 + $0x7b0] sm:$0xff]
  %v293 = vld [vmem:[%s1 + $0x7b8] sm:$0xff]
  %v294 = vld [vmem:[%s1 + $0x7c0] sm:$0xff]
  %v295 = vld [vmem:[%s1 + $0x7c8] sm:$0xff]
  %v296 = vld [vmem:[%s1 + $0x7d0] sm:$0xff]
  %v297 = vld [vmem:[%s1 + $0x7d8] sm:$0xff]
  %v298 = vld [vmem:[%s1 + $0x7e0] sm:$0xff]
  %v299 = vld [vmem:[%s1 + $0x7e8] sm:$0xff]
  %v300 = vld [vmem:[%s1 + $0x7f0] sm:$0xff]
  %v301 = vld [vmem:[%s1 + $0x7f8] sm:$0xff]
  %v334 = vunpack.c.l.b16 %v14
  %v335 = vunpack.c.h.b16 %v14
  %v336 = vunpack.c.l.b16 %v15
  %v337 = vunpack.c.h.b16 %v15
  %v338 = vunpack.c.l.b16 %v16
  %v339 = vunpack.c.h.b16 %v16
  %v340 = vunpack.c.l.b16 %v17
  %v341 = vunpack.c.h.b16 %v17
  %v342 = vunpack.c.l.b16 %v18
  %v343 = vunpack.c.h.b16 %v18
  %v344 = vunpack.c.l.b16 %v19
  %v345 = vunpack.c.h.b16 %v19
  %v346 = vunpack.c.l.b16 %v20
  %v347 = vunpack.c.h.b16 %v20
  %v348 = vunpack.c.l.b16 %v21
  %v349 = vunpack.c.h.b16 %v21
  %v350 = vunpack.c.l.b16 %v22
  %v351 = vunpack.c.h.b16 %v22
  %v352 = vunpack.c.l.b16 %v23
  %v353 = vunpack.c.h.b16 %v23
  %v354 = vunpack.c.l.b16 %v24
  %v355 = vunpack.c.h.b16 %v24
  %v356 = vunpack.c.l.b16 %v25
  %v357 = vunpack.c.h.b16 %v25
  %v358 = vunpack.c.l.b16 %v26
  %v359 = vunpack.c.h.b16 %v26
  %v360 = vunpack.c.l.b16 %v27
  %v361 = vunpack.c.h.b16 %v27
  %v362 = vunpack.c.l.b16 %v28
  %v363 = vunpack.c.h.b16 %v28
  %v364 = vunpack.c.l.b16 %v29
  %v365 = vunpack.c.h.b16 %v29
  %v366 = vunpack.c.l.b16 %v30
  %v367 = vunpack.c.h.b16 %v30
  %v368 = vunpack.c.l.b16 %v31
  %v369 = vunpack.c.h.b16 %v31
  %v370 = vunpack.c.l.b16 %v32
  %v371 = vunpack.c.h.b16 %v32
  %v372 = vunpack.c.l.b16 %v33
  %v373 = vunpack.c.h.b16 %v33
  %v374 = vunpack.c.l.b16 %v34
  %v375 = vunpack.c.h.b16 %v34
  %v376 = vunpack.c.l.b16 %v35
  %v377 = vunpack.c.h.b16 %v35
  %v378 = vunpack.c.l.b16 %v36
  %v379 = vunpack.c.h.b16 %v36
  %v380 = vunpack.c.l.b16 %v37
  %v381 = vunpack.c.h.b16 %v37
  %v382 = vunpack.c.l.b16 %v38
  %v383 = vunpack.c.h.b16 %v38
  %v384 = vunpack.c.l.b16 %v39
  %v385 = vunpack.c.h.b16 %v39
  %v386 = vunpack.c.l.b16 %v40
  %v387 = vunpack.c.h.b16 %v40
  %v388 = vunpack.c.l.b16 %v41
  %v389 = vunpack.c.h.b16 %v41
  %v390 = vunpack.c.l.b16 %v42
  %v391 = vunpack.c.h.b16 %v42
  %v392 = vunpack.c.l.b16 %v43
  %v393 = vunpack.c.h.b16 %v43
  %v394 = vunpack.c.l.b16 %v44
  %v395 = vunpack.c.h.b16 %v44
  %v396 = vunpack.c.l.b16 %v45
  %v397 = vunpack.c.h.b16 %v45
  %v398 = vpack.c.b16 %v350, %v334
  %v399 = vpack.c.b16 %v351, %v335
  %v400 = vpack.c.b16 %v352, %v336
  %v401 = vpack.c.b16 %v353, %v337
  %v402 = vpack.c.b16 %v354, %v338
  %v403 = vpack.c.b16 %v355, %v339
  %v404 = vpack.c.b16 %v356, %v340
  %v405 = vpack.c.b16 %v357, %v341
  %v406 = vpack.c.b16 %v358, %v342
  %v407 = vpack.c.b16 %v359, %v343
  %v408 = vpack.c.b16 %v360, %v344
  %v409 = vpack.c.b16 %v361, %v345
  %v410 = vpack.c.b16 %v362, %v346
  %v411 = vpack.c.b16 %v363, %v347
  %v412 = vpack.c.b16 %v364, %v348
  %v413 = vpack.c.b16 %v365, %v349
  %v414 = vpack.c.b16 %v382, %v366
  %v415 = vpack.c.b16 %v383, %v367
  %v416 = vpack.c.b16 %v384, %v368
  %v417 = vpack.c.b16 %v385, %v369
  %v418 = vpack.c.b16 %v386, %v370
  %v419 = vpack.c.b16 %v387, %v371
  %v420 = vpack.c.b16 %v388, %v372
  %v421 = vpack.c.b16 %v389, %v373
  %v422 = vpack.c.b16 %v390, %v374
  %v423 = vpack.c.b16 %v391, %v375
  %v424 = vpack.c.b16 %v392, %v376
  %v425 = vpack.c.b16 %v393, %v377
  %v426 = vpack.c.b16 %v394, %v378
  %v427 = vpack.c.b16 %v395, %v379
  %v428 = vpack.c.b16 %v396, %v380
  %v429 = vpack.c.b16 %v397, %v381
  %v718 = vunpack.c.l.b16 %v46
  %v719 = vunpack.c.h.b16 %v46
  %v720 = vunpack.c.l.b16 %v47
  %v721 = vunpack.c.h.b16 %v47
  %v722 = vunpack.c.l.b16 %v48
  %v723 = vunpack.c.h.b16 %v48
  %v724 = vunpack.c.l.b16 %v49
  %v725 = vunpack.c.h.b16 %v49
  %v726 = vunpack.c.l.b16 %v50
  %v727 = vunpack.c.h.b16 %v50
  %v728 = vunpack.c.l.b16 %v51
  %v729 = vunpack.c.h.b16 %v51
  %v730 = vunpack.c.l.b16 %v52
  %v731 = vunpack.c.h.b16 %v52
  %v732 = vunpack.c.l.b16 %v53
  %v733 = vunpack.c.h.b16 %v53
  %v734 = vunpack.c.l.b16 %v54
  %v735 = vunpack.c.h.b16 %v54
  %v736 = vunpack.c.l.b16 %v55
  %v737 = vunpack.c.h.b16 %v55
  %v738 = vunpack.c.l.b16 %v56
  %v739 = vunpack.c.h.b16 %v56
  %v740 = vunpack.c.l.b16 %v57
  %v741 = vunpack.c.h.b16 %v57
  %v742 = vunpack.c.l.b16 %v58
  %v743 = vunpack.c.h.b16 %v58
  %v744 = vunpack.c.l.b16 %v59
  %v745 = vunpack.c.h.b16 %v59
  %v746 = vunpack.c.l.b16 %v60
  %v747 = vunpack.c.h.b16 %v60
  %v748 = vunpack.c.l.b16 %v61
  %v749 = vunpack.c.h.b16 %v61
  %v750 = vunpack.c.l.b16 %v62
  %v751 = vunpack.c.h.b16 %v62
  %v752 = vunpack.c.l.b16 %v63
  %v753 = vunpack.c.h.b16 %v63
  %v754 = vunpack.c.l.b16 %v64
  %v755 = vunpack.c.h.b16 %v64
  %v756 = vunpack.c.l.b16 %v65
  %v757 = vunpack.c.h.b16 %v65
  %v758 = vunpack.c.l.b16 %v66
  %v759 = vunpack.c.h.b16 %v66
  %v760 = vunpack.c.l.b16 %v67
  %v761 = vunpack.c.h.b16 %v67
  %v762 = vunpack.c.l.b16 %v68
  %v763 = vunpack.c.h.b16 %v68
  %v764 = vunpack.c.l.b16 %v69
  %v765 = vunpack.c.h.b16 %v69
  %v766 = vunpack.c.l.b16 %v70
  %v767 = vunpack.c.h.b16 %v70
  %v768 = vunpack.c.l.b16 %v71
  %v769 = vunpack.c.h.b16 %v71
  %v770 = vunpack.c.l.b16 %v72
  %v771 = vunpack.c.h.b16 %v72
  %v772 = vunpack.c.l.b16 %v73
  %v773 = vunpack.c.h.b16 %v73
  %v774 = vunpack.c.l.b16 %v74
  %v775 = vunpack.c.h.b16 %v74
  %v776 = vunpack.c.l.b16 %v75
  %v777 = vunpack.c.h.b16 %v75
  %v778 = vunpack.c.l.b16 %v76
  %v779 = vunpack.c.h.b16 %v76
  %v780 = vunpack.c.l.b16 %v77
  %v781 = vunpack.c.h.b16 %v77
  %v782 = vunpack.c.l.b16 %v78
  %v783 = vunpack.c.h.b16 %v78
  %v784 = vunpack.c.l.b16 %v79
  %v785 = vunpack.c.h.b16 %v79
  %v786 = vunpack.c.l.b16 %v80
  %v787 = vunpack.c.h.b16 %v80
  %v788 = vunpack.c.l.b16 %v81
  %v789 = vunpack.c.h.b16 %v81
  %v790 = vunpack.c.l.b16 %v82
  %v791 = vunpack.c.h.b16 %v82
  %v792 = vunpack.c.l.b16 %v83
  %v793 = vunpack.c.h.b16 %v83
  %v794 = vunpack.c.l.b16 %v84
  %v795 = vunpack.c.h.b16 %v84
  %v796 = vunpack.c.l.b16 %v85
  %v797 = vunpack.c.h.b16 %v85
  %v798 = vunpack.c.l.b16 %v86
  %v799 = vunpack.c.h.b16 %v86
  %v800 = vunpack.c.l.b16 %v87
  %v801 = vunpack.c.h.b16 %v87
  %v802 = vunpack.c.l.b16 %v88
  %v803 = vunpack.c.h.b16 %v88
  %v804 = vunpack.c.l.b16 %v89
  %v805 = vunpack.c.h.b16 %v89
  %v806 = vunpack.c.l.b16 %v90
  %v807 = vunpack.c.h.b16 %v90
  %v808 = vunpack.c.l.b16 %v91
  %v809 = vunpack.c.h.b16 %v91
  %v810 = vunpack.c.l.b16 %v92
  %v811 = vunpack.c.h.b16 %v92
  %v812 = vunpack.c.l.b16 %v93
  %v813 = vunpack.c.h.b16 %v93
  %v814 = vunpack.c.l.b16 %v94
  %v815 = vunpack.c.h.b16 %v94
  %v816 = vunpack.c.l.b16 %v95
  %v817 = vunpack.c.h.b16 %v95
  %v818 = vunpack.c.l.b16 %v96
  %v819 = vunpack.c.h.b16 %v96
  %v820 = vunpack.c.l.b16 %v97
  %v821 = vunpack.c.h.b16 %v97
  %v822 = vunpack.c.l.b16 %v98
  %v823 = vunpack.c.h.b16 %v98
  %v824 = vunpack.c.l.b16 %v99
  %v825 = vunpack.c.h.b16 %v99
  %v826 = vunpack.c.l.b16 %v100
  %v827 = vunpack.c.h.b16 %v100
  %v828 = vunpack.c.l.b16 %v101
  %v829 = vunpack.c.h.b16 %v101
  %v830 = vunpack.c.l.b16 %v102
  %v831 = vunpack.c.h.b16 %v102
  %v832 = vunpack.c.l.b16 %v103
  %v833 = vunpack.c.h.b16 %v103
  %v834 = vunpack.c.l.b16 %v104
  %v835 = vunpack.c.h.b16 %v104
  %v836 = vunpack.c.l.b16 %v105
  %v837 = vunpack.c.h.b16 %v105
  %v838 = vunpack.c.l.b16 %v106
  %v839 = vunpack.c.h.b16 %v106
  %v840 = vunpack.c.l.b16 %v107
  %v841 = vunpack.c.h.b16 %v107
  %v842 = vunpack.c.l.b16 %v108
  %v843 = vunpack.c.h.b16 %v108
  %v844 = vunpack.c.l.b16 %v109
  %v845 = vunpack.c.h.b16 %v109
  %v846 = vunpack.c.l.b16 %v110
  %v847 = vunpack.c.h.b16 %v110
  %v848 = vunpack.c.l.b16 %v111
  %v849 = vunpack.c.h.b16 %v111
  %v850 = vunpack.c.l.b16 %v112
  %v851 = vunpack.c.h.b16 %v112
  %v852 = vunpack.c.l.b16 %v113
  %v853 = vunpack.c.h.b16 %v113
  %v854 = vunpack.c.l.b16 %v114
  %v855 = vunpack.c.h.b16 %v114
  %v856 = vunpack.c.l.b16 %v115
  %v857 = vunpack.c.h.b16 %v115
  %v858 = vunpack.c.l.b16 %v116
  %v859 = vunpack.c.h.b16 %v116
  %v860 = vunpack.c.l.b16 %v117
  %v861 = vunpack.c.h.b16 %v117
  %v862 = vunpack.c.l.b16 %v118
  %v863 = vunpack.c.h.b16 %v118
  %v864 = vunpack.c.l.b16 %v119
  %v865 = vunpack.c.h.b16 %v119
  %v866 = vunpack.c.l.b16 %v120
  %v867 = vunpack.c.h.b16 %v120
  %v868 = vunpack.c.l.b16 %v121
  %v869 = vunpack.c.h.b16 %v121
  %v870 = vunpack.c.l.b16 %v122
  %v871 = vunpack.c.h.b16 %v122
  %v872 = vunpack.c.l.b16 %v123
  %v873 = vunpack.c.h.b16 %v123
  %v874 = vunpack.c.l.b16 %v124
  %v875 = vunpack.c.h.b16 %v124
  %v876 = vunpack.c.l.b16 %v125
  %v877 = vunpack.c.h.b16 %v125
  %v878 = vunpack.c.l.b16 %v126
  %v879 = vunpack.c.h.b16 %v126
  %v880 = vunpack.c.l.b16 %v127
  %v881 = vunpack.c.h.b16 %v127
  %v882 = vunpack.c.l.b16 %v128
  %v883 = vunpack.c.h.b16 %v128
  %v884 = vunpack.c.l.b16 %v129
  %v885 = vunpack.c.h.b16 %v129
  %v886 = vunpack.c.l.b16 %v130
  %v887 = vunpack.c.h.b16 %v130
  %v888 = vunpack.c.l.b16 %v131
  %v889 = vunpack.c.h.b16 %v131
  %v890 = vunpack.c.l.b16 %v132
  %v891 = vunpack.c.h.b16 %v132
  %v892 = vunpack.c.l.b16 %v133
  %v893 = vunpack.c.h.b16 %v133
  %v894 = vunpack.c.l.b16 %v134
  %v895 = vunpack.c.h.b16 %v134
  %v896 = vunpack.c.l.b16 %v135
  %v897 = vunpack.c.h.b16 %v135
  %v898 = vunpack.c.l.b16 %v136
  %v899 = vunpack.c.h.b16 %v136
  %v900 = vunpack.c.l.b16 %v137
  %v901 = vunpack.c.h.b16 %v137
  %v902 = vunpack.c.l.b16 %v138
  %v903 = vunpack.c.h.b16 %v138
  %v904 = vunpack.c.l.b16 %v139
  %v905 = vunpack.c.h.b16 %v139
  %v906 = vunpack.c.l.b16 %v140
  %v907 = vunpack.c.h.b16 %v140
  %v908 = vunpack.c.l.b16 %v141
  %v909 = vunpack.c.h.b16 %v141
  %v910 = vunpack.c.l.b16 %v142
  %v911 = vunpack.c.h.b16 %v142
  %v912 = vunpack.c.l.b16 %v143
  %v913 = vunpack.c.h.b16 %v143
  %v914 = vunpack.c.l.b16 %v144
  %v915 = vunpack.c.h.b16 %v144
  %v916 = vunpack.c.l.b16 %v145
  %v917 = vunpack.c.h.b16 %v145
  %v918 = vunpack.c.l.b16 %v146
  %v919 = vunpack.c.h.b16 %v146
  %v920 = vunpack.c.l.b16 %v147
  %v921 = vunpack.c.h.b16 %v147
  %v922 = vunpack.c.l.b16 %v148
  %v923 = vunpack.c.h.b16 %v148
  %v924 = vunpack.c.l.b16 %v149
  %v925 = vunpack.c.h.b16 %v149
  %v926 = vunpack.c.l.b16 %v150
  %v927 = vunpack.c.h.b16 %v150
  %v928 = vunpack.c.l.b16 %v151
  %v929 = vunpack.c.h.b16 %v151
  %v930 = vunpack.c.l.b16 %v152
  %v931 = vunpack.c.h.b16 %v152
  %v932 = vunpack.c.l.b16 %v153
  %v933 = vunpack.c.h.b16 %v153
  %v934 = vunpack.c.l.b16 %v154
  %v935 = vunpack.c.h.b16 %v154
  %v936 = vunpack.c.l.b16 %v155
  %v937 = vunpack.c.h.b16 %v155
  %v938 = vunpack.c.l.b16 %v156
  %v939 = vunpack.c.h.b16 %v156
  %v940 = vunpack.c.l.b16 %v157
  %v941 = vunpack.c.h.b16 %v157
  %v942 = vunpack.c.l.b16 %v158
  %v943 = vunpack.c.h.b16 %v158
  %v944 = vunpack.c.l.b16 %v159
  %v945 = vunpack.c.h.b16 %v159
  %v946 = vunpack.c.l.b16 %v160
  %v947 = vunpack.c.h.b16 %v160
  %v948 = vunpack.c.l.b16 %v161
  %v949 = vunpack.c.h.b16 %v161
  %v950 = vunpack.c.l.b16 %v162
  %v951 = vunpack.c.h.b16 %v162
  %v952 = vunpack.c.l.b16 %v163
  %v953 = vunpack.c.h.b16 %v163
  %v954 = vunpack.c.l.b16 %v164
  %v955 = vunpack.c.h.b16 %v164
  %v956 = vunpack.c.l.b16 %v165
  %v957 = vunpack.c.h.b16 %v165
  %v958 = vunpack.c.l.b16 %v166
  %v959 = vunpack.c.h.b16 %v166
  %v960 = vunpack.c.l.b16 %v167
  %v961 = vunpack.c.h.b16 %v167
  %v962 = vunpack.c.l.b16 %v168
  %v963 = vunpack.c.h.b16 %v168
  %v964 = vunpack.c.l.b16 %v169
  %v965 = vunpack.c.h.b16 %v169
  %v966 = vunpack.c.l.b16 %v170
  %v967 = vunpack.c.h.b16 %v170
  %v968 = vunpack.c.l.b16 %v171
  %v969 = vunpack.c.h.b16 %v171
  %v970 = vunpack.c.l.b16 %v172
  %v971 = vunpack.c.h.b16 %v172
  %v972 = vunpack.c.l.b16 %v173
  %v973 = vunpack.c.h.b16 %v173
  %v974 = vunpack.c.l.b16 %v174
  %v975 = vunpack.c.h.b16 %v174
  %v976 = vunpack.c.l.b16 %v175
  %v977 = vunpack.c.h.b16 %v175
  %v978 = vunpack.c.l.b16 %v176
  %v979 = vunpack.c.h.b16 %v176
  %v980 = vunpack.c.l.b16 %v177
  %v981 = vunpack.c.h.b16 %v177
  %v982 = vunpack.c.l.b16 %v178
  %v983 = vunpack.c.h.b16 %v178
  %v984 = vunpack.c.l.b16 %v179
  %v985 = vunpack.c.h.b16 %v179
  %v986 = vunpack.c.l.b16 %v180
  %v987 = vunpack.c.h.b16 %v180
  %v988 = vunpack.c.l.b16 %v181
  %v989 = vunpack.c.h.b16 %v181
  %v990 = vunpack.c.l.b16 %v182
  %v991 = vunpack.c.h.b16 %v182
  %v992 = vunpack.c.l.b16 %v183
  %v993 = vunpack.c.h.b16 %v183
  %v994 = vunpack.c.l.b16 %v184
  %v995 = vunpack.c.h.b16 %v184
  %v996 = vunpack.c.l.b16 %v185
  %v997 = vunpack.c.h.b16 %v185
  %v998 = vunpack.c.l.b16 %v186
  %v999 = vunpack.c.h.b16 %v186
  %v1000 = vunpack.c.l.b16 %v187
  %v1001 = vunpack.c.h.b16 %v187
  %v1002 = vunpack.c.l.b16 %v188
  %v1003 = vunpack.c.h.b16 %v188
  %v1004 = vunpack.c.l.b16 %v189
  %v1005 = vunpack.c.h.b16 %v189
  %v1006 = vunpack.c.l.b16 %v190
  %v1007 = vunpack.c.h.b16 %v190
  %v1008 = vunpack.c.l.b16 %v191
  %v1009 = vunpack.c.h.b16 %v191
  %v1010 = vunpack.c.l.b16 %v192
  %v1011 = vunpack.c.h.b16 %v192
  %v1012 = vunpack.c.l.b16 %v193
  %v1013 = vunpack.c.h.b16 %v193
  %v1014 = vunpack.c.l.b16 %v194
  %v1015 = vunpack.c.h.b16 %v194
  %v1016 = vunpack.c.l.b16 %v195
  %v1017 = vunpack.c.h.b16 %v195
  %v1018 = vunpack.c.l.b16 %v196
  %v1019 = vunpack.c.h.b16 %v196
  %v1020 = vunpack.c.l.b16 %v197
  %v1021 = vunpack.c.h.b16 %v197
  %v1022 = vunpack.c.l.b16 %v198
  %v1023 = vunpack.c.h.b16 %v198
  %v1024 = vunpack.c.l.b16 %v199
  %v1025 = vunpack.c.h.b16 %v199
  %v1026 = vunpack.c.l.b16 %v200
  %v1027 = vunpack.c.h.b16 %v200
  %v1028 = vunpack.c.l.b16 %v201
  %v1029 = vunpack.c.h.b16 %v201
  %v1030 = vunpack.c.l.b16 %v202
  %v1031 = vunpack.c.h.b16 %v202
  %v1032 = vunpack.c.l.b16 %v203
  %v1033 = vunpack.c.h.b16 %v203
  %v1034 = vunpack.c.l.b16 %v204
  %v1035 = vunpack.c.h.b16 %v204
  %v1036 = vunpack.c.l.b16 %v205
  %v1037 = vunpack.c.h.b16 %v205
  %v1038 = vunpack.c.l.b16 %v206
  %v1039 = vunpack.c.h.b16 %v206
  %v1040 = vunpack.c.l.b16 %v207
  %v1041 = vunpack.c.h.b16 %v207
  %v1042 = vunpack.c.l.b16 %v208
  %v1043 = vunpack.c.h.b16 %v208
  %v1044 = vunpack.c.l.b16 %v209
  %v1045 = vunpack.c.h.b16 %v209
  %v1046 = vunpack.c.l.b16 %v210
  %v1047 = vunpack.c.h.b16 %v210
  %v1048 = vunpack.c.l.b16 %v211
  %v1049 = vunpack.c.h.b16 %v211
  %v1050 = vunpack.c.l.b16 %v212
  %v1051 = vunpack.c.h.b16 %v212
  %v1052 = vunpack.c.l.b16 %v213
  %v1053 = vunpack.c.h.b16 %v213
  %v1054 = vunpack.c.l.b16 %v214
  %v1055 = vunpack.c.h.b16 %v214
  %v1056 = vunpack.c.l.b16 %v215
  %v1057 = vunpack.c.h.b16 %v215
  %v1058 = vunpack.c.l.b16 %v216
  %v1059 = vunpack.c.h.b16 %v216
  %v1060 = vunpack.c.l.b16 %v217
  %v1061 = vunpack.c.h.b16 %v217
  %v1062 = vunpack.c.l.b16 %v218
  %v1063 = vunpack.c.h.b16 %v218
  %v1064 = vunpack.c.l.b16 %v219
  %v1065 = vunpack.c.h.b16 %v219
  %v1066 = vunpack.c.l.b16 %v220
  %v1067 = vunpack.c.h.b16 %v220
  %v1068 = vunpack.c.l.b16 %v221
  %v1069 = vunpack.c.h.b16 %v221
  %v1070 = vunpack.c.l.b16 %v222
  %v1071 = vunpack.c.h.b16 %v222
  %v1072 = vunpack.c.l.b16 %v223
  %v1073 = vunpack.c.h.b16 %v223
  %v1074 = vunpack.c.l.b16 %v224
  %v1075 = vunpack.c.h.b16 %v224
  %v1076 = vunpack.c.l.b16 %v225
  %v1077 = vunpack.c.h.b16 %v225
  %v1078 = vunpack.c.l.b16 %v226
  %v1079 = vunpack.c.h.b16 %v226
  %v1080 = vunpack.c.l.b16 %v227
  %v1081 = vunpack.c.h.b16 %v227
  %v1082 = vunpack.c.l.b16 %v228
  %v1083 = vunpack.c.h.b16 %v228
  %v1084 = vunpack.c.l.b16 %v229
  %v1085 = vunpack.c.h.b16 %v229
  %v1086 = vunpack.c.l.b16 %v230
  %v1087 = vunpack.c.h.b16 %v230
  %v1088 = vunpack.c.l.b16 %v231
  %v1089 = vunpack.c.h.b16 %v231
  %v1090 = vunpack.c.l.b16 %v232
  %v1091 = vunpack.c.h.b16 %v232
  %v1092 = vunpack.c.l.b16 %v233
  %v1093 = vunpack.c.h.b16 %v233
  %v1094 = vunpack.c.l.b16 %v234
  %v1095 = vunpack.c.h.b16 %v234
  %v1096 = vunpack.c.l.b16 %v235
  %v1097 = vunpack.c.h.b16 %v235
  %v1098 = vunpack.c.l.b16 %v236
  %v1099 = vunpack.c.h.b16 %v236
  %v1100 = vunpack.c.l.b16 %v237
  %v1101 = vunpack.c.h.b16 %v237
  %v1102 = vunpack.c.l.b16 %v238
  %v1103 = vunpack.c.h.b16 %v238
  %v1104 = vunpack.c.l.b16 %v239
  %v1105 = vunpack.c.h.b16 %v239
  %v1106 = vunpack.c.l.b16 %v240
  %v1107 = vunpack.c.h.b16 %v240
  %v1108 = vunpack.c.l.b16 %v241
  %v1109 = vunpack.c.h.b16 %v241
  %v1110 = vunpack.c.l.b16 %v242
  %v1111 = vunpack.c.h.b16 %v242
  %v1112 = vunpack.c.l.b16 %v243
  %v1113 = vunpack.c.h.b16 %v243
  %v1114 = vunpack.c.l.b16 %v244
  %v1115 = vunpack.c.h.b16 %v244
  %v1116 = vunpack.c.l.b16 %v245
  %v1117 = vunpack.c.h.b16 %v245
  %v1118 = vunpack.c.l.b16 %v246
  %v1119 = vunpack.c.h.b16 %v246
  %v1120 = vunpack.c.l.b16 %v247
  %v1121 = vunpack.c.h.b16 %v247
  %v1122 = vunpack.c.l.b16 %v248
  %v1123 = vunpack.c.h.b16 %v248
  %v1124 = vunpack.c.l.b16 %v249
  %v1125 = vunpack.c.h.b16 %v249
  %v1126 = vunpack.c.l.b16 %v250
  %v1127 = vunpack.c.h.b16 %v250
  %v1128 = vunpack.c.l.b16 %v251
  %v1129 = vunpack.c.h.b16 %v251
  %v1130 = vunpack.c.l.b16 %v252
  %v1131 = vunpack.c.h.b16 %v252
  %v1132 = vunpack.c.l.b16 %v253
  %v1133 = vunpack.c.h.b16 %v253
  %v1134 = vunpack.c.l.b16 %v254
  %v1135 = vunpack.c.h.b16 %v254
  %v1136 = vunpack.c.l.b16 %v255
  %v1137 = vunpack.c.h.b16 %v255
  %v1138 = vunpack.c.l.b16 %v256
  %v1139 = vunpack.c.h.b16 %v256
  %v1140 = vunpack.c.l.b16 %v257
  %v1141 = vunpack.c.h.b16 %v257
  %v1142 = vunpack.c.l.b16 %v258
  %v1143 = vunpack.c.h.b16 %v258
  %v1144 = vunpack.c.l.b16 %v259
  %v1145 = vunpack.c.h.b16 %v259
  %v1146 = vunpack.c.l.b16 %v260
  %v1147 = vunpack.c.h.b16 %v260
  %v1148 = vunpack.c.l.b16 %v261
  %v1149 = vunpack.c.h.b16 %v261
  %v1150 = vunpack.c.l.b16 %v262
  %v1151 = vunpack.c.h.b16 %v262
  %v1152 = vunpack.c.l.b16 %v263
  %v1153 = vunpack.c.h.b16 %v263
  %v1154 = vunpack.c.l.b16 %v264
  %v1155 = vunpack.c.h.b16 %v264
  %v1156 = vunpack.c.l.b16 %v265
  %v1157 = vunpack.c.h.b16 %v265
  %v1158 = vunpack.c.l.b16 %v266
  %v1159 = vunpack.c.h.b16 %v266
  %v1160 = vunpack.c.l.b16 %v267
  %v1161 = vunpack.c.h.b16 %v267
  %v1162 = vunpack.c.l.b16 %v268
  %v1163 = vunpack.c.h.b16 %v268
  %v1164 = vunpack.c.l.b16 %v269
  %v1165 = vunpack.c.h.b16 %v269
  %v1166 = vunpack.c.l.b16 %v270
  %v1167 = vunpack.c.h.b16 %v270
  %v1168 = vunpack.c.l.b16 %v271
  %v1169 = vunpack.c.h.b16 %v271
  %v1170 = vunpack.c.l.b16 %v272
  %v1171 = vunpack.c.h.b16 %v272
  %v1172 = vunpack.c.l.b16 %v273
  %v1173 = vunpack.c.h.b16 %v273
  %v1174 = vunpack.c.l.b16 %v274
  %v1175 = vunpack.c.h.b16 %v274
  %v1176 = vunpack.c.l.b16 %v275
  %v1177 = vunpack.c.h.b16 %v275
  %v1178 = vunpack.c.l.b16 %v276
  %v1179 = vunpack.c.h.b16 %v276
  %v1180 = vunpack.c.l.b16 %v277
  %v1181 = vunpack.c.h.b16 %v277
  %v1182 = vunpack.c.l.b16 %v278
  %v1183 = vunpack.c.h.b16 %v278
  %v1184 = vunpack.c.l.b16 %v279
  %v1185 = vunpack.c.h.b16 %v279
  %v1186 = vunpack.c.l.b16 %v280
  %v1187 = vunpack.c.h.b16 %v280
  %v1188 = vunpack.c.l.b16 %v281
  %v1189 = vunpack.c.h.b16 %v281
  %v1190 = vunpack.c.l.b16 %v282
  %v1191 = vunpack.c.h.b16 %v282
  %v1192 = vunpack.c.l.b16 %v283
  %v1193 = vunpack.c.h.b16 %v283
  %v1194 = vunpack.c.l.b16 %v284
  %v1195 = vunpack.c.h.b16 %v284
  %v1196 = vunpack.c.l.b16 %v285
  %v1197 = vunpack.c.h.b16 %v285
  %v1198 = vunpack.c.l.b16 %v286
  %v1199 = vunpack.c.h.b16 %v286
  %v1200 = vunpack.c.l.b16 %v287
  %v1201 = vunpack.c.h.b16 %v287
  %v1202 = vunpack.c.l.b16 %v288
  %v1203 = vunpack.c.h.b16 %v288
  %v1204 = vunpack.c.l.b16 %v289
  %v1205 = vunpack.c.h.b16 %v289
  %v1206 = vunpack.c.l.b16 %v290
  %v1207 = vunpack.c.h.b16 %v290
  %v1208 = vunpack.c.l.b16 %v291
  %v1209 = vunpack.c.h.b16 %v291
  %v1210 = vunpack.c.l.b16 %v292
  %v1211 = vunpack.c.h.b16 %v292
  %v1212 = vunpack.c.l.b16 %v293
  %v1213 = vunpack.c.h.b16 %v293
  %v1214 = vunpack.c.l.b16 %v294
  %v1215 = vunpack.c.h.b16 %v294
  %v1216 = vunpack.c.l.b16 %v295
  %v1217 = vunpack.c.h.b16 %v295
  %v1218 = vunpack.c.l.b16 %v296
  %v1219 = vunpack.c.h.b16 %v296
  %v1220 = vunpack.c.l.b16 %v297
  %v1221 = vunpack.c.h.b16 %v297
  %v1222 = vunpack.c.l.b16 %v298
  %v1223 = vunpack.c.h.b16 %v298
  %v1224 = vunpack.c.l.b16 %v299
  %v1225 = vunpack.c.h.b16 %v299
  %v1226 = vunpack.c.l.b16 %v300
  %v1227 = vunpack.c.h.b16 %v300
  %v1228 = vunpack.c.l.b16 %v301
  %v1229 = vunpack.c.h.b16 %v301
  %v1230 = vpack.c.b16 %v720, %v718
  %v1231 = vpack.c.b16 %v721, %v719
  %v1232 = vpack.c.b16 %v724, %v722
  %v1233 = vpack.c.b16 %v725, %v723
  %v1234 = vpack.c.b16 %v728, %v726
  %v1235 = vpack.c.b16 %v729, %v727
  %v1236 = vpack.c.b16 %v732, %v730
  %v1237 = vpack.c.b16 %v733, %v731
  %v1238 = vpack.c.b16 %v736, %v734
  %v1239 = vpack.c.b16 %v737, %v735
  %v1240 = vpack.c.b16 %v740, %v738
  %v1241 = vpack.c.b16 %v741, %v739
  %v1242 = vpack.c.b16 %v744, %v742
  %v1243 = vpack.c.b16 %v745, %v743
  %v1244 = vpack.c.b16 %v748, %v746
  %v1245 = vpack.c.b16 %v749, %v747
  %v1246 = vpack.c.b16 %v752, %v750
  %v1247 = vpack.c.b16 %v753, %v751
  %v1248 = vpack.c.b16 %v756, %v754
  %v1249 = vpack.c.b16 %v757, %v755
  %v1250 = vpack.c.b16 %v760, %v758
  %v1251 = vpack.c.b16 %v761, %v759
  %v1252 = vpack.c.b16 %v764, %v762
  %v1253 = vpack.c.b16 %v765, %v763
  %v1254 = vpack.c.b16 %v768, %v766
  %v1255 = vpack.c.b16 %v769, %v767
  %v1256 = vpack.c.b16 %v772, %v770
  %v1257 = vpack.c.b16 %v773, %v771
  %v1258 = vpack.c.b16 %v776, %v774
  %v1259 = vpack.c.b16 %v777, %v775
  %v1260 = vpack.c.b16 %v780, %v778
  %v1261 = vpack.c.b16 %v781, %v779
  %v1262 = vpack.c.b16 %v784, %v782
  %v1263 = vpack.c.b16 %v785, %v783
  %v1264 = vpack.c.b16 %v788, %v786
  %v1265 = vpack.c.b16 %v789, %v787
  %v1266 = vpack.c.b16 %v792, %v790
  %v1267 = vpack.c.b16 %v793, %v791
  %v1268 = vpack.c.b16 %v796, %v794
  %v1269 = vpack.c.b16 %v797, %v795
  %v1270 = vpack.c.b16 %v800, %v798
  %v1271 = vpack.c.b16 %v801, %v799
  %v1272 = vpack.c.b16 %v804, %v802
  %v1273 = vpack.c.b16 %v805, %v803
  %v1274 = vpack.c.b16 %v808, %v806
  %v1275 = vpack.c.b16 %v809, %v807
  %v1276 = vpack.c.b16 %v812, %v810
  %v1277 = vpack.c.b16 %v813, %v811
  %v1278 = vpack.c.b16 %v816, %v814
  %v1279 = vpack.c.b16 %v817, %v815
  %v1280 = vpack.c.b16 %v820, %v818
  %v1281 = vpack.c.b16 %v821, %v819
  %v1282 = vpack.c.b16 %v824, %v822
  %v1283 = vpack.c.b16 %v825, %v823
  %v1284 = vpack.c.b16 %v828, %v826
  %v1285 = vpack.c.b16 %v829, %v827
  %v1286 = vpack.c.b16 %v832, %v830
  %v1287 = vpack.c.b16 %v833, %v831
  %v1288 = vpack.c.b16 %v836, %v834
  %v1289 = vpack.c.b16 %v837, %v835
  %v1290 = vpack.c.b16 %v840, %v838
  %v1291 = vpack.c.b16 %v841, %v839
  %v1292 = vpack.c.b16 %v844, %v842
  %v1293 = vpack.c.b16 %v845, %v843
  %v1294 = vpack.c.b16 %v848, %v846
  %v1295 = vpack.c.b16 %v849, %v847
  %v1296 = vpack.c.b16 %v852, %v850
  %v1297 = vpack.c.b16 %v853, %v851
  %v1298 = vpack.c.b16 %v856, %v854
  %v1299 = vpack.c.b16 %v857, %v855
  %v1300 = vpack.c.b16 %v860, %v858
  %v1301 = vpack.c.b16 %v861, %v859
  %v1302 = vpack.c.b16 %v864, %v862
  %v1303 = vpack.c.b16 %v865, %v863
  %v1304 = vpack.c.b16 %v868, %v866
  %v1305 = vpack.c.b16 %v869, %v867
  %v1306 = vpack.c.b16 %v872, %v870
  %v1307 = vpack.c.b16 %v873, %v871
  %v1308 = vpack.c.b16 %v876, %v874
  %v1309 = vpack.c.b16 %v877, %v875
  %v1310 = vpack.c.b16 %v880, %v878
  %v1311 = vpack.c.b16 %v881, %v879
  %v1312 = vpack.c.b16 %v884, %v882
  %v1313 = vpack.c.b16 %v885, %v883
  %v1314 = vpack.c.b16 %v888, %v886
  %v1315 = vpack.c.b16 %v889, %v887
  %v1316 = vpack.c.b16 %v892, %v890
  %v1317 = vpack.c.b16 %v893, %v891
  %v1318 = vpack.c.b16 %v896, %v894
  %v1319 = vpack.c.b16 %v897, %v895
  %v1320 = vpack.c.b16 %v900, %v898
  %v1321 = vpack.c.b16 %v901, %v899
  %v1322 = vpack.c.b16 %v904, %v902
  %v1323 = vpack.c.b16 %v905, %v903
  %v1324 = vpack.c.b16 %v908, %v906
  %v1325 = vpack.c.b16 %v909, %v907
  %v1326 = vpack.c.b16 %v912, %v910
  %v1327 = vpack.c.b16 %v913, %v911
  %v1328 = vpack.c.b16 %v916, %v914
  %v1329 = vpack.c.b16 %v917, %v915
  %v1330 = vpack.c.b16 %v920, %v918
  %v1331 = vpack.c.b16 %v921, %v919
  %v1332 = vpack.c.b16 %v924, %v922
  %v1333 = vpack.c.b16 %v925, %v923
  %v1334 = vpack.c.b16 %v928, %v926
  %v1335 = vpack.c.b16 %v929, %v927
  %v1336 = vpack.c.b16 %v932, %v930
  %v1337 = vpack.c.b16 %v933, %v931
  %v1338 = vpack.c.b16 %v936, %v934
  %v1339 = vpack.c.b16 %v937, %v935
  %v1340 = vpack.c.b16 %v940, %v938
  %v1341 = vpack.c.b16 %v941, %v939
  %v1342 = vpack.c.b16 %v944, %v942
  %v1343 = vpack.c.b16 %v945, %v943
  %v1344 = vpack.c.b16 %v948, %v946
  %v1345 = vpack.c.b16 %v949, %v947
  %v1346 = vpack.c.b16 %v952, %v950
  %v1347 = vpack.c.b16 %v953, %v951
  %v1348 = vpack.c.b16 %v956, %v954
  %v1349 = vpack.c.b16 %v957, %v955
  %v1350 = vpack.c.b16 %v960, %v958
  %v1351 = vpack.c.b16 %v961, %v959
  %v1352 = vpack.c.b16 %v964, %v962
  %v1353 = vpack.c.b16 %v965, %v963
  %v1354 = vpack.c.b16 %v968, %v966
  %v1355 = vpack.c.b16 %v969, %v967
  %v1356 = vpack.c.b16 %v972, %v970
  %v1357 = vpack.c.b16 %v973, %v971
  %v1358 = vpack.c.b16 %v976, %v974
  %v1359 = vpack.c.b16 %v977, %v975
  %v1360 = vpack.c.b16 %v980, %v978
  %v1361 = vpack.c.b16 %v981, %v979
  %v1362 = vpack.c.b16 %v984, %v982
  %v1363 = vpack.c.b16 %v985, %v983
  %v1364 = vpack.c.b16 %v988, %v986
  %v1365 = vpack.c.b16 %v989, %v987
  %v1366 = vpack.c.b16 %v992, %v990
  %v1367 = vpack.c.b16 %v993, %v991
  %v1368 = vpack.c.b16 %v996, %v994
  %v1369 = vpack.c.b16 %v997, %v995
  %v1370 = vpack.c.b16 %v1000, %v998
  %v1371 = vpack.c.b16 %v1001, %v999
  %v1372 = vpack.c.b16 %v1004, %v1002
  %v1373 = vpack.c.b16 %v1005, %v1003
  %v1374 = vpack.c.b16 %v1008, %v1006
  %v1375 = vpack.c.b16 %v1009, %v1007
  %v1376 = vpack.c.b16 %v1012, %v1010
  %v1377 = vpack.c.b16 %v1013, %v1011
  %v1378 = vpack.c.b16 %v1016, %v1014
  %v1379 = vpack.c.b16 %v1017, %v1015
  %v1380 = vpack.c.b16 %v1020, %v1018
  %v1381 = vpack.c.b16 %v1021, %v1019
  %v1382 = vpack.c.b16 %v1024, %v1022
  %v1383 = vpack.c.b16 %v1025, %v1023
  %v1384 = vpack.c.b16 %v1028, %v1026
  %v1385 = vpack.c.b16 %v1029, %v1027
  %v1386 = vpack.c.b16 %v1032, %v1030
  %v1387 = vpack.c.b16 %v1033, %v1031
  %v1388 = vpack.c.b16 %v1036, %v1034
  %v1389 = vpack.c.b16 %v1037, %v1035
  %v1390 = vpack.c.b16 %v1040, %v1038
  %v1391 = vpack.c.b16 %v1041, %v1039
  %v1392 = vpack.c.b16 %v1044, %v1042
  %v1393 = vpack.c.b16 %v1045, %v1043
  %v1394 = vpack.c.b16 %v1048, %v1046
  %v1395 = vpack.c.b16 %v1049, %v1047
  %v1396 = vpack.c.b16 %v1052, %v1050
  %v1397 = vpack.c.b16 %v1053, %v1051
  %v1398 = vpack.c.b16 %v1056, %v1054
  %v1399 = vpack.c.b16 %v1057, %v1055
  %v1400 = vpack.c.b16 %v1060, %v1058
  %v1401 = vpack.c.b16 %v1061, %v1059
  %v1402 = vpack.c.b16 %v1064, %v1062
  %v1403 = vpack.c.b16 %v1065, %v1063
  %v1404 = vpack.c.b16 %v1068, %v1066
  %v1405 = vpack.c.b16 %v1069, %v1067
  %v1406 = vpack.c.b16 %v1072, %v1070
  %v1407 = vpack.c.b16 %v1073, %v1071
  %v1408 = vpack.c.b16 %v1076, %v1074
  %v1409 = vpack.c.b16 %v1077, %v1075
  %v1410 = vpack.c.b16 %v1080, %v1078
  %v1411 = vpack.c.b16 %v1081, %v1079
  %v1412 = vpack.c.b16 %v1084, %v1082
  %v1413 = vpack.c.b16 %v1085, %v1083
  %v1414 = vpack.c.b16 %v1088, %v1086
  %v1415 = vpack.c.b16 %v1089, %v1087
  %v1416 = vpack.c.b16 %v1092, %v1090
  %v1417 = vpack.c.b16 %v1093, %v1091
  %v1418 = vpack.c.b16 %v1096, %v1094
  %v1419 = vpack.c.b16 %v1097, %v1095
  %v1420 = vpack.c.b16 %v1100, %v1098
  %v1421 = vpack.c.b16 %v1101, %v1099
  %v1422 = vpack.c.b16 %v1104, %v1102
  %v1423 = vpack.c.b16 %v1105, %v1103
  %v1424 = vpack.c.b16 %v1108, %v1106
  %v1425 = vpack.c.b16 %v1109, %v1107
  %v1426 = vpack.c.b16 %v1112, %v1110
  %v1427 = vpack.c.b16 %v1113, %v1111
  %v1428 = vpack.c.b16 %v1116, %v1114
  %v1429 = vpack.c.b16 %v1117, %v1115
  %v1430 = vpack.c.b16 %v1120, %v1118
  %v1431 = vpack.c.b16 %v1121, %v1119
  %v1432 = vpack.c.b16 %v1124, %v1122
  %v1433 = vpack.c.b16 %v1125, %v1123
  %v1434 = vpack.c.b16 %v1128, %v1126
  %v1435 = vpack.c.b16 %v1129, %v1127
  %v1436 = vpack.c.b16 %v1132, %v1130
  %v1437 = vpack.c.b16 %v1133, %v1131
  %v1438 = vpack.c.b16 %v1136, %v1134
  %v1439 = vpack.c.b16 %v1137, %v1135
  %v1440 = vpack.c.b16 %v1140, %v1138
  %v1441 = vpack.c.b16 %v1141, %v1139
  %v1442 = vpack.c.b16 %v1144, %v1142
  %v1443 = vpack.c.b16 %v1145, %v1143
  %v1444 = vpack.c.b16 %v1148, %v1146
  %v1445 = vpack.c.b16 %v1149, %v1147
  %v1446 = vpack.c.b16 %v1152, %v1150
  %v1447 = vpack.c.b16 %v1153, %v1151
  %v1448 = vpack.c.b16 %v1156, %v1154
  %v1449 = vpack.c.b16 %v1157, %v1155
  %v1450 = vpack.c.b16 %v1160, %v1158
  %v1451 = vpack.c.b16 %v1161, %v1159
  %v1452 = vpack.c.b16 %v1164, %v1162
  %v1453 = vpack.c.b16 %v1165, %v1163
  %v1454 = vpack.c.b16 %v1168, %v1166
  %v1455 = vpack.c.b16 %v1169, %v1167
  %v1456 = vpack.c.b16 %v1172, %v1170
  %v1457 = vpack.c.b16 %v1173, %v1171
  %v1458 = vpack.c.b16 %v1176, %v1174
  %v1459 = vpack.c.b16 %v1177, %v1175
  %v1460 = vpack.c.b16 %v1180, %v1178
  %v1461 = vpack.c.b16 %v1181, %v1179
  %v1462 = vpack.c.b16 %v1184, %v1182
  %v1463 = vpack.c.b16 %v1185, %v1183
  %v1464 = vpack.c.b16 %v1188, %v1186
  %v1465 = vpack.c.b16 %v1189, %v1187
  %v1466 = vpack.c.b16 %v1192, %v1190
  %v1467 = vpack.c.b16 %v1193, %v1191
  %v1468 = vpack.c.b16 %v1196, %v1194
  %v1469 = vpack.c.b16 %v1197, %v1195
  %v1470 = vpack.c.b16 %v1200, %v1198
  %v1471 = vpack.c.b16 %v1201, %v1199
  %v1472 = vpack.c.b16 %v1204, %v1202
  %v1473 = vpack.c.b16 %v1205, %v1203
  %v1474 = vpack.c.b16 %v1208, %v1206
  %v1475 = vpack.c.b16 %v1209, %v1207
  %v1476 = vpack.c.b16 %v1212, %v1210
  %v1477 = vpack.c.b16 %v1213, %v1211
  %v1478 = vpack.c.b16 %v1216, %v1214
  %v1479 = vpack.c.b16 %v1217, %v1215
  %v1480 = vpack.c.b16 %v1220, %v1218
  %v1481 = vpack.c.b16 %v1221, %v1219
  %v1482 = vpack.c.b16 %v1224, %v1222
  %v1483 = vpack.c.b16 %v1225, %v1223
  %v1484 = vpack.c.b16 %v1228, %v1226
  %v1485 = vpack.c.b16 %v1229, %v1227
  %1742 = vmatprep.subr.bf16.mxu0 %v1231
  %1743 = vmatpush1.bf16.msra.mxu0 %v1230
  %1744 = vmatprep.subr.bf16.mxu0 %v1233
  %1745 = vmatpush1.bf16.msra.mxu0 %v1232
  %1746 = vmatprep.subr.bf16.mxu0 %v1235
  %1747 = vmatpush1.bf16.msra.mxu0 %v1234
  %1748 = vmatprep.subr.bf16.mxu0 %v1237
  %1749 = vmatpush1.bf16.msra.mxu0 %v1236
  %1750 = vmatprep.subr.bf16.mxu0 %v1239
  %1751 = vmatpush1.bf16.msra.mxu0 %v1238
  %1752 = vmatprep.subr.bf16.mxu0 %v1241
  %1753 = vmatpush1.bf16.msra.mxu0 %v1240
  %1754 = vmatprep.subr.bf16.mxu0 %v1243
  %1755 = vmatpush1.bf16.msra.mxu0 %v1242
  %1756 = vmatprep.subr.bf16.mxu0 %v1245
  %1757 = vmatpush1.bf16.msra.mxu0 %v1244
  %1758 = vmatprep.subr.bf16.mxu0 %v1247
  %1759 = vmatpush1.bf16.msra.mxu0 %v1246
  %1760 = vmatprep.subr.bf16.mxu0 %v1249
  %1761 = vmatpush1.bf16.msra.mxu0 %v1248
  %1762 = vmatprep.subr.bf16.mxu0 %v1251
  %1763 = vmatpush1.bf16.msra.mxu0 %v1250
  %1764 = vmatprep.subr.bf16.mxu0 %v1253
  %1765 = vmatpush1.bf16.msra.mxu0 %v1252
  %1766 = vmatprep.subr.bf16.mxu0 %v1255
  %1767 = vmatpush1.bf16.msra.mxu0 %v1254
  %1768 = vmatprep.subr.bf16.mxu0 %v1257
  %1769 = vmatpush1.bf16.msra.mxu0 %v1256
  %1770 = vmatprep.subr.bf16.mxu0 %v1259
  %1771 = vmatpush1.bf16.msra.mxu0 %v1258
  %1772 = vmatprep.subr.bf16.mxu0 %v1261
  %1773 = vmatpush1.bf16.msra.mxu0 %v1260
  %1774 = vmatprep.mubr.bf16.mxu0 %v399
  %1775 = vmatmul.mubr.bf16.gmra.mrb[0].mxu0 %v398
  %v1776 = vpop.f32.mrb[0].mxu0
  %v1777 = vadd.f32 0.0, %v1776
  %v1778 = vpop.f32.mrb[0].mxu0
  %v1779 = vadd.f32 0.0, %v1778
  %v1780 = vpop.f32.mrb[0].mxu0
  %v1781 = vadd.f32 0.0, %v1780
  %v1782 = vpop.f32.mrb[0].mxu0
  %v1783 = vadd.f32 0.0, %v1782
  %1784 = vmatprep.mubr.bf16.mxu0 %v415
  %1785 = vmatmul.mubr.bf16.gmra.mrb[0].mxu0 %v414
  %v1786 = vpop.f32.mrb[0].mxu0
  %v1787 = vadd.f32 0.0, %v1786
  %v1788 = vpop.f32.mrb[0].mxu0
  %v1789 = vadd.f32 0.0, %v1788
  %v1790 = vpop.f32.mrb[0].mxu0
  %v1791 = vadd.f32 0.0, %v1790
  %v1792 = vpop.f32.mrb[0].mxu0
  %v1793 = vadd.f32 0.0, %v1792
  %1794 = vdwg.mxu0
  %1795 = vmatprep.subr.bf16.mxu0 %v1263
  %1796 = vmatpush1.bf16.msra.mxu0 %v1262
  %1797 = vmatprep.subr.bf16.mxu0 %v1265
  %1798 = vmatpush1.bf16.msra.mxu0 %v1264
  %1799 = vmatprep.subr.bf16.mxu0 %v1267
  %1800 = vmatpush1.bf16.msra.mxu0 %v1266
  %1801 = vmatprep.subr.bf16.mxu0 %v1269
  %1802 = vmatpush1.bf16.msra.mxu0 %v1268
  %1803 = vmatprep.subr.bf16.mxu0 %v1271
  %1804 = vmatpush1.bf16.msra.mxu0 %v1270
  %1805 = vmatprep.subr.bf16.mxu0 %v1273
  %1806 = vmatpush1.bf16.msra.mxu0 %v1272
  %1807 = vmatprep.subr.bf16.mxu0 %v1275
  %1808 = vmatpush1.bf16.msra.mxu0 %v1274
  %1809 = vmatprep.subr.bf16.mxu0 %v1277
  %1810 = vmatpush1.bf16.msra.mxu0 %v1276
  %1811 = vmatprep.subr.bf16.mxu0 %v1279
  %1812 = vmatpush1.bf16.msra.mxu0 %v1278
  %1813 = vmatprep.subr.bf16.mxu0 %v1281
  %1814 = vmatpush1.bf16.msra.mxu0 %v1280
  %1815 = vmatprep.subr.bf16.mxu0 %v1283
  %1816 = vmatpush1.bf16.msra.mxu0 %v1282
  %1817 = vmatprep.subr.bf16.mxu0 %v1285
  %1818 = vmatpush1.bf16.msra.mxu0 %v1284
  %1819 = vmatprep.subr.bf16.mxu0 %v1287
  %1820 = vmatpush1.bf16.msra.mxu0 %v1286
  %1821 = vmatprep.subr.bf16.mxu0 %v1289
  %1822 = vmatpush1.bf16.msra.mxu0 %v1288
  %1823 = vmatprep.subr.bf16.mxu0 %v1291
  %1824 = vmatpush1.bf16.msra.mxu0 %v1290
  %1825 = vmatprep.subr.bf16.mxu0 %v1293
  %1826 = vmatpush1.bf16.msra.mxu0 %v1292
  %1827 = vmatprep.mubr.bf16.mxu0 %v401
  %1828 = vmatmul.mubr.bf16.gmra.mrb[0].mxu0 %v400
  %v1829 = vpop.f32.mrb[0].mxu0
  %v1830 = vadd.f32 %v1777, %v1829
  %v1831 = vpop.f32.mrb[0].mxu0
  %v1832 = vadd.f32 %v1779, %v1831
  %v1833 = vpop.f32.mrb[0].mxu0
  %v1834 = vadd.f32 %v1781, %v1833
  %v1835 = vpop.f32.mrb[0].mxu0
  %v1836 = vadd.f32 %v1783, %v1835
  %1837 = vmatprep.mubr.bf16.mxu0 %v417
  %1838 = vmatmul.mubr.bf16.gmra.mrb[0].mxu0 %v416
  %v1839 = vpop.f32.mrb[0].mxu0
  %v1840 = vadd.f32 %v1787, %v1839
  %v1841 = vpop.f32.mrb[0].mxu0
  %v1842 = vadd.f32 %v1789, %v1841
  %v1843 = vpop.f32.mrb[0].mxu0
  %v1844 = vadd.f32 %v1791, %v1843
  %v1845 = vpop.f32.mrb[0].mxu0
  %v1846 = vadd.f32 %v1793, %v1845
  %1847 = vdwg.mxu0
  %1848 = vmatprep.subr.bf16.mxu0 %v1295
  %1849 = vmatpush1.bf16.msra.mxu0 %v1294
  %1850 = vmatprep.subr.bf16.mxu0 %v1297
  %1851 = vmatpush1.bf16.msra.mxu0 %v1296
  %1852 = vmatprep.subr.bf16.mxu0 %v1299
  %1853 = vmatpush1.bf16.msra.mxu0 %v1298
  %1854 = vmatprep.subr.bf16.mxu0 %v1301
  %1855 = vmatpush1.bf16.msra.mxu0 %v1300
  %1856 = vmatprep.subr.bf16.mxu0 %v1303
  %1857 = vmatpush1.bf16.msra.mxu0 %v1302
  %1858 = vmatprep.subr.bf16.mxu0 %v1305
  %1859 = vmatpush1.bf16.msra.mxu0 %v1304
  %1860 = vmatprep.subr.bf16.mxu0 %v1307
  %1861 = vmatpush1.bf16.msra.mxu0 %v1306
  %1862 = vmatprep.subr.bf16.mxu0 %v1309
  %1863 = vmatpush1.bf16.msra.mxu0 %v1308
  %1864 = vmatprep.subr.bf16.mxu0 %v1311
  %1865 = vmatpush1.bf16.msra.mxu0 %v1310
  %1866 = vmatprep.subr.bf16.mxu0 %v1313
  %1867 = vmatpush1.bf16.msra.mxu0 %v1312
  %1868 = vmatprep.subr.bf16.mxu0 %v1315
  %1869 = vmatpush1.bf16.msra.mxu0 %v1314
  %1870 = vmatprep.subr.bf16.mxu0 %v1317
  %1871 = vmatpush1.bf16.msra.mxu0 %v1316
  %1872 = vmatprep.subr.bf16.mxu0 %v1319
  %1873 = vmatpush1.bf16.msra.mxu0 %v1318
  %1874 = vmatprep.subr.bf16.mxu0 %v1321
  %1875 = vmatpush1.bf16.msra.mxu0 %v1320
  %1876 = vmatprep.subr.bf16.mxu0 %v1323
  %1877 = vmatpush1.bf16.msra.mxu0 %v1322
  %1878 = vmatprep.subr.bf16.mxu0 %v1325
  %1879 = vmatpush1.bf16.msra.mxu0 %v1324
  %1880 = vmatprep.mubr.bf16.mxu0 %v403
  %1881 = vmatmul.mubr.bf16.gmra.mrb[0].mxu0 %v402
  %v1882 = vpop.f32.mrb[0].mxu0
  %v1883 = vadd.f32 %v1830, %v1882
  %v1884 = vpop.f32.mrb[0].mxu0
  %v1885 = vadd.f32 %v1832, %v1884
  %v1886 = vpop.f32.mrb[0].mxu0
  %v1887 = vadd.f32 %v1834, %v1886
  %v1888 = vpop.f32.mrb[0].mxu0
  %v1889 = vadd.f32 %v1836, %v1888
  %1890 = vmatprep.mubr.bf16.mxu0 %v419
  %1891 = vmatmul.mubr.bf16.gmra.mrb[0].mxu0 %v418
  %v1892 = vpop.f32.mrb[0].mxu0
  %v1893 = vadd.f32 %v1840, %v1892
  %v1894 = vpop.f32.mrb[0].mxu0
  %v1895 = vadd.f32 %v1842, %v1894
  %v1896 = vpop.f32.mrb[0].mxu0
  %v1897 = vadd.f32 %v1844, %v1896
  %v1898 = vpop.f32.mrb[0].mxu0
  %v1899 = vadd.f32 %v1846, %v1898
  %1900 = vdwg.mxu0
  %1901 = vmatprep.subr.bf16.mxu0 %v1327
  %1902 = vmatpush1.bf16.msra.mxu0 %v1326
  %1903 = vmatprep.subr.bf16.mxu0 %v1329
  %1904 = vmatpush1.bf16.msra.mxu0 %v1328
  %1905 = vmatprep.subr.bf16.mxu0 %v1331
  %1906 = vmatpush1.bf16.msra.mxu0 %v1330
  %1907 = vmatprep.subr.bf16.mxu0 %v1333
  %1908 = vmatpush1.bf16.msra.mxu0 %v1332
  %1909 = vmatprep.subr.bf16.mxu0 %v1335
  %1910 = vmatpush1.bf16.msra.mxu0 %v1334
  %1911 = vmatprep.subr.bf16.mxu0 %v1337
  %1912 = vmatpush1.bf16.msra.mxu0 %v1336
  %1913 = vmatprep.subr.bf16.mxu0 %v1339
  %1914 = vmatpush1.bf16.msra.mxu0 %v1338
  %1915 = vmatprep.subr.bf16.mxu0 %v1341
  %1916 = vmatpush1.bf16.msra.mxu0 %v1340
  %1917 = vmatprep.subr.bf16.mxu0 %v1343
  %1918 = vmatpush1.bf16.msra.mxu0 %v1342
  %1919 = vmatprep.subr.bf16.mxu0 %v1345
  %1920 = vmatpush1.bf16.msra.mxu0 %v1344
  %1921 = vmatprep.subr.bf16.mxu0 %v1347
  %1922 = vmatpush1.bf16.msra.mxu0 %v1346
  %1923 = vmatprep.subr.bf16.mxu0 %v1349
  %1924 = vmatpush1.bf16.msra.mxu0 %v1348
  %1925 = vmatprep.subr.bf16.mxu0 %v1351
  %1926 = vmatpush1.bf16.msra.mxu0 %v1350
  %1927 = vmatprep.subr.bf16.mxu0 %v1353
  %1928 = vmatpush1.bf16.msra.mxu0 %v1352
  %1929 = vmatprep.subr.bf16.mxu0 %v1355
  %1930 = vmatpush1.bf16.msra.mxu0 %v1354
  %1931 = vmatprep.subr.bf16.mxu0 %v1357
  %1932 = vmatpush1.bf16.msra.mxu0 %v1356
  %1933 = vmatprep.mubr.bf16.mxu0 %v405
  %1934 = vmatmul.mubr.bf16.gmra.mrb[0].mxu0 %v404
  %v1935 = vpop.f32.mrb[0].mxu0
  %v1936 = vadd.f32 %v1883, %v1935
  %v1937 = vpop.f32.mrb[0].mxu0
  %v1938 = vadd.f32 %v1885, %v1937
  %v1939 = vpop.f32.mrb[0].mxu0
  %v1940 = vadd.f32 %v1887, %v1939
  %v1941 = vpop.f32.mrb[0].mxu0
  %v1942 = vadd.f32 %v1889, %v1941
  %1943 = vmatprep.mubr.bf16.mxu0 %v421
  %1944 = vmatmul.mubr.bf16.gmra.mrb[0].mxu0 %v420
  %v1945 = vpop.f32.mrb[0].mxu0
  %v1946 = vadd.f32 %v1893, %v1945
  %v1947 = vpop.f32.mrb[0].mxu0
  %v1948 = vadd.f32 %v1895, %v1947
  %v1949 = vpop.f32.mrb[0].mxu0
  %v1950 = vadd.f32 %v1897, %v1949
  %v1951 = vpop.f32.mrb[0].mxu0
  %v1952 = vadd.f32 %v1899, %v1951
  %1953 = vdwg.mxu0
  %1954 = vmatprep.subr.bf16.mxu0 %v1359
  %1955 = vmatpush1.bf16.msra.mxu0 %v1358
  %1956 = vmatprep.subr.bf16.mxu0 %v1361
  %1957 = vmatpush1.bf16.msra.mxu0 %v1360
  %1958 = vmatprep.subr.bf16.mxu0 %v1363
  %1959 = vmatpush1.bf16.msra.mxu0 %v1362
  %1960 = vmatprep.subr.bf16.mxu0 %v1365
  %1961 = vmatpush1.bf16.msra.mxu0 %v1364
  %1962 = vmatprep.subr.bf16.mxu0 %v1367
  %1963 = vmatpush1.bf16.msra.mxu0 %v1366
  %1964 = vmatprep.subr.bf16.mxu0 %v1369
  %1965 = vmatpush1.bf16.msra.mxu0 %v1368
  %1966 = vmatprep.subr.bf16.mxu0 %v1371
  %1967 = vmatpush1.bf16.msra.mxu0 %v1370
  %1968 = vmatprep.subr.bf16.mxu0 %v1373
  %1969 = vmatpush1.bf16.msra.mxu0 %v1372
  %1970 = vmatprep.subr.bf16.mxu0 %v1375
  %1971 = vmatpush1.bf16.msra.mxu0 %v1374
  %1972 = vmatprep.subr.bf16.mxu0 %v1377
  %1973 = vmatpush1.bf16.msra.mxu0 %v1376
  %1974 = vmatprep.subr.bf16.mxu0 %v1379
  %1975 = vmatpush1.bf16.msra.mxu0 %v1378
  %1976 = vmatprep.subr.bf16.mxu0 %v1381
  %1977 = vmatpush1.bf16.msra.mxu0 %v1380
  %1978 = vmatprep.subr.bf16.mxu0 %v1383
  %1979 = vmatpush1.bf16.msra.mxu0 %v1382
  %1980 = vmatprep.subr.bf16.mxu0 %v1385
  %1981 = vmatpush1.bf16.msra.mxu0 %v1384
  %1982 = vmatprep.subr.bf16.mxu0 %v1387
  %1983 = vmatpush1.bf16.msra.mxu0 %v1386
  %1984 = vmatprep.subr.bf16.mxu0 %v1389
  %1985 = vmatpush1.bf16.msra.mxu0 %v1388
  %1986 = vmatprep.mubr.bf16.mxu0 %v407
  %1987 = vmatmul.mubr.bf16.gmra.mrb[0].mxu0 %v406
  %v1988 = vpop.f32.mrb[0].mxu0
  %v1989 = vadd.f32 %v1936, %v1988
  %v1990 = vpop.f32.mrb[0].mxu0
  %v1991 = vadd.f32 %v1938, %v1990
  %v1992 = vpop.f32.mrb[0].mxu0
  %v1993 = vadd.f32 %v1940, %v1992
  %v1994 = vpop.f32.mrb[0].mxu0
  %v1995 = vadd.f32 %v1942, %v1994
  %1996 = vmatprep.mubr.bf16.mxu0 %v423
  %1997 = vmatmul.mubr.bf16.gmra.mrb[0].mxu0 %v422
  %v1998 = vpop.f32.mrb[0].mxu0
  %v1999 = vadd.f32 %v1946, %v1998
  %v2000 = vpop.f32.mrb[0].mxu0
  %v2001 = vadd.f32 %v1948, %v2000
  %v2002 = vpop.f32.mrb[0].mxu0
  %v2003 = vadd.f32 %v1950, %v2002
  %v2004 = vpop.f32.mrb[0].mxu0
  %v2005 = vadd.f32 %v1952, %v2004
  %2006 = vdwg.mxu0
  %2007 = vmatprep.subr.bf16.mxu0 %v1391
  %2008 = vmatpush1.bf16.msra.mxu0 %v1390
  %2009 = vmatprep.subr.bf16.mxu0 %v1393
  %2010 = vmatpush1.bf16.msra.mxu0 %v1392
  %2011 = vmatprep.subr.bf16.mxu0 %v1395
  %2012 = vmatpush1.bf16.msra.mxu0 %v1394
  %2013 = vmatprep.subr.bf16.mxu0 %v1397
  %2014 = vmatpush1.bf16.msra.mxu0 %v1396
  %2015 = vmatprep.subr.bf16.mxu0 %v1399
  %2016 = vmatpush1.bf16.msra.mxu0 %v1398
  %2017 = vmatprep.subr.bf16.mxu0 %v1401
  %2018 = vmatpush1.bf16.msra.mxu0 %v1400
  %2019 = vmatprep.subr.bf16.mxu0 %v1403
  %2020 = vmatpush1.bf16.msra.mxu0 %v1402
  %2021 = vmatprep.subr.bf16.mxu0 %v1405
  %2022 = vmatpush1.bf16.msra.mxu0 %v1404
  %2023 = vmatprep.subr.bf16.mxu0 %v1407
  %2024 = vmatpush1.bf16.msra.mxu0 %v1406
  %2025 = vmatprep.subr.bf16.mxu0 %v1409
  %2026 = vmatpush1.bf16.msra.mxu0 %v1408
  %2027 = vmatprep.subr.bf16.mxu0 %v1411
  %2028 = vmatpush1.bf16.msra.mxu0 %v1410
  %2029 = vmatprep.subr.bf16.mxu0 %v1413
  %2030 = vmatpush1.bf16.msra.mxu0 %v1412
  %2031 = vmatprep.subr.bf16.mxu0 %v1415
  %2032 = vmatpush1.bf16.msra.mxu0 %v1414
  %2033 = vmatprep.subr.bf16.mxu0 %v1417
  %2034 = vmatpush1.bf16.msra.mxu0 %v1416
  %2035 = vmatprep.subr.bf16.mxu0 %v1419
  %2036 = vmatpush1.bf16.msra.mxu0 %v1418
  %2037 = vmatprep.subr.bf16.mxu0 %v1421
  %2038 = vmatpush1.bf16.msra.mxu0 %v1420
  %2039 = vmatprep.mubr.bf16.mxu0 %v409
  %2040 = vmatmul.mubr.bf16.gmra.mrb[0].mxu0 %v408
  %v2041 = vpop.f32.mrb[0].mxu0
  %v2042 = vadd.f32 %v1989, %v2041
  %v2043 = vpop.f32.mrb[0].mxu0
  %v2044 = vadd.f32 %v1991, %v2043
  %v2045 = vpop.f32.mrb[0].mxu0
  %v2046 = vadd.f32 %v1993, %v2045
  %v2047 = vpop.f32.mrb[0].mxu0
  %v2048 = vadd.f32 %v1995, %v2047
  %2049 = vmatprep.mubr.bf16.mxu0 %v425
  %2050 = vmatmul.mubr.bf16.gmra.mrb[0].mxu0 %v424
  %v2051 = vpop.f32.mrb[0].mxu0
  %v2052 = vadd.f32 %v1999, %v2051
  %v2053 = vpop.f32.mrb[0].mxu0
  %v2054 = vadd.f32 %v2001, %v2053
  %v2055 = vpop.f32.mrb[0].mxu0
  %v2056 = vadd.f32 %v2003, %v2055
  %v2057 = vpop.f32.mrb[0].mxu0
  %v2058 = vadd.f32 %v2005, %v2057
  %2059 = vdwg.mxu0
  %2060 = vmatprep.subr.bf16.mxu0 %v1423
  %2061 = vmatpush1.bf16.msra.mxu0 %v1422
  %2062 = vmatprep.subr.bf16.mxu0 %v1425
  %2063 = vmatpush1.bf16.msra.mxu0 %v1424
  %2064 = vmatprep.subr.bf16.mxu0 %v1427
  %2065 = vmatpush1.bf16.msra.mxu0 %v1426
  %2066 = vmatprep.subr.bf16.mxu0 %v1429
  %2067 = vmatpush1.bf16.msra.mxu0 %v1428
  %2068 = vmatprep.subr.bf16.mxu0 %v1431
  %2069 = vmatpush1.bf16.msra.mxu0 %v1430
  %2070 = vmatprep.subr.bf16.mxu0 %v1433
  %2071 = vmatpush1.bf16.msra.mxu0 %v1432
  %2072 = vmatprep.subr.bf16.mxu0 %v1435
  %2073 = vmatpush1.bf16.msra.mxu0 %v1434
  %2074 = vmatprep.subr.bf16.mxu0 %v1437
  %2075 = vmatpush1.bf16.msra.mxu0 %v1436
  %2076 = vmatprep.subr.bf16.mxu0 %v1439
  %2077 = vmatpush1.bf16.msra.mxu0 %v1438
  %2078 = vmatprep.subr.bf16.mxu0 %v1441
  %2079 = vmatpush1.bf16.msra.mxu0 %v1440
  %2080 = vmatprep.subr.bf16.mxu0 %v1443
  %2081 = vmatpush1.bf16.msra.mxu0 %v1442
  %2082 = vmatprep.subr.bf16.mxu0 %v1445
  %2083 = vmatpush1.bf16.msra.mxu0 %v1444
  %2084 = vmatprep.subr.bf16.mxu0 %v1447
  %2085 = vmatpush1.bf16.msra.mxu0 %v1446
  %2086 = vmatprep.subr.bf16.mxu0 %v1449
  %2087 = vmatpush1.bf16.msra.mxu0 %v1448
  %2088 = vmatprep.subr.bf16.mxu0 %v1451
  %2089 = vmatpush1.bf16.msra.mxu0 %v1450
  %2090 = vmatprep.subr.bf16.mxu0 %v1453
  %2091 = vmatpush1.bf16.msra.mxu0 %v1452
  %2092 = vmatprep.mubr.bf16.mxu0 %v411
  %2093 = vmatmul.mubr.bf16.gmra.mrb[0].mxu0 %v410
  %v2094 = vpop.f32.mrb[0].mxu0
  %v2095 = vadd.f32 %v2042, %v2094
  %v2096 = vpop.f32.mrb[0].mxu0
  %v2097 = vadd.f32 %v2044, %v2096
  %v2098 = vpop.f32.mrb[0].mxu0
  %v2099 = vadd.f32 %v2046, %v2098
  %v2100 = vpop.f32.mrb[0].mxu0
  %v2101 = vadd.f32 %v2048, %v2100
  %2102 = vmatprep.mubr.bf16.mxu0 %v427
  %2103 = vmatmul.mubr.bf16.gmra.mrb[0].mxu0 %v426
  %v2104 = vpop.f32.mrb[0].mxu0
  %v2105 = vadd.f32 %v2052, %v2104
  %v2106 = vpop.f32.mrb[0].mxu0
  %v2107 = vadd.f32 %v2054, %v2106
  %v2108 = vpop.f32.mrb[0].mxu0
  %v2109 = vadd.f32 %v2056, %v2108
  %v2110 = vpop.f32.mrb[0].mxu0
  %v2111 = vadd.f32 %v2058, %v2110
  %2112 = vdwg.mxu0
  %2113 = vmatprep.subr.bf16.mxu0 %v1455
  %2114 = vmatpush1.bf16.msra.mxu0 %v1454
  %2115 = vmatprep.subr.bf16.mxu0 %v1457
  %2116 = vmatpush1.bf16.msra.mxu0 %v1456
  %2117 = vmatprep.subr.bf16.mxu0 %v1459
  %2118 = vmatpush1.bf16.msra.mxu0 %v1458
  %2119 = vmatprep.subr.bf16.mxu0 %v1461
  %2120 = vmatpush1.bf16.msra.mxu0 %v1460
  %2121 = vmatprep.subr.bf16.mxu0 %v1463
  %2122 = vmatpush1.bf16.msra.mxu0 %v1462
  %2123 = vmatprep.subr.bf16.mxu0 %v1465
  %2124 = vmatpush1.bf16.msra.mxu0 %v1464
  %2125 = vmatprep.subr.bf16.mxu0 %v1467
  %2126 = vmatpush1.bf16.msra.mxu0 %v1466
  %2127 = vmatprep.subr.bf16.mxu0 %v1469
  %2128 = vmatpush1.bf16.msra.mxu0 %v1468
  %2129 = vmatprep.subr.bf16.mxu0 %v1471
  %2130 = vmatpush1.bf16.msra.mxu0 %v1470
  %2131 = vmatprep.subr.bf16.mxu0 %v1473
  %2132 = vmatpush1.bf16.msra.mxu0 %v1472
  %2133 = vmatprep.subr.bf16.mxu0 %v1475
  %2134 = vmatpush1.bf16.msra.mxu0 %v1474
  %2135 = vmatprep.subr.bf16.mxu0 %v1477
  %2136 = vmatpush1.bf16.msra.mxu0 %v1476
  %2137 = vmatprep.subr.bf16.mxu0 %v1479
  %2138 = vmatpush1.bf16.msra.mxu0 %v1478
  %2139 = vmatprep.subr.bf16.mxu0 %v1481
  %2140 = vmatpush1.bf16.msra.mxu0 %v1480
  %2141 = vmatprep.subr.bf16.mxu0 %v1483
  %2142 = vmatpush1.bf16.msra.mxu0 %v1482
  %2143 = vmatprep.subr.bf16.mxu0 %v1485
  %2144 = vmatpush1.bf16.msra.mxu0 %v1484
  %2145 = vmatprep.mubr.bf16.mxu0 %v413
  %2146 = vmatmul.mubr.bf16.gmra.mrb[0].mxu0 %v412
  %v2147 = vpop.f32.mrb[0].mxu0
  %v2148 = vadd.f32 %v2095, %v2147
  %v2149 = vpop.f32.mrb[0].mxu0
  %v2150 = vadd.f32 %v2097, %v2149
  %v2151 = vpop.f32.mrb[0].mxu0
  %v2152 = vadd.f32 %v2099, %v2151
  %v2153 = vpop.f32.mrb[0].mxu0
  %v2154 = vadd.f32 %v2101, %v2153
  %2155 = vmatprep.mubr.bf16.mxu0 %v429
  %2156 = vmatmul.mubr.bf16.gmra.mrb[0].mxu0 %v428
  %v2157 = vpop.f32.mrb[0].mxu0
  %v2158 = vadd.f32 %v2105, %v2157
  %v2159 = vpop.f32.mrb[0].mxu0
  %v2160 = vadd.f32 %v2107, %v2159
  %v2161 = vpop.f32.mrb[0].mxu0
  %v2162 = vadd.f32 %v2109, %v2161
  %v2163 = vpop.f32.mrb[0].mxu0
  %v2164 = vadd.f32 %v2111, %v2163
  %2165 = vdwg.mxu0
  %2166 = vst [vmem:[%s2] sm:$0xff] %v2148
  %2167 = vst [vmem:[%s2 + $0x8] sm:$0xff] %v2150
  %2168 = vst [vmem:[%s2 + $0x10] sm:$0xff] %v2152
  %2169 = vst [vmem:[%s2 + $0x18] sm:$0xff] %v2154
  %2170 = vst [vmem:[%s2 + $0x20] sm:$0xff] %v2158
  %2171 = vst [vmem:[%s2 + $0x28] sm:$0xff] %v2160
  %2172 = vst [vmem:[%s2 + $0x30] sm:$0xff] %v2162
  %2173 = vst [vmem:[%s2 + $0x38] sm:$0xff] %v2164
  %v2174 = vadd.f32 %v2148, %v2152
  %v2175 = vadd.f32 %v2174, %v2158
  %v2176 = vadd.f32 %v2175, %v2162
  %v2177 = vrot.slane %v2176, 4
  %v2178 = vadd.f32 %v2176, %v2177
  %v2179 = vrot.slane %v2178, 2
  %v2180 = vadd.f32 %v2178, %v2179
  %v2181 = vrot.slane %v2180, 1
  %v2182 = vadd.f32 %v2180, %v2181
  %v2183 = vadd.f32 %v2150, %v2154
  %v2184 = vadd.f32 %v2183, %v2160
  %v2185 = vadd.f32 %v2184, %v2164
  %v2186 = vrot.slane %v2185, 4
  %v2187 = vadd.f32 %v2185, %v2186
  %v2188 = vrot.slane %v2187, 2
  %v2189 = vadd.f32 %v2187, %v2188
  %v2190 = vrot.slane %v2189, 1
  %v2191 = vadd.f32 %v2189, %v2190
  %v2192 = vmul.f32 %v2148, %v2148
  %v2193 = vmul.f32 %v2150, %v2150
  %v2194 = vmul.f32 %v2152, %v2152
  %v2195 = vmul.f32 %v2154, %v2154
  %v2196 = vmul.f32 %v2158, %v2158
  %v2197 = vmul.f32 %v2160, %v2160
  %v2198 = vmul.f32 %v2162, %v2162
  %v2199 = vmul.f32 %v2164, %v2164
  %v2200 = vadd.f32 %v2192, %v2194
  %v2201 = vadd.f32 %v2200, %v2196
  %v2202 = vadd.f32 %v2201, %v2198
  %v2203 = vrot.slane %v2202, 4
  %v2204 = vadd.f32 %v2202, %v2203
  %v2205 = vrot.slane %v2204, 2
  %v2206 = vadd.f32 %v2204, %v2205
  %v2207 = vrot.slane %v2206, 1
  %v2208 = vadd.f32 %v2206, %v2207
  %v2209 = vadd.f32 %v2193, %v2195
  %v2210 = vadd.f32 %v2209, %v2197
  %v2211 = vadd.f32 %v2210, %v2199
  %v2212 = vrot.slane %v2211, 4
  %v2213 = vadd.f32 %v2211, %v2212
  %v2214 = vrot.slane %v2213, 2
  %v2215 = vadd.f32 %v2213, %v2214
  %v2216 = vrot.slane %v2215, 1
  %v2217 = vadd.f32 %v2215, %v2216
  %2218 = vst [vmem:[%s3] sm:$0xff] %v2182
  %2219 = vst [vmem:[%s3 + $0x8] sm:$0xff] %v2191
  %2220 = vst [vmem:[%s4] sm:$0xff] %v2208
  %2221 = vst [vmem:[%s4 + $0x8] sm:$0xff] %v2217
  // Predicated region
  $region10: #{discriminator_forward.8} parent=0 // pred_check
    _
  $region11: #{discriminator_forward.8} parent=0 // pred_check_branch
    %2223 = sbr.rel (0) target = $region13
  $region12: #{discriminator_forward.8} parent=0 // pred_region
    _
  $region13: #{discriminator_forward.8} parent=0 // pred_fallthru
    _
  // Predicated region
  $region14: #{discriminator_forward.8} parent=0 // pred_check
    _
  $region15: #{discriminator_forward.8} parent=0 // pred_check_branch
    %2225 = sbr.rel (0) target = $region17
  $region16: #{discriminator_forward.8} parent=0 // pred_region
    _
  $region17: #{discriminator_forward.8} parent=0 // pred_fallthru
    _
  // Predicated region
  $region18: #{discriminator_forward.8} parent=0 // pred_check
    _
  $region19: #{discriminator_forward.8} parent=0 // pred_check_branch
    %2227 = sbr.rel (0) target = $region21
  $region20: #{discriminator_forward.8} parent=0 // pred_region
    _
  $region21: #{discriminator_forward.8} parent=0 // pred_fallthru
    _
  // Predicated region
  $region22: #{discriminator_forward.8} parent=0 // pred_check
    _
  $region23: #{discriminator_forward.8} parent=0 // pred_check_branch
    %2229 = sbr.rel (0) target = $region25
  $region24: #{discriminator_forward.8} parent=0 // pred_region
    _
  $region25: #{discriminator_forward.8} parent=0 // pred_fallthru
    _
  // Predicated region
  $region26: #{discriminator_forward.8} parent=0 // pred_check
    _
  $region27: #{discriminator_forward.8} parent=0 // pred_check_branch
    %2231 = sbr.rel (0) target = $region29
  $region28: #{discriminator_forward.8} parent=0 // pred_region
    _
  $region29: #{discriminator_forward.8} parent=0 // pred_fallthru
    _
  // Predicated region
  $region30: #{discriminator_forward.8} parent=0 // pred_check
    _
  $region31: #{discriminator_forward.8} parent=0 // pred_check_branch
    %2233 = sbr.rel (0) target = $region33
  $region32: #{discriminator_forward.8} parent=0 // pred_region
    _
  $region33: #{discriminator_forward.8} parent=0 // pred_fallthru
    _

</llo_original>
